<compile_context>
chip_gen: v7x
topology: tpu7x:2x2x1
jax: 0.10.0
libtpu: 0.0.40
codegen_flags: <defaults>
</compile_context>

<pallas_src>
import math
import jax
import jax.numpy as jnp
from jax import lax
from jax.experimental import pallas as pl
from jax.experimental.pallas import tpu as pltpu

# ----- model hyper-parameters (small, consistent with the module's __init__) -----
D_MODEL = 32
NUM_HEADS = 4
D_FF = 64
D_K = D_MODEL // NUM_HEADS
LN_EPS = 1e-5
NEG_BIG = -1e30


def _ranges(sizes):
    out, off = [], 0
    for s in sizes:
        out.append((off, off + s))
        off += s
    return out, off


# Column layout of the packed weight slab W1 : (D_MODEL, 320)
(W_SA_QKV, W_SA_O, W_CA_Q, W_CA_KV, W_CA_O, W_FF1), W1_COLS = _ranges(
    [3 * D_MODEL, D_MODEL, D_MODEL, 2 * D_MODEL, D_MODEL, D_FF])

# Column layout of the packed vector slab VEC : (1, 544)
(V_SA_QKV_B, V_SA_O_B, V_LN1_G, V_LN1_B,
 V_CA_Q_B, V_CA_KV_B, V_CA_O_B, V_LN2_G, V_LN2_B,
 V_FF1_B, V_FF2_B, V_LN3_G, V_LN3_B), VEC_COLS = _ranges(
    [3 * D_MODEL, D_MODEL, D_MODEL, D_MODEL,
     D_MODEL, 2 * D_MODEL, D_MODEL, D_MODEL, D_MODEL,
     D_FF, D_MODEL, D_MODEL, D_MODEL])


def decoder_layer_kernel(xd_ref, xe_ref, bias_dec_ref, bias_enc_ref,
                         w1_ref, wff2_ref, vec_ref, out_ref):
    # Shapes (per grid step): xd_ref (Bc*T2, D), xe_ref (Bc*T1, D),
    # bias_dec_ref (Bc, T2, T2), bias_enc_ref (Bc, 1, T1).
    B, T2, _ = bias_dec_ref.shape
    T1 = bias_enc_ref.shape[2]
    D = D_MODEL

    def W(r):                      # (D, width) weight slice straight from VMEM
        return w1_ref[:, r[0]:r[1]]

    def V(r):                      # (1, width) bias / gamma / beta slice
        return vec_ref[:, r[0]:r[1]]

    def layer_norm(x, g, b):
        mu = jnp.mean(x, axis=-1, keepdims=True)
        var = jnp.mean(jnp.square(x - mu), axis=-1, keepdims=True)
        return (x - mu) * lax.rsqrt(var + LN_EPS) * g + b

    scale = 1.0 / math.sqrt(D_K)

    def attention(q3, k3, v3, bias):
        # q3: (B, Tq, D); k3, v3: (B, Tk, D); bias: (B, Tq or 1, Tk) additive.
        Tq = q3.shape[1]
        ctx = []
        for h in range(NUM_HEADS):                 # per-head contexts stay in registers
            sl = slice(h * D_K, (h + 1) * D_K)
            s = jnp.einsum('bqd,bkd->bqk', q3[:, :, sl], k3[:, :, sl],
                           preferred_element_type=jnp.float32) * scale
            s = s + bias                           # additive mask (0 / -1e30)
            s = s - jnp.max(s, axis=-1, keepdims=True)
            p = jnp.exp(s)
            p = p * pl.reciprocal(jnp.sum(p, axis=-1, keepdims=True), approx=False)
            c = jnp.einsum('bqk,bkd->bqd', p, v3[:, :, sl],
                           preferred_element_type=jnp.float32)
            ctx.append(c.reshape(B * Tq, D_K))
        return jnp.concatenate(ctx, axis=-1)       # (B*Tq, D), no VMEM scratch

    xd = xd_ref[...]                               # (B*T2, D)
    xe = xe_ref[...]                               # (B*T1, D)

    # ---- masked self-attention + residual + layernorm1 (fused QKV matmul) ----
    qkv = jnp.dot(xd, W(W_SA_QKV), preferred_element_type=jnp.float32) + V(V_SA_QKV_B)
    qkv3 = qkv.reshape(B, T2, 3 * D)
    ctx = attention(qkv3[:, :, 0:D], qkv3[:, :, D:2 * D], qkv3[:, :, 2 * D:3 * D],
                    bias_dec_ref[...])
    sa = jnp.dot(ctx, W(W_SA_O), preferred_element_type=jnp.float32) + V(V_SA_O_B)
    x = layer_norm(xd + sa, V(V_LN1_G), V(V_LN1_B))

    # ---- cross-attention (q from decoder, fused K/V from encoder) ----
    q = jnp.dot(x, W(W_CA_Q), preferred_element_type=jnp.float32) + V(V_CA_Q_B)
    kv = jnp.dot(xe, W(W_CA_KV), preferred_element_type=jnp.float32) + V(V_CA_KV_B)
    kv3 = kv.reshape(B, T1, 2 * D)
    ctx = attention(q.reshape(B, T2, D), kv3[:, :, 0:D], kv3[:, :, D:2 * D],
                    bias_enc_ref[...])
    ca = jnp.dot(ctx, W(W_CA_O), preferred_element_type=jnp.float32) + V(V_CA_O_B)
    x = layer_norm(x + ca, V(V_LN2_G), V(V_LN2_B))

    # ---- feed-forward (ReLU) + residual + layernorm3  (dropout = identity) ----
    h1 = jnp.maximum(jnp.dot(x, W(W_FF1), preferred_element_type=jnp.float32)
                     + V(V_FF1_B), 0.0)
    ff = jnp.dot(h1, wff2_ref[...], preferred_element_type=jnp.float32) + V(V_FF2_B)
    x = layer_norm(x + ff, V(V_LN3_G), V(V_LN3_B))

    out_ref[...] = x.astype(out_ref.dtype)


def decoder_layer(x_enc, x_dec, mask_enc, mask_dec, params, batch_block=None):
    B, T1, D = x_enc.shape
    _, T2, _ = x_dec.shape
    assert D == D_MODEL
    bb = B if batch_block is None else batch_block      # batch elements per grid step
    assert B % bb == 0
    n_steps = B // bb                                    # default: 1 (fully collapsed)

    (wq1, bq1, wk1, bk1, wv1, bv1, wo1, bo1, g1, be1,
     wq2, bq2, wk2, bk2, wv2, bv2, wo2, bo2, g2, be2,
     wf1, bf1, wf2, bf2, g3, be3) = params

    # ---- pack 26 parameter tensors into 3 lane-dense slabs (3 DMAs instead of 26) ----
    w1 = jnp.concatenate([wq1, wk1, wv1, wo1, wq2, wk2, wv2, wo2, wf1], axis=1)
    vec = jnp.concatenate([bq1, bk1, bv1, bo1, g1, be1,
                           bq2, bk2, bv2, bo2, g2, be2,
                           bf1, bf2, g3, be3], axis=1)
    assert w1.shape == (D_MODEL, W1_COLS) and vec.shape == (1, VEC_COLS)

    # ---- additive mask biases: 0 where keep, -1e30 where masked ----
    bias_dec = jnp.where(mask_dec[:, 0] > 0.5, 0.0, NEG_BIG).astype(jnp.float32)  # (B,T2,T2)
    bias_enc = jnp.where(mask_enc[:, 0] > 0.5, 0.0, NEG_BIG).astype(jnp.float32)  # (B,1,T1)

    # ---- fold (batch, time) into one 2-D slab per sequence ----
    xd2 = x_dec.reshape(B * T2, D)
    xe2 = x_enc.reshape(B * T1, D)

    def fixed(shape):
        nd = len(shape)
        return pl.BlockSpec(shape, lambda i, _nd=nd: (0,) * _nd)

    flops = (2 * B * T2 * D * (3 * D) + 2 * B * T2 * D * D      # SA qkv + out proj
             + 4 * B * T2 * T2 * D                               # SA scores + p@v
             + 2 * B * T2 * D * D + 2 * B * T1 * D * (2 * D)     # CA q + kv proj
             + 4 * B * T2 * T1 * D + 2 * B * T2 * D * D          # CA scores+p@v + out
             + 4 * B * T2 * D * D_FF)                            # FFN
    transcendentals = B * NUM_HEADS * (T2 * T2 + T2 * T1) + 5 * B * T2
    nbytes = sum(int(a.size) * a.dtype.itemsize
                 for a in (xd2, xe2, bias_dec, bias_enc, w1, wf2, vec)) + B * T2 * D * 4

    out2 = pl.pallas_call(
        decoder_layer_kernel,
        out_shape=jax.ShapeDtypeStruct((B * T2, D), x_dec.dtype),
        grid=(n_steps,),
        in_specs=[
            pl.BlockSpec((bb * T2, D), lambda i: (i, 0)),        # x_dec (flattened)
            pl.BlockSpec((bb * T1, D), lambda i: (i, 0)),        # x_enc (flattened)
            pl.BlockSpec((bb, T2, T2), lambda i: (i, 0, 0)),     # decoder mask bias
            pl.BlockSpec((bb, 1, T1), lambda i: (i, 0, 0)),      # encoder mask bias
            fixed(w1.shape),                                     # packed weights (D, 320)
            fixed(wf2.shape),                                    # FFN w2 (D_FF, D)
            fixed(vec.shape),                                    # packed biases/ln (1, 544)
        ],
        out_specs=pl.BlockSpec((bb * T2, D), lambda i: (i, 0)),
        compiler_params=pltpu.CompilerParams(dimension_semantics=("parallel",)),
        cost_estimate=pl.CostEstimate(flops=flops, transcendentals=transcendentals,
                                      bytes_accessed=nbytes),
    )(xd2, xe2, bias_dec, bias_enc, w1, wf2, vec)
    return out2.reshape(B, T2, D)


# -------------------- pure-JAX reference (for verification) --------------------
def _ref_mha(q, k, v, mask, wq, bq, wk, bk, wv, bv, wo, bo):
    B, Tq, D = q.shape
    Tk = k.shape[1]
    qp = (q @ wq + bq).reshape(B, Tq, NUM_HEADS, D_K).transpose(0, 2, 1, 3)
    kp = (k @ wk + bk).reshape(B, Tk, NUM_HEADS, D_K).transpose(0, 2, 1, 3)
    vp = (v @ wv + bv).reshape(B, Tk, NUM_HEADS, D_K).transpose(0, 2, 1, 3)
    s = qp @ kp.transpose(0, 1, 3, 2) / math.sqrt(D_K)
    s = jnp.where(mask > 0.5, s, -jnp.inf)
    p = jax.nn.softmax(s, axis=-1)
    o = (p @ vp).transpose(0, 2, 1, 3).reshape(B, Tq, D)
    return o @ wo + bo


def _ref_ln(x, g, b):
    mu = jnp.mean(x, axis=-1, keepdims=True)
    var = jnp.mean(jnp.square(x - mu), axis=-1, keepdims=True)
    return (x - mu) / jnp.sqrt(var + LN_EPS) * g + b


def decoder_layer_ref(x_enc, x_dec, mask_enc, mask_dec, params):
    (wq1, bq1, wk1, bk1, wv1, bv1, wo1, bo1, g1, be1,
     wq2, bq2, wk2, bk2, wv2, bv2, wo2, bo2, g2, be2,
     wf1, bf1, wf2, bf2, g3, be3) = params
    x = _ref_ln(x_dec + _ref_mha(x_dec, x_dec, x_dec, mask_dec,
                                 wq1, bq1, wk1, bk1, wv1, bv1, wo1, bo1), g1, be1)
    x = _ref_ln(x + _ref_mha(x, x_enc, x_enc, mask_enc,
                             wq2, bq2, wk2, bk2, wv2, bv2, wo2, bo2), g2, be2)
    h = jnp.maximum(x @ wf1 + bf1, 0.0)
    x = _ref_ln(x + (h @ wf2 + bf2), g3, be3)
    return x


if __name__ == "__main__":
    B, T1, T2 = 2, 16, 8            # batch, encoder time, decoder time
    key = jax.random.PRNGKey(0)
    ks = jax.random.split(key, 32)

    def w(k, shape, scale=0.05):
        return (jax.random.normal(k, shape, jnp.float32) * scale)

    # Linear weights stored pre-transposed as (in, out); biases as (1, out).
    params = (
        # masked self-attention
        w(ks[0], (D_MODEL, D_MODEL)), w(ks[1], (1, D_MODEL)),
        w(ks[2], (D_MODEL, D_MODEL)), w(ks[3], (1, D_MODEL)),
        w(ks[4], (D_MODEL, D_MODEL)), w(ks[5], (1, D_MODEL)),
        w(ks[6], (D_MODEL, D_MODEL)), w(ks[7], (1, D_MODEL)),
        jnp.ones((1, D_MODEL), jnp.float32), jnp.zeros((1, D_MODEL), jnp.float32),
        # cross-attention
        w(ks[8], (D_MODEL, D_MODEL)), w(ks[9], (1, D_MODEL)),
        w(ks[10], (D_MODEL, D_MODEL)), w(ks[11], (1, D_MODEL)),
        w(ks[12], (D_MODEL, D_MODEL)), w(ks[13], (1, D_MODEL)),
        w(ks[14], (D_MODEL, D_MODEL)), w(ks[15], (1, D_MODEL)),
        jnp.ones((1, D_MODEL), jnp.float32), jnp.zeros((1, D_MODEL), jnp.float32),
        # feed-forward
        w(ks[16], (D_MODEL, D_FF)), w(ks[17], (1, D_FF)),
        w(ks[18], (D_FF, D_MODEL)), w(ks[19], (1, D_MODEL)),
        jnp.ones((1, D_MODEL), jnp.float32), jnp.zeros((1, D_MODEL), jnp.float32),
    )

    x_enc = jax.random.normal(ks[20], (B, T1, D_MODEL), jnp.float32)
    x_dec = jax.random.normal(ks[21], (B, T2, D_MODEL), jnp.float32)
    # decoder mask: causal (B, 1, T2, T2); encoder mask: padding (B, 1, 1, T1)
    causal = jnp.tril(jnp.ones((T2, T2), jnp.float32))
    mask_dec = jnp.broadcast_to(causal, (B, 1, T2, T2)).astype(jnp.float32)
    enc_valid = jnp.stack([jnp.ones((T1,), jnp.float32),
                           (jnp.arange(T1) < T1 - 4).astype(jnp.float32)])
    mask_enc = enc_valid.reshape(B, 1, 1, T1)

    out = decoder_layer(x_enc, x_dec, mask_enc, mask_dec, params)
    out = jax.block_until_ready(out)

    ref = decoder_layer_ref(x_enc, x_dec, mask_enc, mask_dec, params)
    assert out.shape == (B, T2, D_MODEL)
    assert jnp.allclose(out, ref, rtol=2e-4, atol=2e-4), "mismatch vs pure-JAX reference"
    print("KERNEL_OK")
</pallas_src>

<mosaic_0001>
module attributes {stable_mosaic.version = 11 : i64} {
  func.func @decoder_layer_kernel(%arg0: i32, %arg1: memref<16x32xf32, #tpu.memory_space<vmem>>, %arg2: memref<32x32xf32, #tpu.memory_space<vmem>>, %arg3: memref<2x8x8xf32, #tpu.memory_space<vmem>>, %arg4: memref<2x1x16xf32, #tpu.memory_space<vmem>>, %arg5: memref<32x320xf32, #tpu.memory_space<vmem>>, %arg6: memref<64x32xf32, #tpu.memory_space<vmem>>, %arg7: memref<1x544xf32, #tpu.memory_space<vmem>>, %arg8: memref<16x32xf32, #tpu.memory_space<vmem>>) attributes {dimension_semantics = [#tpu.dimension_semantics<parallel>], iteration_bounds = array<i64: 1>, scalar_prefetch = 0 : i64, scratch_operands = 0 : i64, tpu.core_type = #tpu.core_type<tc>, window_params = [{transform_indices = @transform_0, window_bounds = array<i64: 16, 32>}, {transform_indices = @transform_1, window_bounds = array<i64: 32, 32>}, {transform_indices = @transform_2, window_bounds = array<i64: 2, 8, 8>}, {transform_indices = @transform_3, window_bounds = array<i64: 2, 1, 16>}, {pipeline_mode = #tpu.pipeline_mode<synchronous>, transform_indices = @transform_4, window_bounds = array<i64: 32, 320>}, {pipeline_mode = #tpu.pipeline_mode<synchronous>, transform_indices = @transform_5, window_bounds = array<i64: 64, 32>}, {pipeline_mode = #tpu.pipeline_mode<synchronous>, transform_indices = @transform_6, window_bounds = array<i64: 1, 544>}, {transform_indices = @transform_7, window_bounds = array<i64: 16, 32>}]} {
    %c0 = arith.constant 0 : index
    %c0_0 = arith.constant 0 : index
    %0 = vector.load %arg1[%c0, %c0_0] : memref<16x32xf32, #tpu.memory_space<vmem>>, vector<16x32xf32>
    %c0_1 = arith.constant 0 : index
    %c0_2 = arith.constant 0 : index
    %1 = vector.load %arg2[%c0_1, %c0_2] : memref<32x32xf32, #tpu.memory_space<vmem>>, vector<32x32xf32>
    %c0_3 = arith.constant 0 : index
    %c0_4 = arith.constant 0 : index
    %2 = vector.load %arg5[%c0_3, %c0_4] : memref<32x320xf32, #tpu.memory_space<vmem>>, vector<32x96xf32>
    %cst = arith.constant dense<0.000000e+00> : vector<16x96xf32>
    %3 = tpu.matmul %0, %2, %cst {dimension_numbers = #tpu.dot_dimension_numbers<[1], [0], [0], [1], [0, 0, 1, 1], [], []>} : vector<16x32xf32>, vector<32x96xf32>, vector<16x96xf32> -> vector<16x96xf32>
    %c0_5 = arith.constant 0 : index
    %c0_6 = arith.constant 0 : index
    %4 = vector.load %arg7[%c0_5, %c0_6] : memref<1x544xf32, #tpu.memory_space<vmem>>, vector<1x96xf32>
    %5 = vector.broadcast %4 : vector<1x96xf32> to vector<16x96xf32>
    %6 = arith.addf %3, %5 : vector<16x96xf32>
    %7 = vector.shape_cast %6 : vector<16x96xf32> to vector<2x8x96xf32>
    %8 = vector.extract_strided_slice %7 {offsets = [0, 0, 0], sizes = [2, 8, 32], strides = [1, 1, 1]} : vector<2x8x96xf32> to vector<2x8x32xf32>
    %9 = vector.extract_strided_slice %7 {offsets = [0, 0, 32], sizes = [2, 8, 32], strides = [1, 1, 1]} : vector<2x8x96xf32> to vector<2x8x32xf32>
    %10 = vector.extract_strided_slice %7 {offsets = [0, 0, 64], sizes = [2, 8, 32], strides = [1, 1, 1]} : vector<2x8x96xf32> to vector<2x8x32xf32>
    %c0_7 = arith.constant 0 : index
    %c0_8 = arith.constant 0 : index
    %c0_9 = arith.constant 0 : index
    %11 = vector.load %arg3[%c0_7, %c0_8, %c0_9] : memref<2x8x8xf32, #tpu.memory_space<vmem>>, vector<2x8x8xf32>
    %12 = vector.extract_strided_slice %8 {offsets = [0, 0, 0], sizes = [2, 8, 8], strides = [1, 1, 1]} : vector<2x8x32xf32> to vector<2x8x8xf32>
    %13 = vector.extract_strided_slice %9 {offsets = [0, 0, 0], sizes = [2, 8, 8], strides = [1, 1, 1]} : vector<2x8x32xf32> to vector<2x8x8xf32>
    "tpu.trace_start"() <{level = 10 : i32, message = "bqd,bkd->bqk"}> : () -> ()
    %cst_10 = arith.constant dense<0.000000e+00> : vector<2x8x8xf32>
    %14 = tpu.matmul %12, %13, %cst_10 {dimension_numbers = #tpu.dot_dimension_numbers<[2], [2], [1], [1], [0, 0, 0, 1, 1, 1], [0], [0]>} : vector<2x8x8xf32>, vector<2x8x8xf32>, vector<2x8x8xf32> -> vector<2x8x8xf32>
    "tpu.trace_stop"() : () -> ()
    %cst_11 = arith.constant 0.353553385 : f32
    %15 = vector.broadcast %cst_11 : f32 to vector<2x8x8xf32>
    %16 = arith.mulf %14, %15 : vector<2x8x8xf32>
    %17 = arith.addf %16, %11 : vector<2x8x8xf32>
    %cst_12 = arith.constant dense<0xFF800000> : vector<2x8xf32>
    %18 = vector.multi_reduction <maximumf>, %17, %cst_12 [2] : vector<2x8x8xf32> to vector<2x8xf32>
    %19 = vector.shape_cast %18 : vector<2x8xf32> to vector<2x8x1xf32>
    %20 = vector.broadcast %19 : vector<2x8x1xf32> to vector<2x8x8xf32>
    %21 = arith.subf %17, %20 : vector<2x8x8xf32>
    %22 = math.exp %21 : vector<2x8x8xf32>
    %cst_13 = arith.constant dense<0.000000e+00> : vector<2x8xf32>
    %23 = vector.multi_reduction <add>, %22, %cst_13 [2] : vector<2x8x8xf32> to vector<2x8xf32>
    %24 = vector.shape_cast %23 : vector<2x8xf32> to vector<2x8x1xf32>
    %25 = tpu.reciprocal %24 : vector<2x8x1xf32> -> vector<2x8x1xf32>
    %26 = vector.broadcast %25 : vector<2x8x1xf32> to vector<2x8x8xf32>
    %27 = arith.mulf %22, %26 : vector<2x8x8xf32>
    %28 = vector.extract_strided_slice %10 {offsets = [0, 0, 0], sizes = [2, 8, 8], strides = [1, 1, 1]} : vector<2x8x32xf32> to vector<2x8x8xf32>
    "tpu.trace_start"() <{level = 10 : i32, message = "bqk,bkd->bqd"}> : () -> ()
    %cst_14 = arith.constant dense<0.000000e+00> : vector<2x8x8xf32>
    %29 = tpu.matmul %27, %28, %cst_14 {dimension_numbers = #tpu.dot_dimension_numbers<[2], [1], [1], [2], [0, 0, 0, 1, 1, 2], [0], [0]>} : vector<2x8x8xf32>, vector<2x8x8xf32>, vector<2x8x8xf32> -> vector<2x8x8xf32>
    "tpu.trace_stop"() : () -> ()
    %30 = vector.shape_cast %29 : vector<2x8x8xf32> to vector<16x8xf32>
    %31 = vector.extract_strided_slice %8 {offsets = [0, 0, 8], sizes = [2, 8, 8], strides = [1, 1, 1]} : vector<2x8x32xf32> to vector<2x8x8xf32>
    %32 = vector.extract_strided_slice %9 {offsets = [0, 0, 8], sizes = [2, 8, 8], strides = [1, 1, 1]} : vector<2x8x32xf32> to vector<2x8x8xf32>
    "tpu.trace_start"() <{level = 10 : i32, message = "bqd,bkd->bqk"}> : () -> ()
    %cst_15 = arith.constant dense<0.000000e+00> : vector<2x8x8xf32>
    %33 = tpu.matmul %31, %32, %cst_15 {dimension_numbers = #tpu.dot_dimension_numbers<[2], [2], [1], [1], [0, 0, 0, 1, 1, 1], [0], [0]>} : vector<2x8x8xf32>, vector<2x8x8xf32>, vector<2x8x8xf32> -> vector<2x8x8xf32>
    "tpu.trace_stop"() : () -> ()
    %cst_16 = arith.constant 0.353553385 : f32
    %34 = vector.broadcast %cst_16 : f32 to vector<2x8x8xf32>
    %35 = arith.mulf %33, %34 : vector<2x8x8xf32>
    %36 = arith.addf %35, %11 : vector<2x8x8xf32>
    %cst_17 = arith.constant dense<0xFF800000> : vector<2x8xf32>
    %37 = vector.multi_reduction <maximumf>, %36, %cst_17 [2] : vector<2x8x8xf32> to vector<2x8xf32>
    %38 = vector.shape_cast %37 : vector<2x8xf32> to vector<2x8x1xf32>
    %39 = vector.broadcast %38 : vector<2x8x1xf32> to vector<2x8x8xf32>
    %40 = arith.subf %36, %39 : vector<2x8x8xf32>
    %41 = math.exp %40 : vector<2x8x8xf32>
    %cst_18 = arith.constant dense<0.000000e+00> : vector<2x8xf32>
    %42 = vector.multi_reduction <add>, %41, %cst_18 [2] : vector<2x8x8xf32> to vector<2x8xf32>
    %43 = vector.shape_cast %42 : vector<2x8xf32> to vector<2x8x1xf32>
    %44 = tpu.reciprocal %43 : vector<2x8x1xf32> -> vector<2x8x1xf32>
    %45 = vector.broadcast %44 : vector<2x8x1xf32> to vector<2x8x8xf32>
    %46 = arith.mulf %41, %45 : vector<2x8x8xf32>
    %47 = vector.extract_strided_slice %10 {offsets = [0, 0, 8], sizes = [2, 8, 8], strides = [1, 1, 1]} : vector<2x8x32xf32> to vector<2x8x8xf32>
    "tpu.trace_start"() <{level = 10 : i32, message = "bqk,bkd->bqd"}> : () -> ()
    %cst_19 = arith.constant dense<0.000000e+00> : vector<2x8x8xf32>
    %48 = tpu.matmul %46, %47, %cst_19 {dimension_numbers = #tpu.dot_dimension_numbers<[2], [1], [1], [2], [0, 0, 0, 1, 1, 2], [0], [0]>} : vector<2x8x8xf32>, vector<2x8x8xf32>, vector<2x8x8xf32> -> vector<2x8x8xf32>
    "tpu.trace_stop"() : () -> ()
    %49 = vector.shape_cast %48 : vector<2x8x8xf32> to vector<16x8xf32>
    %50 = vector.extract_strided_slice %8 {offsets = [0, 0, 16], sizes = [2, 8, 8], strides = [1, 1, 1]} : vector<2x8x32xf32> to vector<2x8x8xf32>
    %51 = vector.extract_strided_slice %9 {offsets = [0, 0, 16], sizes = [2, 8, 8], strides = [1, 1, 1]} : vector<2x8x32xf32> to vector<2x8x8xf32>
    "tpu.trace_start"() <{level = 10 : i32, message = "bqd,bkd->bqk"}> : () -> ()
    %cst_20 = arith.constant dense<0.000000e+00> : vector<2x8x8xf32>
    %52 = tpu.matmul %50, %51, %cst_20 {dimension_numbers = #tpu.dot_dimension_numbers<[2], [2], [1], [1], [0, 0, 0, 1, 1, 1], [0], [0]>} : vector<2x8x8xf32>, vector<2x8x8xf32>, vector<2x8x8xf32> -> vector<2x8x8xf32>
    "tpu.trace_stop"() : () -> ()
    %cst_21 = arith.constant 0.353553385 : f32
    %53 = vector.broadcast %cst_21 : f32 to vector<2x8x8xf32>
    %54 = arith.mulf %52, %53 : vector<2x8x8xf32>
    %55 = arith.addf %54, %11 : vector<2x8x8xf32>
    %cst_22 = arith.constant dense<0xFF800000> : vector<2x8xf32>
    %56 = vector.multi_reduction <maximumf>, %55, %cst_22 [2] : vector<2x8x8xf32> to vector<2x8xf32>
    %57 = vector.shape_cast %56 : vector<2x8xf32> to vector<2x8x1xf32>
    %58 = vector.broadcast %57 : vector<2x8x1xf32> to vector<2x8x8xf32>
    %59 = arith.subf %55, %58 : vector<2x8x8xf32>
    %60 = math.exp %59 : vector<2x8x8xf32>
    %cst_23 = arith.constant dense<0.000000e+00> : vector<2x8xf32>
    %61 = vector.multi_reduction <add>, %60, %cst_23 [2] : vector<2x8x8xf32> to vector<2x8xf32>
    %62 = vector.shape_cast %61 : vector<2x8xf32> to vector<2x8x1xf32>
    %63 = tpu.reciprocal %62 : vector<2x8x1xf32> -> vector<2x8x1xf32>
    %64 = vector.broadcast %63 : vector<2x8x1xf32> to vector<2x8x8xf32>
    %65 = arith.mulf %60, %64 : vector<2x8x8xf32>
    %66 = vector.extract_strided_slice %10 {offsets = [0, 0, 16], sizes = [2, 8, 8], strides = [1, 1, 1]} : vector<2x8x32xf32> to vector<2x8x8xf32>
    "tpu.trace_start"() <{level = 10 : i32, message = "bqk,bkd->bqd"}> : () -> ()
    %cst_24 = arith.constant dense<0.000000e+00> : vector<2x8x8xf32>
    %67 = tpu.matmul %65, %66, %cst_24 {dimension_numbers = #tpu.dot_dimension_numbers<[2], [1], [1], [2], [0, 0, 0, 1, 1, 2], [0], [0]>} : vector<2x8x8xf32>, vector<2x8x8xf32>, vector<2x8x8xf32> -> vector<2x8x8xf32>
    "tpu.trace_stop"() : () -> ()
    %68 = vector.shape_cast %67 : vector<2x8x8xf32> to vector<16x8xf32>
    %69 = vector.extract_strided_slice %8 {offsets = [0, 0, 24], sizes = [2, 8, 8], strides = [1, 1, 1]} : vector<2x8x32xf32> to vector<2x8x8xf32>
    %70 = vector.extract_strided_slice %9 {offsets = [0, 0, 24], sizes = [2, 8, 8], strides = [1, 1, 1]} : vector<2x8x32xf32> to vector<2x8x8xf32>
    "tpu.trace_start"() <{level = 10 : i32, message = "bqd,bkd->bqk"}> : () -> ()
    %cst_25 = arith.constant dense<0.000000e+00> : vector<2x8x8xf32>
    %71 = tpu.matmul %69, %70, %cst_25 {dimension_numbers = #tpu.dot_dimension_numbers<[2], [2], [1], [1], [0, 0, 0, 1, 1, 1], [0], [0]>} : vector<2x8x8xf32>, vector<2x8x8xf32>, vector<2x8x8xf32> -> vector<2x8x8xf32>
    "tpu.trace_stop"() : () -> ()
    %cst_26 = arith.constant 0.353553385 : f32
    %72 = vector.broadcast %cst_26 : f32 to vector<2x8x8xf32>
    %73 = arith.mulf %71, %72 : vector<2x8x8xf32>
    %74 = arith.addf %73, %11 : vector<2x8x8xf32>
    %cst_27 = arith.constant dense<0xFF800000> : vector<2x8xf32>
    %75 = vector.multi_reduction <maximumf>, %74, %cst_27 [2] : vector<2x8x8xf32> to vector<2x8xf32>
    %76 = vector.shape_cast %75 : vector<2x8xf32> to vector<2x8x1xf32>
    %77 = vector.broadcast %76 : vector<2x8x1xf32> to vector<2x8x8xf32>
    %78 = arith.subf %74, %77 : vector<2x8x8xf32>
    %79 = math.exp %78 : vector<2x8x8xf32>
    %cst_28 = arith.constant dense<0.000000e+00> : vector<2x8xf32>
    %80 = vector.multi_reduction <add>, %79, %cst_28 [2] : vector<2x8x8xf32> to vector<2x8xf32>
    %81 = vector.shape_cast %80 : vector<2x8xf32> to vector<2x8x1xf32>
    %82 = tpu.reciprocal %81 : vector<2x8x1xf32> -> vector<2x8x1xf32>
    %83 = vector.broadcast %82 : vector<2x8x1xf32> to vector<2x8x8xf32>
    %84 = arith.mulf %79, %83 : vector<2x8x8xf32>
    %85 = vector.extract_strided_slice %10 {offsets = [0, 0, 24], sizes = [2, 8, 8], strides = [1, 1, 1]} : vector<2x8x32xf32> to vector<2x8x8xf32>
    "tpu.trace_start"() <{level = 10 : i32, message = "bqk,bkd->bqd"}> : () -> ()
    %cst_29 = arith.constant dense<0.000000e+00> : vector<2x8x8xf32>
    %86 = tpu.matmul %84, %85, %cst_29 {dimension_numbers = #tpu.dot_dimension_numbers<[2], [1], [1], [2], [0, 0, 0, 1, 1, 2], [0], [0]>} : vector<2x8x8xf32>, vector<2x8x8xf32>, vector<2x8x8xf32> -> vector<2x8x8xf32>
    "tpu.trace_stop"() : () -> ()
    %87 = vector.shape_cast %86 : vector<2x8x8xf32> to vector<16x8xf32>
    %88 = tpu.concatenate %30, %49, %68, %87 in 1 : vector<16x8xf32>, vector<16x8xf32>, vector<16x8xf32>, vector<16x8xf32> -> vector<16x32xf32>
    %c0_30 = arith.constant 0 : index
    %c96 = arith.constant 96 : index
    %89 = vector.load %arg5[%c0_30, %c96] : memref<32x320xf32, #tpu.memory_space<vmem>>, vector<32x32xf32>
    %cst_31 = arith.constant dense<0.000000e+00> : vector<16x32xf32>
    %90 = tpu.matmul %88, %89, %cst_31 {dimension_numbers = #tpu.dot_dimension_numbers<[1], [0], [0], [1], [0, 0, 1, 1], [], []>} : vector<16x32xf32>, vector<32x32xf32>, vector<16x32xf32> -> vector<16x32xf32>
    %c0_32 = arith.constant 0 : index
    %c96_33 = arith.constant 96 : index
    %91 = vector.load %arg7[%c0_32, %c96_33] : memref<1x544xf32, #tpu.memory_space<vmem>>, vector<1x32xf32>
    %92 = vector.broadcast %91 : vector<1x32xf32> to vector<16x32xf32>
    %93 = arith.addf %90, %92 : vector<16x32xf32>
    %94 = arith.addf %0, %93 : vector<16x32xf32>
    %c0_34 = arith.constant 0 : index
    %c128 = arith.constant 128 : index
    %95 = vector.load %arg7[%c0_34, %c128] : memref<1x544xf32, #tpu.memory_space<vmem>>, vector<1x32xf32>
    %c0_35 = arith.constant 0 : index
    %c160 = arith.constant 160 : index
    %96 = vector.load %arg7[%c0_35, %c160] : memref<1x544xf32, #tpu.memory_space<vmem>>, vector<1x32xf32>
    %cst_36 = arith.constant dense<0.000000e+00> : vector<16xf32>
    %97 = vector.multi_reduction <add>, %94, %cst_36 [1] : vector<16x32xf32> to vector<16xf32>
    %98 = vector.shape_cast %97 : vector<16xf32> to vector<16x1xf32>
    %cst_37 = arith.constant 3.200000e+01 : f32
    %99 = vector.broadcast %cst_37 : f32 to vector<16x1xf32>
    %100 = arith.divf %98, %99 : vector<16x1xf32>
    %101 = vector.broadcast %100 : vector<16x1xf32> to vector<16x32xf32>
    %102 = arith.subf %94, %101 : vector<16x32xf32>
    %103 = arith.mulf %102, %102 : vector<16x32xf32>
    %cst_38 = arith.constant dense<0.000000e+00> : vector<16xf32>
    %104 = vector.multi_reduction <add>, %103, %cst_38 [1] : vector<16x32xf32> to vector<16xf32>
    %105 = vector.shape_cast %104 : vector<16xf32> to vector<16x1xf32>
    %cst_39 = arith.constant 3.200000e+01 : f32
    %106 = vector.broadcast %cst_39 : f32 to vector<16x1xf32>
    %107 = arith.divf %105, %106 : vector<16x1xf32>
    %108 = vector.broadcast %100 : vector<16x1xf32> to vector<16x32xf32>
    %109 = arith.subf %94, %108 : vector<16x32xf32>
    %cst_40 = arith.constant 9.99999974E-6 : f32
    %110 = vector.broadcast %cst_40 : f32 to vector<16x1xf32>
    %111 = arith.addf %107, %110 : vector<16x1xf32>
    %112 = math.rsqrt %111 : vector<16x1xf32>
    %113 = vector.broadcast %112 : vector<16x1xf32> to vector<16x32xf32>
    %114 = arith.mulf %109, %113 : vector<16x32xf32>
    %115 = vector.broadcast %95 : vector<1x32xf32> to vector<16x32xf32>
    %116 = arith.mulf %114, %115 : vector<16x32xf32>
    %117 = vector.broadcast %96 : vector<1x32xf32> to vector<16x32xf32>
    %118 = arith.addf %116, %117 : vector<16x32xf32>
    %c0_41 = arith.constant 0 : index
    %c128_42 = arith.constant 128 : index
    %119 = vector.load %arg5[%c0_41, %c128_42] : memref<32x320xf32, #tpu.memory_space<vmem>>, vector<32x32xf32>
    %cst_43 = arith.constant dense<0.000000e+00> : vector<16x32xf32>
    %120 = tpu.matmul %118, %119, %cst_43 {dimension_numbers = #tpu.dot_dimension_numbers<[1], [0], [0], [1], [0, 0, 1, 1], [], []>} : vector<16x32xf32>, vector<32x32xf32>, vector<16x32xf32> -> vector<16x32xf32>
    %c0_44 = arith.constant 0 : index
    %c192 = arith.constant 192 : index
    %121 = vector.load %arg7[%c0_44, %c192] : memref<1x544xf32, #tpu.memory_space<vmem>>, vector<1x32xf32>
    %122 = vector.broadcast %121 : vector<1x32xf32> to vector<16x32xf32>
    %123 = arith.addf %120, %122 : vector<16x32xf32>
    %c0_45 = arith.constant 0 : index
    %c160_46 = arith.constant 160 : index
    %124 = vector.load %arg5[%c0_45, %c160_46] : memref<32x320xf32, #tpu.memory_space<vmem>>, vector<32x64xf32>
    %cst_47 = arith.constant dense<0.000000e+00> : vector<32x64xf32>
    %125 = tpu.matmul %1, %124, %cst_47 {dimension_numbers = #tpu.dot_dimension_numbers<[1], [0], [0], [1], [0, 0, 1, 1], [], []>} : vector<32x32xf32>, vector<32x64xf32>, vector<32x64xf32> -> vector<32x64xf32>
    %c0_48 = arith.constant 0 : index
    %c224 = arith.constant 224 : index
    %126 = vector.load %arg7[%c0_48, %c224] : memref<1x544xf32, #tpu.memory_space<vmem>>, vector<1x64xf32>
    %127 = vector.broadcast %126 : vector<1x64xf32> to vector<32x64xf32>
    %128 = arith.addf %125, %127 : vector<32x64xf32>
    %129 = vector.shape_cast %128 : vector<32x64xf32> to vector<2x16x64xf32>
    %130 = vector.shape_cast %123 : vector<16x32xf32> to vector<2x8x32xf32>
    %131 = vector.extract_strided_slice %129 {offsets = [0, 0, 0], sizes = [2, 16, 32], strides = [1, 1, 1]} : vector<2x16x64xf32> to vector<2x16x32xf32>
    %132 = vector.extract_strided_slice %129 {offsets = [0, 0, 32], sizes = [2, 16, 32], strides = [1, 1, 1]} : vector<2x16x64xf32> to vector<2x16x32xf32>
    %c0_49 = arith.constant 0 : index
    %c0_50 = arith.constant 0 : index
    %c0_51 = arith.constant 0 : index
    %133 = vector.load %arg4[%c0_49, %c0_50, %c0_51] : memref<2x1x16xf32, #tpu.memory_space<vmem>>, vector<2x1x16xf32>
    %134 = vector.extract_strided_slice %130 {offsets = [0, 0, 0], sizes = [2, 8, 8], strides = [1, 1, 1]} : vector<2x8x32xf32> to vector<2x8x8xf32>
    %135 = vector.extract_strided_slice %131 {offsets = [0, 0, 0], sizes = [2, 16, 8], strides = [1, 1, 1]} : vector<2x16x32xf32> to vector<2x16x8xf32>
    "tpu.trace_start"() <{level = 10 : i32, message = "bqd,bkd->bqk"}> : () -> ()
    %cst_52 = arith.constant dense<0.000000e+00> : vector<2x8x16xf32>
    %136 = tpu.matmul %134, %135, %cst_52 {dimension_numbers = #tpu.dot_dimension_numbers<[2], [2], [1], [1], [0, 0, 0, 1, 1, 1], [0], [0]>} : vector<2x8x8xf32>, vector<2x16x8xf32>, vector<2x8x16xf32> -> vector<2x8x16xf32>
    "tpu.trace_stop"() : () -> ()
    %cst_53 = arith.constant 0.353553385 : f32
    %137 = vector.broadcast %cst_53 : f32 to vector<2x8x16xf32>
    %138 = arith.mulf %136, %137 : vector<2x8x16xf32>
    %139 = vector.broadcast %133 : vector<2x1x16xf32> to vector<2x8x16xf32>
    %140 = arith.addf %138, %139 : vector<2x8x16xf32>
    %cst_54 = arith.constant dense<0xFF800000> : vector<2x8xf32>
    %141 = vector.multi_reduction <maximumf>, %140, %cst_54 [2] : vector<2x8x16xf32> to vector<2x8xf32>
    %142 = vector.shape_cast %141 : vector<2x8xf32> to vector<2x8x1xf32>
    %143 = vector.broadcast %142 : vector<2x8x1xf32> to vector<2x8x16xf32>
    %144 = arith.subf %140, %143 : vector<2x8x16xf32>
    %145 = math.exp %144 : vector<2x8x16xf32>
    %cst_55 = arith.constant dense<0.000000e+00> : vector<2x8xf32>
    %146 = vector.multi_reduction <add>, %145, %cst_55 [2] : vector<2x8x16xf32> to vector<2x8xf32>
    %147 = vector.shape_cast %146 : vector<2x8xf32> to vector<2x8x1xf32>
    %148 = tpu.reciprocal %147 : vector<2x8x1xf32> -> vector<2x8x1xf32>
    %149 = vector.broadcast %148 : vector<2x8x1xf32> to vector<2x8x16xf32>
    %150 = arith.mulf %145, %149 : vector<2x8x16xf32>
    %151 = vector.extract_strided_slice %132 {offsets = [0, 0, 0], sizes = [2, 16, 8], strides = [1, 1, 1]} : vector<2x16x32xf32> to vector<2x16x8xf32>
    "tpu.trace_start"() <{level = 10 : i32, message = "bqk,bkd->bqd"}> : () -> ()
    %cst_56 = arith.constant dense<0.000000e+00> : vector<2x8x8xf32>
    %152 = tpu.matmul %150, %151, %cst_56 {dimension_numbers = #tpu.dot_dimension_numbers<[2], [1], [1], [2], [0, 0, 0, 1, 1, 2], [0], [0]>} : vector<2x8x16xf32>, vector<2x16x8xf32>, vector<2x8x8xf32> -> vector<2x8x8xf32>
    "tpu.trace_stop"() : () -> ()
    %153 = vector.shape_cast %152 : vector<2x8x8xf32> to vector<16x8xf32>
    %154 = vector.extract_strided_slice %130 {offsets = [0, 0, 8], sizes = [2, 8, 8], strides = [1, 1, 1]} : vector<2x8x32xf32> to vector<2x8x8xf32>
    %155 = vector.extract_strided_slice %131 {offsets = [0, 0, 8], sizes = [2, 16, 8], strides = [1, 1, 1]} : vector<2x16x32xf32> to vector<2x16x8xf32>
    "tpu.trace_start"() <{level = 10 : i32, message = "bqd,bkd->bqk"}> : () -> ()
    %cst_57 = arith.constant dense<0.000000e+00> : vector<2x8x16xf32>
    %156 = tpu.matmul %154, %155, %cst_57 {dimension_numbers = #tpu.dot_dimension_numbers<[2], [2], [1], [1], [0, 0, 0, 1, 1, 1], [0], [0]>} : vector<2x8x8xf32>, vector<2x16x8xf32>, vector<2x8x16xf32> -> vector<2x8x16xf32>
    "tpu.trace_stop"() : () -> ()
    %cst_58 = arith.constant 0.353553385 : f32
    %157 = vector.broadcast %cst_58 : f32 to vector<2x8x16xf32>
    %158 = arith.mulf %156, %157 : vector<2x8x16xf32>
    %159 = vector.broadcast %133 : vector<2x1x16xf32> to vector<2x8x16xf32>
    %160 = arith.addf %158, %159 : vector<2x8x16xf32>
    %cst_59 = arith.constant dense<0xFF800000> : vector<2x8xf32>
    %161 = vector.multi_reduction <maximumf>, %160, %cst_59 [2] : vector<2x8x16xf32> to vector<2x8xf32>
    %162 = vector.shape_cast %161 : vector<2x8xf32> to vector<2x8x1xf32>
    %163 = vector.broadcast %162 : vector<2x8x1xf32> to vector<2x8x16xf32>
    %164 = arith.subf %160, %163 : vector<2x8x16xf32>
    %165 = math.exp %164 : vector<2x8x16xf32>
    %cst_60 = arith.constant dense<0.000000e+00> : vector<2x8xf32>
    %166 = vector.multi_reduction <add>, %165, %cst_60 [2] : vector<2x8x16xf32> to vector<2x8xf32>
    %167 = vector.shape_cast %166 : vector<2x8xf32> to vector<2x8x1xf32>
    %168 = tpu.reciprocal %167 : vector<2x8x1xf32> -> vector<2x8x1xf32>
    %169 = vector.broadcast %168 : vector<2x8x1xf32> to vector<2x8x16xf32>
    %170 = arith.mulf %165, %169 : vector<2x8x16xf32>
    %171 = vector.extract_strided_slice %132 {offsets = [0, 0, 8], sizes = [2, 16, 8], strides = [1, 1, 1]} : vector<2x16x32xf32> to vector<2x16x8xf32>
    "tpu.trace_start"() <{level = 10 : i32, message = "bqk,bkd->bqd"}> : () -> ()
    %cst_61 = arith.constant dense<0.000000e+00> : vector<2x8x8xf32>
    %172 = tpu.matmul %170, %171, %cst_61 {dimension_numbers = #tpu.dot_dimension_numbers<[2], [1], [1], [2], [0, 0, 0, 1, 1, 2], [0], [0]>} : vector<2x8x16xf32>, vector<2x16x8xf32>, vector<2x8x8xf32> -> vector<2x8x8xf32>
    "tpu.trace_stop"() : () -> ()
    %173 = vector.shape_cast %172 : vector<2x8x8xf32> to vector<16x8xf32>
    %174 = vector.extract_strided_slice %130 {offsets = [0, 0, 16], sizes = [2, 8, 8], strides = [1, 1, 1]} : vector<2x8x32xf32> to vector<2x8x8xf32>
    %175 = vector.extract_strided_slice %131 {offsets = [0, 0, 16], sizes = [2, 16, 8], strides = [1, 1, 1]} : vector<2x16x32xf32> to vector<2x16x8xf32>
    "tpu.trace_start"() <{level = 10 : i32, message = "bqd,bkd->bqk"}> : () -> ()
    %cst_62 = arith.constant dense<0.000000e+00> : vector<2x8x16xf32>
    %176 = tpu.matmul %174, %175, %cst_62 {dimension_numbers = #tpu.dot_dimension_numbers<[2], [2], [1], [1], [0, 0, 0, 1, 1, 1], [0], [0]>} : vector<2x8x8xf32>, vector<2x16x8xf32>, vector<2x8x16xf32> -> vector<2x8x16xf32>
    "tpu.trace_stop"() : () -> ()
    %cst_63 = arith.constant 0.353553385 : f32
    %177 = vector.broadcast %cst_63 : f32 to vector<2x8x16xf32>
    %178 = arith.mulf %176, %177 : vector<2x8x16xf32>
    %179 = vector.broadcast %133 : vector<2x1x16xf32> to vector<2x8x16xf32>
    %180 = arith.addf %178, %179 : vector<2x8x16xf32>
    %cst_64 = arith.constant dense<0xFF800000> : vector<2x8xf32>
    %181 = vector.multi_reduction <maximumf>, %180, %cst_64 [2] : vector<2x8x16xf32> to vector<2x8xf32>
    %182 = vector.shape_cast %181 : vector<2x8xf32> to vector<2x8x1xf32>
    %183 = vector.broadcast %182 : vector<2x8x1xf32> to vector<2x8x16xf32>
    %184 = arith.subf %180, %183 : vector<2x8x16xf32>
    %185 = math.exp %184 : vector<2x8x16xf32>
    %cst_65 = arith.constant dense<0.000000e+00> : vector<2x8xf32>
    %186 = vector.multi_reduction <add>, %185, %cst_65 [2] : vector<2x8x16xf32> to vector<2x8xf32>
    %187 = vector.shape_cast %186 : vector<2x8xf32> to vector<2x8x1xf32>
    %188 = tpu.reciprocal %187 : vector<2x8x1xf32> -> vector<2x8x1xf32>
    %189 = vector.broadcast %188 : vector<2x8x1xf32> to vector<2x8x16xf32>
    %190 = arith.mulf %185, %189 : vector<2x8x16xf32>
    %191 = vector.extract_strided_slice %132 {offsets = [0, 0, 16], sizes = [2, 16, 8], strides = [1, 1, 1]} : vector<2x16x32xf32> to vector<2x16x8xf32>
    "tpu.trace_start"() <{level = 10 : i32, message = "bqk,bkd->bqd"}> : () -> ()
    %cst_66 = arith.constant dense<0.000000e+00> : vector<2x8x8xf32>
    %192 = tpu.matmul %190, %191, %cst_66 {dimension_numbers = #tpu.dot_dimension_numbers<[2], [1], [1], [2], [0, 0, 0, 1, 1, 2], [0], [0]>} : vector<2x8x16xf32>, vector<2x16x8xf32>, vector<2x8x8xf32> -> vector<2x8x8xf32>
    "tpu.trace_stop"() : () -> ()
    %193 = vector.shape_cast %192 : vector<2x8x8xf32> to vector<16x8xf32>
    %194 = vector.extract_strided_slice %130 {offsets = [0, 0, 24], sizes = [2, 8, 8], strides = [1, 1, 1]} : vector<2x8x32xf32> to vector<2x8x8xf32>
    %195 = vector.extract_strided_slice %131 {offsets = [0, 0, 24], sizes = [2, 16, 8], strides = [1, 1, 1]} : vector<2x16x32xf32> to vector<2x16x8xf32>
    "tpu.trace_start"() <{level = 10 : i32, message = "bqd,bkd->bqk"}> : () -> ()
    %cst_67 = arith.constant dense<0.000000e+00> : vector<2x8x16xf32>
    %196 = tpu.matmul %194, %195, %cst_67 {dimension_numbers = #tpu.dot_dimension_numbers<[2], [2], [1], [1], [0, 0, 0, 1, 1, 1], [0], [0]>} : vector<2x8x8xf32>, vector<2x16x8xf32>, vector<2x8x16xf32> -> vector<2x8x16xf32>
    "tpu.trace_stop"() : () -> ()
    %cst_68 = arith.constant 0.353553385 : f32
    %197 = vector.broadcast %cst_68 : f32 to vector<2x8x16xf32>
    %198 = arith.mulf %196, %197 : vector<2x8x16xf32>
    %199 = vector.broadcast %133 : vector<2x1x16xf32> to vector<2x8x16xf32>
    %200 = arith.addf %198, %199 : vector<2x8x16xf32>
    %cst_69 = arith.constant dense<0xFF800000> : vector<2x8xf32>
    %201 = vector.multi_reduction <maximumf>, %200, %cst_69 [2] : vector<2x8x16xf32> to vector<2x8xf32>
    %202 = vector.shape_cast %201 : vector<2x8xf32> to vector<2x8x1xf32>
    %203 = vector.broadcast %202 : vector<2x8x1xf32> to vector<2x8x16xf32>
    %204 = arith.subf %200, %203 : vector<2x8x16xf32>
    %205 = math.exp %204 : vector<2x8x16xf32>
    %cst_70 = arith.constant dense<0.000000e+00> : vector<2x8xf32>
    %206 = vector.multi_reduction <add>, %205, %cst_70 [2] : vector<2x8x16xf32> to vector<2x8xf32>
    %207 = vector.shape_cast %206 : vector<2x8xf32> to vector<2x8x1xf32>
    %208 = tpu.reciprocal %207 : vector<2x8x1xf32> -> vector<2x8x1xf32>
    %209 = vector.broadcast %208 : vector<2x8x1xf32> to vector<2x8x16xf32>
    %210 = arith.mulf %205, %209 : vector<2x8x16xf32>
    %211 = vector.extract_strided_slice %132 {offsets = [0, 0, 24], sizes = [2, 16, 8], strides = [1, 1, 1]} : vector<2x16x32xf32> to vector<2x16x8xf32>
    "tpu.trace_start"() <{level = 10 : i32, message = "bqk,bkd->bqd"}> : () -> ()
    %cst_71 = arith.constant dense<0.000000e+00> : vector<2x8x8xf32>
    %212 = tpu.matmul %210, %211, %cst_71 {dimension_numbers = #tpu.dot_dimension_numbers<[2], [1], [1], [2], [0, 0, 0, 1, 1, 2], [0], [0]>} : vector<2x8x16xf32>, vector<2x16x8xf32>, vector<2x8x8xf32> -> vector<2x8x8xf32>
    "tpu.trace_stop"() : () -> ()
    %213 = vector.shape_cast %212 : vector<2x8x8xf32> to vector<16x8xf32>
    %214 = tpu.concatenate %153, %173, %193, %213 in 1 : vector<16x8xf32>, vector<16x8xf32>, vector<16x8xf32>, vector<16x8xf32> -> vector<16x32xf32>
    %c0_72 = arith.constant 0 : index
    %c224_73 = arith.constant 224 : index
    %215 = vector.load %arg5[%c0_72, %c224_73] : memref<32x320xf32, #tpu.memory_space<vmem>>, vector<32x32xf32>
    %cst_74 = arith.constant dense<0.000000e+00> : vector<16x32xf32>
    %216 = tpu.matmul %214, %215, %cst_74 {dimension_numbers = #tpu.dot_dimension_numbers<[1], [0], [0], [1], [0, 0, 1, 1], [], []>} : vector<16x32xf32>, vector<32x32xf32>, vector<16x32xf32> -> vector<16x32xf32>
    %c0_75 = arith.constant 0 : index
    %c288 = arith.constant 288 : index
    %217 = vector.load %arg7[%c0_75, %c288] : memref<1x544xf32, #tpu.memory_space<vmem>>, vector<1x32xf32>
    %218 = vector.broadcast %217 : vector<1x32xf32> to vector<16x32xf32>
    %219 = arith.addf %216, %218 : vector<16x32xf32>
    %220 = arith.addf %118, %219 : vector<16x32xf32>
    %c0_76 = arith.constant 0 : index
    %c320 = arith.constant 320 : index
    %221 = vector.load %arg7[%c0_76, %c320] : memref<1x544xf32, #tpu.memory_space<vmem>>, vector<1x32xf32>
    %c0_77 = arith.constant 0 : index
    %c352 = arith.constant 352 : index
    %222 = vector.load %arg7[%c0_77, %c352] : memref<1x544xf32, #tpu.memory_space<vmem>>, vector<1x32xf32>
    %cst_78 = arith.constant dense<0.000000e+00> : vector<16xf32>
    %223 = vector.multi_reduction <add>, %220, %cst_78 [1] : vector<16x32xf32> to vector<16xf32>
    %224 = vector.shape_cast %223 : vector<16xf32> to vector<16x1xf32>
    %cst_79 = arith.constant 3.200000e+01 : f32
    %225 = vector.broadcast %cst_79 : f32 to vector<16x1xf32>
    %226 = arith.divf %224, %225 : vector<16x1xf32>
    %227 = vector.broadcast %226 : vector<16x1xf32> to vector<16x32xf32>
    %228 = arith.subf %220, %227 : vector<16x32xf32>
    %229 = arith.mulf %228, %228 : vector<16x32xf32>
    %cst_80 = arith.constant dense<0.000000e+00> : vector<16xf32>
    %230 = vector.multi_reduction <add>, %229, %cst_80 [1] : vector<16x32xf32> to vector<16xf32>
    %231 = vector.shape_cast %230 : vector<16xf32> to vector<16x1xf32>
    %cst_81 = arith.constant 3.200000e+01 : f32
    %232 = vector.broadcast %cst_81 : f32 to vector<16x1xf32>
    %233 = arith.divf %231, %232 : vector<16x1xf32>
    %234 = vector.broadcast %226 : vector<16x1xf32> to vector<16x32xf32>
    %235 = arith.subf %220, %234 : vector<16x32xf32>
    %cst_82 = arith.constant 9.99999974E-6 : f32
    %236 = vector.broadcast %cst_82 : f32 to vector<16x1xf32>
    %237 = arith.addf %233, %236 : vector<16x1xf32>
    %238 = math.rsqrt %237 : vector<16x1xf32>
    %239 = vector.broadcast %238 : vector<16x1xf32> to vector<16x32xf32>
    %240 = arith.mulf %235, %239 : vector<16x32xf32>
    %241 = vector.broadcast %221 : vector<1x32xf32> to vector<16x32xf32>
    %242 = arith.mulf %240, %241 : vector<16x32xf32>
    %243 = vector.broadcast %222 : vector<1x32xf32> to vector<16x32xf32>
    %244 = arith.addf %242, %243 : vector<16x32xf32>
    %c0_83 = arith.constant 0 : index
    %c256 = arith.constant 256 : index
    %245 = vector.load %arg5[%c0_83, %c256] : memref<32x320xf32, #tpu.memory_space<vmem>>, vector<32x64xf32>
    %cst_84 = arith.constant dense<0.000000e+00> : vector<16x64xf32>
    %246 = tpu.matmul %244, %245, %cst_84 {dimension_numbers = #tpu.dot_dimension_numbers<[1], [0], [0], [1], [0, 0, 1, 1], [], []>} : vector<16x32xf32>, vector<32x64xf32>, vector<16x64xf32> -> vector<16x64xf32>
    %c0_85 = arith.constant 0 : index
    %c384 = arith.constant 384 : index
    %247 = vector.load %arg7[%c0_85, %c384] : memref<1x544xf32, #tpu.memory_space<vmem>>, vector<1x64xf32>
    %248 = vector.broadcast %247 : vector<1x64xf32> to vector<16x64xf32>
    %249 = arith.addf %246, %248 : vector<16x64xf32>
    %cst_86 = arith.constant 0.000000e+00 : f32
    %250 = vector.broadcast %cst_86 : f32 to vector<16x64xf32>
    %251 = arith.maximumf %249, %250 : vector<16x64xf32>
    %c0_87 = arith.constant 0 : index
    %c0_88 = arith.constant 0 : index
    %252 = vector.load %arg6[%c0_87, %c0_88] : memref<64x32xf32, #tpu.memory_space<vmem>>, vector<64x32xf32>
    %cst_89 = arith.constant dense<0.000000e+00> : vector<16x32xf32>
    %253 = tpu.matmul %251, %252, %cst_89 {dimension_numbers = #tpu.dot_dimension_numbers<[1], [0], [0], [1], [0, 0, 1, 1], [], []>} : vector<16x64xf32>, vector<64x32xf32>, vector<16x32xf32> -> vector<16x32xf32>
    %c0_90 = arith.constant 0 : index
    %c448 = arith.constant 448 : index
    %254 = vector.load %arg7[%c0_90, %c448] : memref<1x544xf32, #tpu.memory_space<vmem>>, vector<1x32xf32>
    %255 = vector.broadcast %254 : vector<1x32xf32> to vector<16x32xf32>
    %256 = arith.addf %253, %255 : vector<16x32xf32>
    %257 = arith.addf %244, %256 : vector<16x32xf32>
    %c0_91 = arith.constant 0 : index
    %c480 = arith.constant 480 : index
    %258 = vector.load %arg7[%c0_91, %c480] : memref<1x544xf32, #tpu.memory_space<vmem>>, vector<1x32xf32>
    %c0_92 = arith.constant 0 : index
    %c512 = arith.constant 512 : index
    %259 = vector.load %arg7[%c0_92, %c512] : memref<1x544xf32, #tpu.memory_space<vmem>>, vector<1x32xf32>
    %cst_93 = arith.constant dense<0.000000e+00> : vector<16xf32>
    %260 = vector.multi_reduction <add>, %257, %cst_93 [1] : vector<16x32xf32> to vector<16xf32>
    %261 = vector.shape_cast %260 : vector<16xf32> to vector<16x1xf32>
    %cst_94 = arith.constant 3.200000e+01 : f32
    %262 = vector.broadcast %cst_94 : f32 to vector<16x1xf32>
    %263 = arith.divf %261, %262 : vector<16x1xf32>
    %264 = vector.broadcast %263 : vector<16x1xf32> to vector<16x32xf32>
    %265 = arith.subf %257, %264 : vector<16x32xf32>
    %266 = arith.mulf %265, %265 : vector<16x32xf32>
    %cst_95 = arith.constant dense<0.000000e+00> : vector<16xf32>
    %267 = vector.multi_reduction <add>, %266, %cst_95 [1] : vector<16x32xf32> to vector<16xf32>
    %268 = vector.shape_cast %267 : vector<16xf32> to vector<16x1xf32>
    %cst_96 = arith.constant 3.200000e+01 : f32
    %269 = vector.broadcast %cst_96 : f32 to vector<16x1xf32>
    %270 = arith.divf %268, %269 : vector<16x1xf32>
    %271 = vector.broadcast %263 : vector<16x1xf32> to vector<16x32xf32>
    %272 = arith.subf %257, %271 : vector<16x32xf32>
    %cst_97 = arith.constant 9.99999974E-6 : f32
    %273 = vector.broadcast %cst_97 : f32 to vector<16x1xf32>
    %274 = arith.addf %270, %273 : vector<16x1xf32>
    %275 = math.rsqrt %274 : vector<16x1xf32>
    %276 = vector.broadcast %275 : vector<16x1xf32> to vector<16x32xf32>
    %277 = arith.mulf %272, %276 : vector<16x32xf32>
    %278 = vector.broadcast %258 : vector<1x32xf32> to vector<16x32xf32>
    %279 = arith.mulf %277, %278 : vector<16x32xf32>
    %280 = vector.broadcast %259 : vector<1x32xf32> to vector<16x32xf32>
    %281 = arith.addf %279, %280 : vector<16x32xf32>
    %c0_98 = arith.constant 0 : index
    %c0_99 = arith.constant 0 : index
    %282 = vector.load %arg8[%c0_98, %c0_99] : memref<16x32xf32, #tpu.memory_space<vmem>>, vector<16x32xf32>
    tpu.vector_store %arg8[%c0_98, %c0_99], %281 {strides = array<i32>} : memref<16x32xf32, #tpu.memory_space<vmem>>, vector<16x32xf32>,
    return
  }
  func.func @transform_0(%arg0: i32) -> (i32, i32) {
    %c0_i32 = arith.constant 0 : i32
    %c0_i32_0 = arith.constant 0 : i32
    return %arg0, %c0_i32 : i32, i32
  }
  func.func @transform_1(%arg0: i32) -> (i32, i32) {
    %c0_i32 = arith.constant 0 : i32
    %c0_i32_0 = arith.constant 0 : i32
    return %arg0, %c0_i32 : i32, i32
  }
  func.func @transform_2(%arg0: i32) -> (i32, i32, i32) {
    %c0_i32 = arith.constant 0 : i32
    %c0_i32_0 = arith.constant 0 : i32
    %c0_i32_1 = arith.constant 0 : i32
    return %arg0, %c0_i32, %c0_i32_0 : i32, i32, i32
  }
  func.func @transform_3(%arg0: i32) -> (i32, i32, i32) {
    %c0_i32 = arith.constant 0 : i32
    %c0_i32_0 = arith.constant 0 : i32
    %c0_i32_1 = arith.constant 0 : i32
    return %arg0, %c0_i32, %c0_i32_0 : i32, i32, i32
  }
  func.func @transform_4(%arg0: i32) -> (i32, i32) {
    %c0_i32 = arith.constant 0 : i32
    %c0_i32_0 = arith.constant 0 : i32
    %c0_i32_1 = arith.constant 0 : i32
    return %c0_i32, %c0_i32_0 : i32, i32
  }
  func.func @transform_5(%arg0: i32) -> (i32, i32) {
    %c0_i32 = arith.constant 0 : i32
    %c0_i32_0 = arith.constant 0 : i32
    %c0_i32_1 = arith.constant 0 : i32
    return %c0_i32, %c0_i32_0 : i32, i32
  }
  func.func @transform_6(%arg0: i32) -> (i32, i32) {
    %c0_i32 = arith.constant 0 : i32
    %c0_i32_0 = arith.constant 0 : i32
    %c0_i32_1 = arith.constant 0 : i32
    return %c0_i32, %c0_i32_0 : i32, i32
  }
  func.func @transform_7(%arg0: i32) -> (i32, i32) {
    %c0_i32 = arith.constant 0 : i32
    %c0_i32_0 = arith.constant 0 : i32
    return %arg0, %c0_i32 : i32, i32
  }
}

</mosaic_0001>

<llo_original>
// kernel: tpu_custom_call.1
$region0: #{tpu_custom_call.1}
  #allocation0 [shape = 'u32[]', space=smem, size = 0x4, offset = 0x4, fixed_abs, tag = 'smem constant byte address 0x4 - core index']
  #allocation1 [shape = 'u32[144,128]{1,0:T(1,128)}', space=vmem, size = 0x12000, scoped, tag = 'internal scratch']
  %s0 = inlined_call_operand.hbm [shape: f32[16,32], index: 0, kind: input, shape index: {}]
  %s1 = inlined_call_operand.hbm [shape: f32[32,32], index: 1, kind: input, shape index: {}]
  %s2 = inlined_call_operand.hbm [shape: f32[2,8,8], index: 2, kind: input, shape index: {}]
  %s3 = inlined_call_operand.vmem [shape: f32[2,1,16], index: 3, kind: input, shape index: {}]
  %s4 = inlined_call_operand.vmem [shape: f32[32,320], index: 4, kind: input, shape index: {}]
  %s5 = inlined_call_operand.vmem [shape: f32[64,32], index: 5, kind: input, shape index: {}]
  %s6 = inlined_call_operand.vmem [shape: f32[1,544], index: 6, kind: input, shape index: {}]
  %s7 = inlined_call_operand.hbm [shape: f32[16,32], index: 7, kind: output, shape index: {}]
  %s8 = sld [smem:[#allocation0]]
  $region50: #{tpu_custom_call.1} parent=0
    _
  %s10 = ssub.s32 1, %s8
  %s11 = scalar_select 0, %s10, %s8
  $region1: #{tpu_custom_call.1} parent=0
    #allocation2 [shape = 'u8[8192]{0}', space=vmem, size = 0x2000, scoped, tag = 'input window, operand 0, single buffered']
    #allocation3 [shape = 's32[1]{0}', space=sflag, size = 0x4, scoped, tag = 'scoped memory for tpu_custom_call.1']
    #allocation4 [shape = 's32[1]{0}', space=sflag, size = 0x4, scoped, tag = 'scoped memory for tpu_custom_call.1']
    #allocation5 [shape = 'u8[16384]{0}', space=vmem, size = 0x4000, scoped, tag = 'input window, operand 1, single buffered']
    #allocation6 [shape = 's32[1]{0}', space=sflag, size = 0x4, scoped, tag = 'scoped memory for tpu_custom_call.1']
    #allocation7 [shape = 'u8[8192]{0}', space=vmem, size = 0x2000, scoped, tag = 'input window, operand 2, single buffered']
    #allocation8 [shape = 'u8[8192]{0}', space=vmem, size = 0x2000, scoped, tag = 'output window, operand 0, single buffered']
    %12 = vsyncpa [#allocation3], 0
    %13 = vsyncpa [#allocation6], 0
    %14 = vsyncpa [#allocation4], 0
    // Predicated region
    $region2: #{tpu_custom_call.1} parent=1 // pred_check
      _
    $region3: #{tpu_custom_call.1} parent=1 // pred_check_branch
      %16 = sbr.rel (0) target = $region5
    $region4: #{tpu_custom_call.1} parent=1 // pred_region
      %s18 = ssub.s32 256, 256
      %19 = vsyncadd [#allocation3], %s18
      %s20 = sshll.u32 [#allocation2], 4
      %s21 = int_to_ptr.vmem [resolvable:$true] %s20
      %26 = dma.hbm_to_vmem [thread:$0]  %s0, 256, %s21, [#allocation3], 128, 128, 8
    $region5: #{tpu_custom_call.1} parent=1 // pred_fallthru
      _
    // Predicated region
    $region6: #{tpu_custom_call.1} parent=1 // pred_check
      _
    $region7: #{tpu_custom_call.1} parent=1 // pred_check_branch
      %28 = sbr.rel (0) target = $region9
    $region8: #{tpu_custom_call.1} parent=1 // pred_region
      %s30 = ssub.s32 512, 512
      %31 = vsyncadd [#allocation6], %s30
      %s32 = sshll.u32 [#allocation5], 4
      %s33 = int_to_ptr.vmem [resolvable:$true] %s32
      %38 = dma.hbm_to_vmem [thread:$0]  %s1, 512, %s33, [#allocation6], 128, 128, 8
    $region9: #{tpu_custom_call.1} parent=1 // pred_fallthru
      _
    // Predicated region
    $region10: #{tpu_custom_call.1} parent=1 // pred_check
      _
    $region11: #{tpu_custom_call.1} parent=1 // pred_check_branch
      %40 = sbr.rel (0) target = $region13
    $region12: #{tpu_custom_call.1} parent=1 // pred_region
      %s42 = ssub.s32 256, 256
      %43 = vsyncadd [#allocation6], %s42
      %s44 = sshll.u32 [#allocation7], 4
      %s45 = int_to_ptr.vmem [resolvable:$true] %s44
      %50 = dma.hbm_to_vmem [thread:$0]  %s2, 256, %s45, [#allocation6], 128, 128, 8
    $region13: #{tpu_custom_call.1} parent=1 // pred_fallthru
      _
    // Predicated region
    $region14: #{tpu_custom_call.1} parent=1 // pred_check
      _
    $region15: #{tpu_custom_call.1} parent=1 // pred_check_branch
      %52 = sbr.rel (0) target = $region17
    $region16: #{tpu_custom_call.1} parent=1 // pred_region
      _
    $region17: #{tpu_custom_call.1} parent=1 // pred_fallthru
      _
    // Predicated region
    $region18: #{tpu_custom_call.1} parent=1 // pred_check
      _
    $region19: #{tpu_custom_call.1} parent=1 // pred_check_branch
      %54 = sbr.rel (0) target = $region21
    $region20: #{tpu_custom_call.1} parent=1 // pred_region
      _
    $region21: #{tpu_custom_call.1} parent=1 // pred_fallthru
      _
    // Predicated region
    $region22: #{tpu_custom_call.1} parent=1 // pred_check
      _
    $region23: #{tpu_custom_call.1} parent=1 // pred_check_branch
      %56 = sbr.rel (0) target = $region25
    $region24: #{tpu_custom_call.1} parent=1 // pred_region
      _
    $region25: #{tpu_custom_call.1} parent=1 // pred_fallthru
      _
    // Predicated region
    $region26: #{tpu_custom_call.1} parent=1 // pred_check
      _
    $region27: #{tpu_custom_call.1} parent=1 // pred_check_branch
      %58 = sbr.rel (0) target = $region29
    $region28: #{tpu_custom_call.1} parent=1 // pred_region
      _
    $region29: #{tpu_custom_call.1} parent=1 // pred_fallthru
      _
    // Predicated region
    $region30: #{tpu_custom_call.1} parent=1 // pred_check
      _
    $region31: #{tpu_custom_call.1} parent=1 // pred_check_branch
      %60 = sbr.rel (0) target = $region33
    $region32: #{tpu_custom_call.1} parent=1 // pred_region
      %61 = dma.done [#allocation3], 256
    $region33: #{tpu_custom_call.1} parent=1 // pred_fallthru
      _
    // Predicated region
    $region34: #{tpu_custom_call.1} parent=1 // pred_check
      _
    $region35: #{tpu_custom_call.1} parent=1 // pred_check_branch
      %63 = sbr.rel (0) target = $region37
    $region36: #{tpu_custom_call.1} parent=1 // pred_region
      %64 = dma.done [#allocation6], 512
    $region37: #{tpu_custom_call.1} parent=1 // pred_fallthru
      _
    // Predicated region
    $region38: #{tpu_custom_call.1} parent=1 // pred_check
      _
    $region39: #{tpu_custom_call.1} parent=1 // pred_check_branch
      %66 = sbr.rel (0) target = $region41
    $region40: #{tpu_custom_call.1} parent=1 // pred_region
      %67 = dma.done [#allocation6], 256
    $region41: #{tpu_custom_call.1} parent=1 // pred_fallthru
      _
    %v68 = vld [vmem:[#allocation2] sm:$0xff]
    %v69 = vld [vmem:[#allocation2 + $0x8] sm:$0xff]
    %v70 = vld [vmem:[#allocation5] sm:$0xff]
    %v71 = vld [vmem:[#allocation5 + $0x8] sm:$0xff]
    %v72 = vld [vmem:[#allocation5 + $0x10] sm:$0xff]
    %v73 = vld [vmem:[#allocation5 + $0x18] sm:$0xff]
    %v74 = vld [vmem:[%s4] sm:$0xff]
    %v75 = vld [vmem:[%s4 + $0x18] sm:$0xff]
    %v76 = vld [vmem:[%s4 + $0x30] sm:$0xff]
    %v77 = vld [vmem:[%s4 + $0x48] sm:$0xff]
    %v78 = vld [vmem:[%s6] sm:$0x1]
    %v80 = vlaneseq
    %v81 = vshrl.u32 %v80, 7
    %v82 = vsub.s32 0, %v81
    %v83 = vrot.slane %v78, %v82
    %vm85 = vcmask 261120
    %v87 = vsel %vm85, %v68, 0
    %v90 = vsel %vm85, %v69, 0
    %92 = vmatprep.subr.mxu0 0.0
    %93 = vmatpush1.msra.mxu0 %v74
    %94 = vmatprep.subr.mxu0 0.0
    %95 = vmatpush1.msra.mxu0 %v75
    %96 = vmatprep.subr.mxu0 0.0
    %97 = vmatpush1.msra.mxu0 %v76
    %98 = vmatprep.subr.mxu0 0.0
    %99 = vmatpush1.msra.mxu0 %v77
    %100 = vmatprep.subr.mxu0 0.0
    %101 = vmatpush1.msra.mxu0 0.0
    %102 = vmatprep.subr.mxu0 0.0
    %103 = vmatpush1.msra.mxu0 0.0
    %104 = vmatprep.subr.mxu0 0.0
    %105 = vmatpush1.msra.mxu0 0.0
    %106 = vmatprep.subr.mxu0 0.0
    %107 = vmatpush1.msra.mxu0 0.0
    %108 = vmatprep.subr.mxu0 0.0
    %109 = vmatpush1.msra.mxu0 0.0
    %110 = vmatprep.subr.mxu0 0.0
    %111 = vmatpush1.msra.mxu0 0.0
    %112 = vmatprep.subr.mxu0 0.0
    %113 = vmatpush1.msra.mxu0 0.0
    %114 = vmatprep.subr.mxu0 0.0
    %115 = vmatpush1.msra.mxu0 0.0
    %116 = vmatprep.subr.mxu0 0.0
    %117 = vmatpush1.msra.mxu0 0.0
    %118 = vmatprep.subr.mxu0 0.0
    %119 = vmatpush1.msra.mxu0 0.0
    %120 = vmatprep.subr.mxu0 0.0
    %121 = vmatpush1.msra.mxu0 0.0
    %122 = vmatprep.subr.mxu0 0.0
    %123 = vmatpush1.msra.mxu0 0.0
    %124 = vmatprep.subr.mxu0 0.0
    %125 = vmatpush1.msra.mxu0 0.0
    %126 = vmatprep.subr.mxu0 0.0
    %127 = vmatpush1.msra.mxu0 0.0
    %128 = vmatprep.subr.mxu0 0.0
    %129 = vmatpush1.msra.mxu0 0.0
    %130 = vmatprep.subr.mxu0 0.0
    %131 = vmatpush1.msra.mxu0 0.0
    %132 = vmatprep.subr.mxu0 0.0
    %133 = vmatpush1.msra.mxu0 0.0
    %134 = vmatprep.subr.mxu0 0.0
    %135 = vmatpush1.msra.mxu0 0.0
    %136 = vmatprep.subr.mxu0 0.0
    %137 = vmatpush1.msra.mxu0 0.0
    %138 = vmatprep.subr.mxu0 0.0
    %139 = vmatpush1.msra.mxu0 0.0
    %140 = vmatprep.subr.mxu0 0.0
    %141 = vmatpush1.msra.mxu0 0.0
    %142 = vmatprep.subr.mxu0 0.0
    %143 = vmatpush1.msra.mxu0 0.0
    %144 = vmatprep.subr.mxu0 0.0
    %145 = vmatpush1.msra.mxu0 0.0
    %146 = vmatprep.subr.mxu0 0.0
    %147 = vmatpush1.msra.mxu0 0.0
    %148 = vmatprep.subr.mxu0 0.0
    %149 = vmatpush1.msra.mxu0 0.0
    %150 = vmatprep.subr.mxu0 0.0
    %151 = vmatpush1.msra.mxu0 0.0
    %152 = vmatprep.subr.mxu0 0.0
    %153 = vmatpush1.msra.mxu0 0.0
    %154 = vmatprep.subr.mxu0 0.0
    %155 = vmatpush1.msra.mxu0 0.0
    %156 = vmatprep.mubr.f32.mxu0 0.0
    %157 = vmatmul.mubr.f32.gmra.mrb[0].mxu0 %v87
    %v158 = vpop.f32.mrb[0].mxu0
    %v159 = vadd.f32 %v83, %v158
    %v160 = vpop.f32.mrb[0].mxu0
    %161 = vmatprep.mubr.f32.mxu0 0.0
    %162 = vmatmul.mubr.f32.gmra.mrb[0].mxu0 %v90
    %v163 = vpop.f32.mrb[0].mxu0
    %v164 = vadd.f32 %v83, %v163
    %v165 = vpop.f32.mrb[0].mxu0
    %166 = vdwg.mxu0
    %v167 = vld [vmem:[#allocation7] sm:$0xff]
    %v168 = vld [vmem:[#allocation7 + $0x8] sm:$0xff]
    %170 = vrot.lane.b32.xlu0 %v159, 96
    %v171 = vpop.permute.xlu0 %170
    %vm172 = vcmask 64512
    %v173 = vsel %vm172, %v159, 0
    %v175 = vsel %vm172, %v171, 0
    %177 = vmatprep.subr.mxu0 0.0
    %178 = vmatpush1.xpose.msra.mxu0 %v175
    %179 = vmatprep.subr.mxu0 0.0
    %180 = vmatpush1.xpose.msra.mxu0 0.0
    %181 = vmatprep.subr.mxu0 0.0
    %182 = vmatpush1.xpose.msra.mxu0 0.0
    %183 = vmatprep.subr.mxu0 0.0
    %184 = vmatpush1.xpose.msra.mxu0 0.0
    %185 = vmatprep.subr.mxu0 0.0
    %186 = vmatpush1.xpose.msra.mxu0 0.0
    %187 = vmatprep.subr.mxu0 0.0
    %188 = vmatpush1.xpose.msra.mxu0 0.0
    %189 = vmatprep.subr.mxu0 0.0
    %190 = vmatpush1.xpose.msra.mxu0 0.0
    %191 = vmatprep.subr.mxu0 0.0
    %192 = vmatpush1.xpose.msra.mxu0 0.0
    %193 = vmatprep.subr.mxu0 0.0
    %194 = vmatpush1.xpose.msra.mxu0 0.0
    %195 = vmatprep.subr.mxu0 0.0
    %196 = vmatpush1.xpose.msra.mxu0 0.0
    %197 = vmatprep.subr.mxu0 0.0
    %198 = vmatpush1.xpose.msra.mxu0 0.0
    %199 = vmatprep.subr.mxu0 0.0
    %200 = vmatpush1.xpose.msra.mxu0 0.0
    %201 = vmatprep.subr.mxu0 0.0
    %202 = vmatpush1.xpose.msra.mxu0 0.0
    %203 = vmatprep.subr.mxu0 0.0
    %204 = vmatpush1.xpose.msra.mxu0 0.0
    %205 = vmatprep.subr.mxu0 0.0
    %206 = vmatpush1.xpose.msra.mxu0 0.0
    %207 = vmatprep.subr.mxu0 0.0
    %208 = vmatpush1.xpose.msra.mxu0 0.0
    %209 = vmatprep.subr.mxu0 0.0
    %210 = vmatpush1.xpose.msra.mxu0 0.0
    %211 = vmatprep.subr.mxu0 0.0
    %212 = vmatpush1.xpose.msra.mxu0 0.0
    %213 = vmatprep.subr.mxu0 0.0
    %214 = vmatpush1.xpose.msra.mxu0 0.0
    %215 = vmatprep.subr.mxu0 0.0
    %216 = vmatpush1.xpose.msra.mxu0 0.0
    %217 = vmatprep.subr.mxu0 0.0
    %218 = vmatpush1.xpose.msra.mxu0 0.0
    %219 = vmatprep.subr.mxu0 0.0
    %220 = vmatpush1.xpose.msra.mxu0 0.0
    %221 = vmatprep.subr.mxu0 0.0
    %222 = vmatpush1.xpose.msra.mxu0 0.0
    %223 = vmatprep.subr.mxu0 0.0
    %224 = vmatpush1.xpose.msra.mxu0 0.0
    %225 = vmatprep.subr.mxu0 0.0
    %226 = vmatpush1.xpose.msra.mxu0 0.0
    %227 = vmatprep.subr.mxu0 0.0
    %228 = vmatpush1.xpose.msra.mxu0 0.0
    %229 = vmatprep.subr.mxu0 0.0
    %230 = vmatpush1.xpose.msra.mxu0 0.0
    %231 = vmatprep.subr.mxu0 0.0
    %232 = vmatpush1.xpose.msra.mxu0 0.0
    %233 = vmatprep.subr.mxu0 0.0
    %234 = vmatpush1.xpose.msra.mxu0 0.0
    %235 = vmatprep.subr.mxu0 0.0
    %236 = vmatpush1.xpose.msra.mxu0 0.0
    %237 = vmatprep.subr.mxu0 0.0
    %238 = vmatpush1.xpose.msra.mxu0 0.0
    %239 = vmatprep.subr.mxu0 0.0
    %240 = vmatpush1.xpose.msra.mxu0 0.0
    %241 = vmatprep.mubr.f32.mxu0 0.0
    %242 = vmatmul.mubr.f32.gmra.mrb[0].mxu0 %v173
    %v243 = vpop.f32.mrb[0].mxu0
    %v244 = vadd.f32 0.0, %v243
    %v245 = vpop.f32.mrb[0].mxu0
    %246 = vdwg.mxu0
    %248 = vrot.lane.b32.xlu0 %v164, 96
    %v249 = vpop.permute.xlu0 %248
    %v250 = vsel %vm172, %v164, 0
    %v252 = vsel %vm172, %v249, 0
    %254 = vmatprep.subr.mxu0 0.0
    %255 = vmatpush1.xpose.msra.mxu0 %v252
    %256 = vmatprep.subr.mxu0 0.0
    %257 = vmatpush1.xpose.msra.mxu0 0.0
    %258 = vmatprep.subr.mxu0 0.0
    %259 = vmatpush1.xpose.msra.mxu0 0.0
    %260 = vmatprep.subr.mxu0 0.0
    %261 = vmatpush1.xpose.msra.mxu0 0.0
    %262 = vmatprep.subr.mxu0 0.0
    %263 = vmatpush1.xpose.msra.mxu0 0.0
    %264 = vmatprep.subr.mxu0 0.0
    %265 = vmatpush1.xpose.msra.mxu0 0.0
    %266 = vmatprep.subr.mxu0 0.0
    %267 = vmatpush1.xpose.msra.mxu0 0.0
    %268 = vmatprep.subr.mxu0 0.0
    %269 = vmatpush1.xpose.msra.mxu0 0.0
    %270 = vmatprep.subr.mxu0 0.0
    %271 = vmatpush1.xpose.msra.mxu0 0.0
    %272 = vmatprep.subr.mxu0 0.0
    %273 = vmatpush1.xpose.msra.mxu0 0.0
    %274 = vmatprep.subr.mxu0 0.0
    %275 = vmatpush1.xpose.msra.mxu0 0.0
    %276 = vmatprep.subr.mxu0 0.0
    %277 = vmatpush1.xpose.msra.mxu0 0.0
    %278 = vmatprep.subr.mxu0 0.0
    %279 = vmatpush1.xpose.msra.mxu0 0.0
    %280 = vmatprep.subr.mxu0 0.0
    %281 = vmatpush1.xpose.msra.mxu0 0.0
    %282 = vmatprep.subr.mxu0 0.0
    %283 = vmatpush1.xpose.msra.mxu0 0.0
    %284 = vmatprep.subr.mxu0 0.0
    %285 = vmatpush1.xpose.msra.mxu0 0.0
    %286 = vmatprep.subr.mxu0 0.0
    %287 = vmatpush1.xpose.msra.mxu0 0.0
    %288 = vmatprep.subr.mxu0 0.0
    %289 = vmatpush1.xpose.msra.mxu0 0.0
    %290 = vmatprep.subr.mxu0 0.0
    %291 = vmatpush1.xpose.msra.mxu0 0.0
    %292 = vmatprep.subr.mxu0 0.0
    %293 = vmatpush1.xpose.msra.mxu0 0.0
    %294 = vmatprep.subr.mxu0 0.0
    %295 = vmatpush1.xpose.msra.mxu0 0.0
    %296 = vmatprep.subr.mxu0 0.0
    %297 = vmatpush1.xpose.msra.mxu0 0.0
    %298 = vmatprep.subr.mxu0 0.0
    %299 = vmatpush1.xpose.msra.mxu0 0.0
    %300 = vmatprep.subr.mxu0 0.0
    %301 = vmatpush1.xpose.msra.mxu0 0.0
    %302 = vmatprep.subr.mxu0 0.0
    %303 = vmatpush1.xpose.msra.mxu0 0.0
    %304 = vmatprep.subr.mxu0 0.0
    %305 = vmatpush1.xpose.msra.mxu0 0.0
    %306 = vmatprep.subr.mxu0 0.0
    %307 = vmatpush1.xpose.msra.mxu0 0.0
    %308 = vmatprep.subr.mxu0 0.0
    %309 = vmatpush1.xpose.msra.mxu0 0.0
    %310 = vmatprep.subr.mxu0 0.0
    %311 = vmatpush1.xpose.msra.mxu0 0.0
    %312 = vmatprep.subr.mxu0 0.0
    %313 = vmatpush1.xpose.msra.mxu0 0.0
    %314 = vmatprep.subr.mxu0 0.0
    %315 = vmatpush1.xpose.msra.mxu0 0.0
    %316 = vmatprep.subr.mxu0 0.0
    %317 = vmatpush1.xpose.msra.mxu0 0.0
    %318 = vmatprep.mubr.f32.mxu0 0.0
    %319 = vmatmul.mubr.f32.gmra.mrb[0].mxu0 %v250
    %v320 = vpop.f32.mrb[0].mxu0
    %v321 = vadd.f32 0.0, %v320
    %v322 = vpop.f32.mrb[0].mxu0
    %323 = vdwg.mxu0
    %v324 = vmul.f32 %v244, 0.35355338
    %v325 = vmul.f32 %v321, 0.35355338
    %v326 = vadd.f32 %v324, %v167
    %v327 = vadd.f32 %v325, %v168
    %v328 = vsel %vm172, %v326, -inf
    %329 = vmax.xlane.f32.xlu0 %v328
    %v330 = vpop.xlane.xlu0 %329
    %v331 = vsel %vm172, %v327, -inf
    %332 = vmax.xlane.f32.xlu0 %v331
    %v333 = vpop.xlane.xlu0 %332
    %v334 = vsub.f32 %v326, %v330
    %v335 = vsub.f32 %v327, %v333
    %v336 = vmul.f32 %v334, 1.442695
    %v337 = vpow.pop %v336
    %v338 = vmul.f32 %v335, 1.442695
    %v339 = vpow.pop %v338
    %v340 = vsel %vm172, %v337, 0.0
    %341 = vadd.xlane.f32.xlu0 %v340
    %v342 = vpop.xlane.xlu0 %341
    %v343 = vsel %vm172, %v339, 0.0
    %344 = vadd.xlane.f32.xlu0 %v343
    %v345 = vpop.xlane.xlu0 %344
    %v346 = vrcp.pop %v342
    %v347 = vrcp.pop %v345
    %v348 = vmul.f32 %v337, %v346
    %v349 = vmul.f32 %v339, %v347
    %350 = vrot.lane.b32.xlu0 %v159, 64
    %v351 = vpop.permute.xlu0 %350
    %v354 = vsel %vm172, %v348, 0
    %356 = vmatprep.subr.mxu0 0.0
    %357 = vmatpush1.msra.mxu0 %v351
    %358 = vmatprep.subr.mxu0 0.0
    %359 = vmatpush1.msra.mxu0 0.0
    %360 = vmatprep.subr.mxu0 0.0
    %361 = vmatpush1.msra.mxu0 0.0
    %362 = vmatprep.subr.mxu0 0.0
    %363 = vmatpush1.msra.mxu0 0.0
    %364 = vmatprep.subr.mxu0 0.0
    %365 = vmatpush1.msra.mxu0 0.0
    %366 = vmatprep.subr.mxu0 0.0
    %367 = vmatpush1.msra.mxu0 0.0
    %368 = vmatprep.subr.mxu0 0.0
    %369 = vmatpush1.msra.mxu0 0.0
    %370 = vmatprep.subr.mxu0 0.0
    %371 = vmatpush1.msra.mxu0 0.0
    %372 = vmatprep.subr.mxu0 0.0
    %373 = vmatpush1.msra.mxu0 0.0
    %374 = vmatprep.subr.mxu0 0.0
    %375 = vmatpush1.msra.mxu0 0.0
    %376 = vmatprep.subr.mxu0 0.0
    %377 = vmatpush1.msra.mxu0 0.0
    %378 = vmatprep.subr.mxu0 0.0
    %379 = vmatpush1.msra.mxu0 0.0
    %380 = vmatprep.subr.mxu0 0.0
    %381 = vmatpush1.msra.mxu0 0.0
    %382 = vmatprep.subr.mxu0 0.0
    %383 = vmatpush1.msra.mxu0 0.0
    %384 = vmatprep.subr.mxu0 0.0
    %385 = vmatpush1.msra.mxu0 0.0
    %386 = vmatprep.subr.mxu0 0.0
    %387 = vmatpush1.msra.mxu0 0.0
    %388 = vmatprep.subr.mxu0 0.0
    %389 = vmatpush1.msra.mxu0 0.0
    %390 = vmatprep.subr.mxu0 0.0
    %391 = vmatpush1.msra.mxu0 0.0
    %392 = vmatprep.subr.mxu0 0.0
    %393 = vmatpush1.msra.mxu0 0.0
    %394 = vmatprep.subr.mxu0 0.0
    %395 = vmatpush1.msra.mxu0 0.0
    %396 = vmatprep.subr.mxu0 0.0
    %397 = vmatpush1.msra.mxu0 0.0
    %398 = vmatprep.subr.mxu0 0.0
    %399 = vmatpush1.msra.mxu0 0.0
    %400 = vmatprep.subr.mxu0 0.0
    %401 = vmatpush1.msra.mxu0 0.0
    %402 = vmatprep.subr.mxu0 0.0
    %403 = vmatpush1.msra.mxu0 0.0
    %404 = vmatprep.subr.mxu0 0.0
    %405 = vmatpush1.msra.mxu0 0.0
    %406 = vmatprep.subr.mxu0 0.0
    %407 = vmatpush1.msra.mxu0 0.0
    %408 = vmatprep.subr.mxu0 0.0
    %409 = vmatpush1.msra.mxu0 0.0
    %410 = vmatprep.subr.mxu0 0.0
    %411 = vmatpush1.msra.mxu0 0.0
    %412 = vmatprep.subr.mxu0 0.0
    %413 = vmatpush1.msra.mxu0 0.0
    %414 = vmatprep.subr.mxu0 0.0
    %415 = vmatpush1.msra.mxu0 0.0
    %416 = vmatprep.subr.mxu0 0.0
    %417 = vmatpush1.msra.mxu0 0.0
    %418 = vmatprep.subr.mxu0 0.0
    %419 = vmatpush1.msra.mxu0 0.0
    %420 = vmatprep.mubr.f32.mxu0 0.0
    %421 = vmatmul.mubr.f32.gmra.mrb[0].mxu0 %v354
    %v422 = vpop.f32.mrb[0].mxu0
    %v423 = vadd.f32 0.0, %v422
    %v424 = vpop.f32.mrb[0].mxu0
    %425 = vdwg.mxu0
    %426 = vrot.lane.b32.xlu0 %v164, 64
    %v427 = vpop.permute.xlu0 %426
    %v430 = vsel %vm172, %v349, 0
    %432 = vmatprep.subr.mxu0 0.0
    %433 = vmatpush1.msra.mxu0 %v427
    %434 = vmatprep.subr.mxu0 0.0
    %435 = vmatpush1.msra.mxu0 0.0
    %436 = vmatprep.subr.mxu0 0.0
    %437 = vmatpush1.msra.mxu0 0.0
    %438 = vmatprep.subr.mxu0 0.0
    %439 = vmatpush1.msra.mxu0 0.0
    %440 = vmatprep.subr.mxu0 0.0
    %441 = vmatpush1.msra.mxu0 0.0
    %442 = vmatprep.subr.mxu0 0.0
    %443 = vmatpush1.msra.mxu0 0.0
    %444 = vmatprep.subr.mxu0 0.0
    %445 = vmatpush1.msra.mxu0 0.0
    %446 = vmatprep.subr.mxu0 0.0
    %447 = vmatpush1.msra.mxu0 0.0
    %448 = vmatprep.subr.mxu0 0.0
    %449 = vmatpush1.msra.mxu0 0.0
    %450 = vmatprep.subr.mxu0 0.0
    %451 = vmatpush1.msra.mxu0 0.0
    %452 = vmatprep.subr.mxu0 0.0
    %453 = vmatpush1.msra.mxu0 0.0
    %454 = vmatprep.subr.mxu0 0.0
    %455 = vmatpush1.msra.mxu0 0.0
    %456 = vmatprep.subr.mxu0 0.0
    %457 = vmatpush1.msra.mxu0 0.0
    %458 = vmatprep.subr.mxu0 0.0
    %459 = vmatpush1.msra.mxu0 0.0
    %460 = vmatprep.subr.mxu0 0.0
    %461 = vmatpush1.msra.mxu0 0.0
    %462 = vmatprep.subr.mxu0 0.0
    %463 = vmatpush1.msra.mxu0 0.0
    %464 = vmatprep.subr.mxu0 0.0
    %465 = vmatpush1.msra.mxu0 0.0
    %466 = vmatprep.subr.mxu0 0.0
    %467 = vmatpush1.msra.mxu0 0.0
    %468 = vmatprep.subr.mxu0 0.0
    %469 = vmatpush1.msra.mxu0 0.0
    %470 = vmatprep.subr.mxu0 0.0
    %471 = vmatpush1.msra.mxu0 0.0
    %472 = vmatprep.subr.mxu0 0.0
    %473 = vmatpush1.msra.mxu0 0.0
    %474 = vmatprep.subr.mxu0 0.0
    %475 = vmatpush1.msra.mxu0 0.0
    %476 = vmatprep.subr.mxu0 0.0
    %477 = vmatpush1.msra.mxu0 0.0
    %478 = vmatprep.subr.mxu0 0.0
    %479 = vmatpush1.msra.mxu0 0.0
    %480 = vmatprep.subr.mxu0 0.0
    %481 = vmatpush1.msra.mxu0 0.0
    %482 = vmatprep.subr.mxu0 0.0
    %483 = vmatpush1.msra.mxu0 0.0
    %484 = vmatprep.subr.mxu0 0.0
    %485 = vmatpush1.msra.mxu0 0.0
    %486 = vmatprep.subr.mxu0 0.0
    %487 = vmatpush1.msra.mxu0 0.0
    %488 = vmatprep.subr.mxu0 0.0
    %489 = vmatpush1.msra.mxu0 0.0
    %490 = vmatprep.subr.mxu0 0.0
    %491 = vmatpush1.msra.mxu0 0.0
    %492 = vmatprep.subr.mxu0 0.0
    %493 = vmatpush1.msra.mxu0 0.0
    %494 = vmatprep.subr.mxu0 0.0
    %495 = vmatpush1.msra.mxu0 0.0
    %496 = vmatprep.mubr.f32.mxu0 0.0
    %497 = vmatmul.mubr.f32.gmra.mrb[0].mxu0 %v430
    %v498 = vpop.f32.mrb[0].mxu0
    %v499 = vadd.f32 0.0, %v498
    %v500 = vpop.f32.mrb[0].mxu0
    %501 = vdwg.mxu0
    %502 = vrot.lane.b32.xlu0 %v159, 120
    %v503 = vpop.permute.xlu0 %502
    %504 = vrot.lane.b32.xlu0 %v159, 88
    %v505 = vpop.permute.xlu0 %504
    %v506 = vsel %vm172, %v503, 0
    %v508 = vsel %vm172, %v505, 0
    %510 = vmatprep.subr.mxu0 0.0
    %511 = vmatpush1.xpose.msra.mxu0 %v508
    %512 = vmatprep.subr.mxu0 0.0
    %513 = vmatpush1.xpose.msra.mxu0 0.0
    %514 = vmatprep.subr.mxu0 0.0
    %515 = vmatpush1.xpose.msra.mxu0 0.0
    %516 = vmatprep.subr.mxu0 0.0
    %517 = vmatpush1.xpose.msra.mxu0 0.0
    %518 = vmatprep.subr.mxu0 0.0
    %519 = vmatpush1.xpose.msra.mxu0 0.0
    %520 = vmatprep.subr.mxu0 0.0
    %521 = vmatpush1.xpose.msra.mxu0 0.0
    %522 = vmatprep.subr.mxu0 0.0
    %523 = vmatpush1.xpose.msra.mxu0 0.0
    %524 = vmatprep.subr.mxu0 0.0
    %525 = vmatpush1.xpose.msra.mxu0 0.0
    %526 = vmatprep.subr.mxu0 0.0
    %527 = vmatpush1.xpose.msra.mxu0 0.0
    %528 = vmatprep.subr.mxu0 0.0
    %529 = vmatpush1.xpose.msra.mxu0 0.0
    %530 = vmatprep.subr.mxu0 0.0
    %531 = vmatpush1.xpose.msra.mxu0 0.0
    %532 = vmatprep.subr.mxu0 0.0
    %533 = vmatpush1.xpose.msra.mxu0 0.0
    %534 = vmatprep.subr.mxu0 0.0
    %535 = vmatpush1.xpose.msra.mxu0 0.0
    %536 = vmatprep.subr.mxu0 0.0
    %537 = vmatpush1.xpose.msra.mxu0 0.0
    %538 = vmatprep.subr.mxu0 0.0
    %539 = vmatpush1.xpose.msra.mxu0 0.0
    %540 = vmatprep.subr.mxu0 0.0
    %541 = vmatpush1.xpose.msra.mxu0 0.0
    %542 = vmatprep.subr.mxu0 0.0
    %543 = vmatpush1.xpose.msra.mxu0 0.0
    %544 = vmatprep.subr.mxu0 0.0
    %545 = vmatpush1.xpose.msra.mxu0 0.0
    %546 = vmatprep.subr.mxu0 0.0
    %547 = vmatpush1.xpose.msra.mxu0 0.0
    %548 = vmatprep.subr.mxu0 0.0
    %549 = vmatpush1.xpose.msra.mxu0 0.0
    %550 = vmatprep.subr.mxu0 0.0
    %551 = vmatpush1.xpose.msra.mxu0 0.0
    %552 = vmatprep.subr.mxu0 0.0
    %553 = vmatpush1.xpose.msra.mxu0 0.0
    %554 = vmatprep.subr.mxu0 0.0
    %555 = vmatpush1.xpose.msra.mxu0 0.0
    %556 = vmatprep.subr.mxu0 0.0
    %557 = vmatpush1.xpose.msra.mxu0 0.0
    %558 = vmatprep.subr.mxu0 0.0
    %559 = vmatpush1.xpose.msra.mxu0 0.0
    %560 = vmatprep.subr.mxu0 0.0
    %561 = vmatpush1.xpose.msra.mxu0 0.0
    %562 = vmatprep.subr.mxu0 0.0
    %563 = vmatpush1.xpose.msra.mxu0 0.0
    %564 = vmatprep.subr.mxu0 0.0
    %565 = vmatpush1.xpose.msra.mxu0 0.0
    %566 = vmatprep.subr.mxu0 0.0
    %567 = vmatpush1.xpose.msra.mxu0 0.0
    %568 = vmatprep.subr.mxu0 0.0
    %569 = vmatpush1.xpose.msra.mxu0 0.0
    %570 = vmatprep.subr.mxu0 0.0
    %571 = vmatpush1.xpose.msra.mxu0 0.0
    %572 = vmatprep.subr.mxu0 0.0
    %573 = vmatpush1.xpose.msra.mxu0 0.0
    %574 = vmatprep.mubr.f32.mxu0 0.0
    %575 = vmatmul.mubr.f32.gmra.mrb[0].mxu0 %v506
    %v576 = vpop.f32.mrb[0].mxu0
    %v577 = vadd.f32 0.0, %v576
    %v578 = vpop.f32.mrb[0].mxu0
    %579 = vdwg.mxu0
    %580 = vrot.lane.b32.xlu0 %v164, 120
    %v581 = vpop.permute.xlu0 %580
    %582 = vrot.lane.b32.xlu0 %v164, 88
    %v583 = vpop.permute.xlu0 %582
    %v584 = vsel %vm172, %v581, 0
    %v586 = vsel %vm172, %v583, 0
    %588 = vmatprep.subr.mxu0 0.0
    %589 = vmatpush1.xpose.msra.mxu0 %v586
    %590 = vmatprep.subr.mxu0 0.0
    %591 = vmatpush1.xpose.msra.mxu0 0.0
    %592 = vmatprep.subr.mxu0 0.0
    %593 = vmatpush1.xpose.msra.mxu0 0.0
    %594 = vmatprep.subr.mxu0 0.0
    %595 = vmatpush1.xpose.msra.mxu0 0.0
    %596 = vmatprep.subr.mxu0 0.0
    %597 = vmatpush1.xpose.msra.mxu0 0.0
    %598 = vmatprep.subr.mxu0 0.0
    %599 = vmatpush1.xpose.msra.mxu0 0.0
    %600 = vmatprep.subr.mxu0 0.0
    %601 = vmatpush1.xpose.msra.mxu0 0.0
    %602 = vmatprep.subr.mxu0 0.0
    %603 = vmatpush1.xpose.msra.mxu0 0.0
    %604 = vmatprep.subr.mxu0 0.0
    %605 = vmatpush1.xpose.msra.mxu0 0.0
    %606 = vmatprep.subr.mxu0 0.0
    %607 = vmatpush1.xpose.msra.mxu0 0.0
    %608 = vmatprep.subr.mxu0 0.0
    %609 = vmatpush1.xpose.msra.mxu0 0.0
    %610 = vmatprep.subr.mxu0 0.0
    %611 = vmatpush1.xpose.msra.mxu0 0.0
    %612 = vmatprep.subr.mxu0 0.0
    %613 = vmatpush1.xpose.msra.mxu0 0.0
    %614 = vmatprep.subr.mxu0 0.0
    %615 = vmatpush1.xpose.msra.mxu0 0.0
    %616 = vmatprep.subr.mxu0 0.0
    %617 = vmatpush1.xpose.msra.mxu0 0.0
    %618 = vmatprep.subr.mxu0 0.0
    %619 = vmatpush1.xpose.msra.mxu0 0.0
    %620 = vmatprep.subr.mxu0 0.0
    %621 = vmatpush1.xpose.msra.mxu0 0.0
    %622 = vmatprep.subr.mxu0 0.0
    %623 = vmatpush1.xpose.msra.mxu0 0.0
    %624 = vmatprep.subr.mxu0 0.0
    %625 = vmatpush1.xpose.msra.mxu0 0.0
    %626 = vmatprep.subr.mxu0 0.0
    %627 = vmatpush1.xpose.msra.mxu0 0.0
    %628 = vmatprep.subr.mxu0 0.0
    %629 = vmatpush1.xpose.msra.mxu0 0.0
    %630 = vmatprep.subr.mxu0 0.0
    %631 = vmatpush1.xpose.msra.mxu0 0.0
    %632 = vmatprep.subr.mxu0 0.0
    %633 = vmatpush1.xpose.msra.mxu0 0.0
    %634 = vmatprep.subr.mxu0 0.0
    %635 = vmatpush1.xpose.msra.mxu0 0.0
    %636 = vmatprep.subr.mxu0 0.0
    %637 = vmatpush1.xpose.msra.mxu0 0.0
    %638 = vmatprep.subr.mxu0 0.0
    %639 = vmatpush1.xpose.msra.mxu0 0.0
    %640 = vmatprep.subr.mxu0 0.0
    %641 = vmatpush1.xpose.msra.mxu0 0.0
    %642 = vmatprep.subr.mxu0 0.0
    %643 = vmatpush1.xpose.msra.mxu0 0.0
    %644 = vmatprep.subr.mxu0 0.0
    %645 = vmatpush1.xpose.msra.mxu0 0.0
    %646 = vmatprep.subr.mxu0 0.0
    %647 = vmatpush1.xpose.msra.mxu0 0.0
    %648 = vmatprep.subr.mxu0 0.0
    %649 = vmatpush1.xpose.msra.mxu0 0.0
    %650 = vmatprep.subr.mxu0 0.0
    %651 = vmatpush1.xpose.msra.mxu0 0.0
    %652 = vmatprep.mubr.f32.mxu0 0.0
    %653 = vmatmul.mubr.f32.gmra.mrb[0].mxu0 %v584
    %v654 = vpop.f32.mrb[0].mxu0
    %v655 = vadd.f32 0.0, %v654
    %v656 = vpop.f32.mrb[0].mxu0
    %657 = vdwg.mxu0
    %v658 = vmul.f32 %v577, 0.35355338
    %v659 = vmul.f32 %v655, 0.35355338
    %v660 = vadd.f32 %v658, %v167
    %v661 = vadd.f32 %v659, %v168
    %v662 = vsel %vm172, %v660, -inf
    %663 = vmax.xlane.f32.xlu0 %v662
    %v664 = vpop.xlane.xlu0 %663
    %v665 = vsel %vm172, %v661, -inf
    %666 = vmax.xlane.f32.xlu0 %v665
    %v667 = vpop.xlane.xlu0 %666
    %v668 = vsub.f32 %v660, %v664
    %v669 = vsub.f32 %v661, %v667
    %v670 = vmul.f32 %v668, 1.442695
    %v671 = vpow.pop %v670
    %v672 = vmul.f32 %v669, 1.442695
    %v673 = vpow.pop %v672
    %v674 = vsel %vm172, %v671, 0.0
    %675 = vadd.xlane.f32.xlu0 %v674
    %v676 = vpop.xlane.xlu0 %675
    %v677 = vsel %vm172, %v673, 0.0
    %678 = vadd.xlane.f32.xlu0 %v677
    %v679 = vpop.xlane.xlu0 %678
    %v680 = vrcp.pop %v676
    %v681 = vrcp.pop %v679
    %v682 = vmul.f32 %v671, %v680
    %v683 = vmul.f32 %v673, %v681
    %684 = vrot.lane.b32.xlu0 %v159, 56
    %v685 = vpop.permute.xlu0 %684
    %v688 = vsel %vm172, %v682, 0
    %690 = vmatprep.subr.mxu0 0.0
    %691 = vmatpush1.msra.mxu0 %v685
    %692 = vmatprep.subr.mxu0 0.0
    %693 = vmatpush1.msra.mxu0 0.0
    %694 = vmatprep.subr.mxu0 0.0
    %695 = vmatpush1.msra.mxu0 0.0
    %696 = vmatprep.subr.mxu0 0.0
    %697 = vmatpush1.msra.mxu0 0.0
    %698 = vmatprep.subr.mxu0 0.0
    %699 = vmatpush1.msra.mxu0 0.0
    %700 = vmatprep.subr.mxu0 0.0
    %701 = vmatpush1.msra.mxu0 0.0
    %702 = vmatprep.subr.mxu0 0.0
    %703 = vmatpush1.msra.mxu0 0.0
    %704 = vmatprep.subr.mxu0 0.0
    %705 = vmatpush1.msra.mxu0 0.0
    %706 = vmatprep.subr.mxu0 0.0
    %707 = vmatpush1.msra.mxu0 0.0
    %708 = vmatprep.subr.mxu0 0.0
    %709 = vmatpush1.msra.mxu0 0.0
    %710 = vmatprep.subr.mxu0 0.0
    %711 = vmatpush1.msra.mxu0 0.0
    %712 = vmatprep.subr.mxu0 0.0
    %713 = vmatpush1.msra.mxu0 0.0
    %714 = vmatprep.subr.mxu0 0.0
    %715 = vmatpush1.msra.mxu0 0.0
    %716 = vmatprep.subr.mxu0 0.0
    %717 = vmatpush1.msra.mxu0 0.0
    %718 = vmatprep.subr.mxu0 0.0
    %719 = vmatpush1.msra.mxu0 0.0
    %720 = vmatprep.subr.mxu0 0.0
    %721 = vmatpush1.msra.mxu0 0.0
    %722 = vmatprep.subr.mxu0 0.0
    %723 = vmatpush1.msra.mxu0 0.0
    %724 = vmatprep.subr.mxu0 0.0
    %725 = vmatpush1.msra.mxu0 0.0
    %726 = vmatprep.subr.mxu0 0.0
    %727 = vmatpush1.msra.mxu0 0.0
    %728 = vmatprep.subr.mxu0 0.0
    %729 = vmatpush1.msra.mxu0 0.0
    %730 = vmatprep.subr.mxu0 0.0
    %731 = vmatpush1.msra.mxu0 0.0
    %732 = vmatprep.subr.mxu0 0.0
    %733 = vmatpush1.msra.mxu0 0.0
    %734 = vmatprep.subr.mxu0 0.0
    %735 = vmatpush1.msra.mxu0 0.0
    %736 = vmatprep.subr.mxu0 0.0
    %737 = vmatpush1.msra.mxu0 0.0
    %738 = vmatprep.subr.mxu0 0.0
    %739 = vmatpush1.msra.mxu0 0.0
    %740 = vmatprep.subr.mxu0 0.0
    %741 = vmatpush1.msra.mxu0 0.0
    %742 = vmatprep.subr.mxu0 0.0
    %743 = vmatpush1.msra.mxu0 0.0
    %744 = vmatprep.subr.mxu0 0.0
    %745 = vmatpush1.msra.mxu0 0.0
    %746 = vmatprep.subr.mxu0 0.0
    %747 = vmatpush1.msra.mxu0 0.0
    %748 = vmatprep.subr.mxu0 0.0
    %749 = vmatpush1.msra.mxu0 0.0
    %750 = vmatprep.subr.mxu0 0.0
    %751 = vmatpush1.msra.mxu0 0.0
    %752 = vmatprep.subr.mxu0 0.0
    %753 = vmatpush1.msra.mxu0 0.0
    %754 = vmatprep.mubr.f32.mxu0 0.0
    %755 = vmatmul.mubr.f32.gmra.mrb[0].mxu0 %v688
    %v756 = vpop.f32.mrb[0].mxu0
    %v757 = vadd.f32 0.0, %v756
    %v758 = vpop.f32.mrb[0].mxu0
    %759 = vdwg.mxu0
    %760 = vrot.lane.b32.xlu0 %v164, 56
    %v761 = vpop.permute.xlu0 %760
    %v764 = vsel %vm172, %v683, 0
    %766 = vmatprep.subr.mxu0 0.0
    %767 = vmatpush1.msra.mxu0 %v761
    %768 = vmatprep.subr.mxu0 0.0
    %769 = vmatpush1.msra.mxu0 0.0
    %770 = vmatprep.subr.mxu0 0.0
    %771 = vmatpush1.msra.mxu0 0.0
    %772 = vmatprep.subr.mxu0 0.0
    %773 = vmatpush1.msra.mxu0 0.0
    %774 = vmatprep.subr.mxu0 0.0
    %775 = vmatpush1.msra.mxu0 0.0
    %776 = vmatprep.subr.mxu0 0.0
    %777 = vmatpush1.msra.mxu0 0.0
    %778 = vmatprep.subr.mxu0 0.0
    %779 = vmatpush1.msra.mxu0 0.0
    %780 = vmatprep.subr.mxu0 0.0
    %781 = vmatpush1.msra.mxu0 0.0
    %782 = vmatprep.subr.mxu0 0.0
    %783 = vmatpush1.msra.mxu0 0.0
    %784 = vmatprep.subr.mxu0 0.0
    %785 = vmatpush1.msra.mxu0 0.0
    %786 = vmatprep.subr.mxu0 0.0
    %787 = vmatpush1.msra.mxu0 0.0
    %788 = vmatprep.subr.mxu0 0.0
    %789 = vmatpush1.msra.mxu0 0.0
    %790 = vmatprep.subr.mxu0 0.0
    %791 = vmatpush1.msra.mxu0 0.0
    %792 = vmatprep.subr.mxu0 0.0
    %793 = vmatpush1.msra.mxu0 0.0
    %794 = vmatprep.subr.mxu0 0.0
    %795 = vmatpush1.msra.mxu0 0.0
    %796 = vmatprep.subr.mxu0 0.0
    %797 = vmatpush1.msra.mxu0 0.0
    %798 = vmatprep.subr.mxu0 0.0
    %799 = vmatpush1.msra.mxu0 0.0
    %800 = vmatprep.subr.mxu0 0.0
    %801 = vmatpush1.msra.mxu0 0.0
    %802 = vmatprep.subr.mxu0 0.0
    %803 = vmatpush1.msra.mxu0 0.0
    %804 = vmatprep.subr.mxu0 0.0
    %805 = vmatpush1.msra.mxu0 0.0
    %806 = vmatprep.subr.mxu0 0.0
    %807 = vmatpush1.msra.mxu0 0.0
    %808 = vmatprep.subr.mxu0 0.0
    %809 = vmatpush1.msra.mxu0 0.0
    %810 = vmatprep.subr.mxu0 0.0
    %811 = vmatpush1.msra.mxu0 0.0
    %812 = vmatprep.subr.mxu0 0.0
    %813 = vmatpush1.msra.mxu0 0.0
    %814 = vmatprep.subr.mxu0 0.0
    %815 = vmatpush1.msra.mxu0 0.0
    %816 = vmatprep.subr.mxu0 0.0
    %817 = vmatpush1.msra.mxu0 0.0
    %818 = vmatprep.subr.mxu0 0.0
    %819 = vmatpush1.msra.mxu0 0.0
    %820 = vmatprep.subr.mxu0 0.0
    %821 = vmatpush1.msra.mxu0 0.0
    %822 = vmatprep.subr.mxu0 0.0
    %823 = vmatpush1.msra.mxu0 0.0
    %824 = vmatprep.subr.mxu0 0.0
    %825 = vmatpush1.msra.mxu0 0.0
    %826 = vmatprep.subr.mxu0 0.0
    %827 = vmatpush1.msra.mxu0 0.0
    %828 = vmatprep.subr.mxu0 0.0
    %829 = vmatpush1.msra.mxu0 0.0
    %830 = vmatprep.mubr.f32.mxu0 0.0
    %831 = vmatmul.mubr.f32.gmra.mrb[0].mxu0 %v764
    %v832 = vpop.f32.mrb[0].mxu0
    %v833 = vadd.f32 0.0, %v832
    %v834 = vpop.f32.mrb[0].mxu0
    %835 = vdwg.mxu0
    %836 = vrot.lane.b32.xlu0 %v159, 112
    %v837 = vpop.permute.xlu0 %836
    %838 = vrot.lane.b32.xlu0 %v159, 80
    %v839 = vpop.permute.xlu0 %838
    %v840 = vsel %vm172, %v837, 0
    %v842 = vsel %vm172, %v839, 0
    %844 = vmatprep.subr.mxu0 0.0
    %845 = vmatpush1.xpose.msra.mxu0 %v842
    %846 = vmatprep.subr.mxu0 0.0
    %847 = vmatpush1.xpose.msra.mxu0 0.0
    %848 = vmatprep.subr.mxu0 0.0
    %849 = vmatpush1.xpose.msra.mxu0 0.0
    %850 = vmatprep.subr.mxu0 0.0
    %851 = vmatpush1.xpose.msra.mxu0 0.0
    %852 = vmatprep.subr.mxu0 0.0
    %853 = vmatpush1.xpose.msra.mxu0 0.0
    %854 = vmatprep.subr.mxu0 0.0
    %855 = vmatpush1.xpose.msra.mxu0 0.0
    %856 = vmatprep.subr.mxu0 0.0
    %857 = vmatpush1.xpose.msra.mxu0 0.0
    %858 = vmatprep.subr.mxu0 0.0
    %859 = vmatpush1.xpose.msra.mxu0 0.0
    %860 = vmatprep.subr.mxu0 0.0
    %861 = vmatpush1.xpose.msra.mxu0 0.0
    %862 = vmatprep.subr.mxu0 0.0
    %863 = vmatpush1.xpose.msra.mxu0 0.0
    %864 = vmatprep.subr.mxu0 0.0
    %865 = vmatpush1.xpose.msra.mxu0 0.0
    %866 = vmatprep.subr.mxu0 0.0
    %867 = vmatpush1.xpose.msra.mxu0 0.0
    %868 = vmatprep.subr.mxu0 0.0
    %869 = vmatpush1.xpose.msra.mxu0 0.0
    %870 = vmatprep.subr.mxu0 0.0
    %871 = vmatpush1.xpose.msra.mxu0 0.0
    %872 = vmatprep.subr.mxu0 0.0
    %873 = vmatpush1.xpose.msra.mxu0 0.0
    %874 = vmatprep.subr.mxu0 0.0
    %875 = vmatpush1.xpose.msra.mxu0 0.0
    %876 = vmatprep.subr.mxu0 0.0
    %877 = vmatpush1.xpose.msra.mxu0 0.0
    %878 = vmatprep.subr.mxu0 0.0
    %879 = vmatpush1.xpose.msra.mxu0 0.0
    %880 = vmatprep.subr.mxu0 0.0
    %881 = vmatpush1.xpose.msra.mxu0 0.0
    %882 = vmatprep.subr.mxu0 0.0
    %883 = vmatpush1.xpose.msra.mxu0 0.0
    %884 = vmatprep.subr.mxu0 0.0
    %885 = vmatpush1.xpose.msra.mxu0 0.0
    %886 = vmatprep.subr.mxu0 0.0
    %887 = vmatpush1.xpose.msra.mxu0 0.0
    %888 = vmatprep.subr.mxu0 0.0
    %889 = vmatpush1.xpose.msra.mxu0 0.0
    %890 = vmatprep.subr.mxu0 0.0
    %891 = vmatpush1.xpose.msra.mxu0 0.0
    %892 = vmatprep.subr.mxu0 0.0
    %893 = vmatpush1.xpose.msra.mxu0 0.0
    %894 = vmatprep.subr.mxu0 0.0
    %895 = vmatpush1.xpose.msra.mxu0 0.0
    %896 = vmatprep.subr.mxu0 0.0
    %897 = vmatpush1.xpose.msra.mxu0 0.0
    %898 = vmatprep.subr.mxu0 0.0
    %899 = vmatpush1.xpose.msra.mxu0 0.0
    %900 = vmatprep.subr.mxu0 0.0
    %901 = vmatpush1.xpose.msra.mxu0 0.0
    %902 = vmatprep.subr.mxu0 0.0
    %903 = vmatpush1.xpose.msra.mxu0 0.0
    %904 = vmatprep.subr.mxu0 0.0
    %905 = vmatpush1.xpose.msra.mxu0 0.0
    %906 = vmatprep.subr.mxu0 0.0
    %907 = vmatpush1.xpose.msra.mxu0 0.0
    %908 = vmatprep.mubr.f32.mxu0 0.0
    %909 = vmatmul.mubr.f32.gmra.mrb[0].mxu0 %v840
    %v910 = vpop.f32.mrb[0].mxu0
    %v911 = vadd.f32 0.0, %v910
    %v912 = vpop.f32.mrb[0].mxu0
    %913 = vdwg.mxu0
    %914 = vrot.lane.b32.xlu0 %v164, 112
    %v915 = vpop.permute.xlu0 %914
    %916 = vrot.lane.b32.xlu0 %v164, 80
    %v917 = vpop.permute.xlu0 %916
    %v918 = vsel %vm172, %v915, 0
    %v920 = vsel %vm172, %v917, 0
    %922 = vmatprep.subr.mxu0 0.0
    %923 = vmatpush1.xpose.msra.mxu0 %v920
    %924 = vmatprep.subr.mxu0 0.0
    %925 = vmatpush1.xpose.msra.mxu0 0.0
    %926 = vmatprep.subr.mxu0 0.0
    %927 = vmatpush1.xpose.msra.mxu0 0.0
    %928 = vmatprep.subr.mxu0 0.0
    %929 = vmatpush1.xpose.msra.mxu0 0.0
    %930 = vmatprep.subr.mxu0 0.0
    %931 = vmatpush1.xpose.msra.mxu0 0.0
    %932 = vmatprep.subr.mxu0 0.0
    %933 = vmatpush1.xpose.msra.mxu0 0.0
    %934 = vmatprep.subr.mxu0 0.0
    %935 = vmatpush1.xpose.msra.mxu0 0.0
    %936 = vmatprep.subr.mxu0 0.0
    %937 = vmatpush1.xpose.msra.mxu0 0.0
    %938 = vmatprep.subr.mxu0 0.0
    %939 = vmatpush1.xpose.msra.mxu0 0.0
    %940 = vmatprep.subr.mxu0 0.0
    %941 = vmatpush1.xpose.msra.mxu0 0.0
    %942 = vmatprep.subr.mxu0 0.0
    %943 = vmatpush1.xpose.msra.mxu0 0.0
    %944 = vmatprep.subr.mxu0 0.0
    %945 = vmatpush1.xpose.msra.mxu0 0.0
    %946 = vmatprep.subr.mxu0 0.0
    %947 = vmatpush1.xpose.msra.mxu0 0.0
    %948 = vmatprep.subr.mxu0 0.0
    %949 = vmatpush1.xpose.msra.mxu0 0.0
    %950 = vmatprep.subr.mxu0 0.0
    %951 = vmatpush1.xpose.msra.mxu0 0.0
    %952 = vmatprep.subr.mxu0 0.0
    %953 = vmatpush1.xpose.msra.mxu0 0.0
    %954 = vmatprep.subr.mxu0 0.0
    %955 = vmatpush1.xpose.msra.mxu0 0.0
    %956 = vmatprep.subr.mxu0 0.0
    %957 = vmatpush1.xpose.msra.mxu0 0.0
    %958 = vmatprep.subr.mxu0 0.0
    %959 = vmatpush1.xpose.msra.mxu0 0.0
    %960 = vmatprep.subr.mxu0 0.0
    %961 = vmatpush1.xpose.msra.mxu0 0.0
    %962 = vmatprep.subr.mxu0 0.0
    %963 = vmatpush1.xpose.msra.mxu0 0.0
    %964 = vmatprep.subr.mxu0 0.0
    %965 = vmatpush1.xpose.msra.mxu0 0.0
    %966 = vmatprep.subr.mxu0 0.0
    %967 = vmatpush1.xpose.msra.mxu0 0.0
    %968 = vmatprep.subr.mxu0 0.0
    %969 = vmatpush1.xpose.msra.mxu0 0.0
    %970 = vmatprep.subr.mxu0 0.0
    %971 = vmatpush1.xpose.msra.mxu0 0.0
    %972 = vmatprep.subr.mxu0 0.0
    %973 = vmatpush1.xpose.msra.mxu0 0.0
    %974 = vmatprep.subr.mxu0 0.0
    %975 = vmatpush1.xpose.msra.mxu0 0.0
    %976 = vmatprep.subr.mxu0 0.0
    %977 = vmatpush1.xpose.msra.mxu0 0.0
    %978 = vmatprep.subr.mxu0 0.0
    %979 = vmatpush1.xpose.msra.mxu0 0.0
    %980 = vmatprep.subr.mxu0 0.0
    %981 = vmatpush1.xpose.msra.mxu0 0.0
    %982 = vmatprep.subr.mxu0 0.0
    %983 = vmatpush1.xpose.msra.mxu0 0.0
    %984 = vmatprep.subr.mxu0 0.0
    %985 = vmatpush1.xpose.msra.mxu0 0.0
    %986 = vmatprep.mubr.f32.mxu0 0.0
    %987 = vmatmul.mubr.f32.gmra.mrb[0].mxu0 %v918
    %v988 = vpop.f32.mrb[0].mxu0
    %v989 = vadd.f32 0.0, %v988
    %v990 = vpop.f32.mrb[0].mxu0
    %991 = vdwg.mxu0
    %v992 = vmul.f32 %v911, 0.35355338
    %v993 = vmul.f32 %v989, 0.35355338
    %v994 = vadd.f32 %v992, %v167
    %v995 = vadd.f32 %v993, %v168
    %v996 = vsel %vm172, %v994, -inf
    %997 = vmax.xlane.f32.xlu0 %v996
    %v998 = vpop.xlane.xlu0 %997
    %v999 = vsel %vm172, %v995, -inf
    %1000 = vmax.xlane.f32.xlu0 %v999
    %v1001 = vpop.xlane.xlu0 %1000
    %v1002 = vsub.f32 %v994, %v998
    %v1003 = vsub.f32 %v995, %v1001
    %v1004 = vmul.f32 %v1002, 1.442695
    %v1005 = vpow.pop %v1004
    %v1006 = vmul.f32 %v1003, 1.442695
    %v1007 = vpow.pop %v1006
    %v1008 = vsel %vm172, %v1005, 0.0
    %1009 = vadd.xlane.f32.xlu0 %v1008
    %v1010 = vpop.xlane.xlu0 %1009
    %v1011 = vsel %vm172, %v1007, 0.0
    %1012 = vadd.xlane.f32.xlu0 %v1011
    %v1013 = vpop.xlane.xlu0 %1012
    %v1014 = vrcp.pop %v1010
    %v1015 = vrcp.pop %v1013
    %v1016 = vmul.f32 %v1005, %v1014
    %v1017 = vmul.f32 %v1007, %v1015
    %1018 = vrot.lane.b32.xlu0 %v159, 48
    %v1019 = vpop.permute.xlu0 %1018
    %v1022 = vsel %vm172, %v1016, 0
    %1024 = vmatprep.subr.mxu0 0.0
    %1025 = vmatpush1.msra.mxu0 %v1019
    %1026 = vmatprep.subr.mxu0 0.0
    %1027 = vmatpush1.msra.mxu0 0.0
    %1028 = vmatprep.subr.mxu0 0.0
    %1029 = vmatpush1.msra.mxu0 0.0
    %1030 = vmatprep.subr.mxu0 0.0
    %1031 = vmatpush1.msra.mxu0 0.0
    %1032 = vmatprep.subr.mxu0 0.0
    %1033 = vmatpush1.msra.mxu0 0.0
    %1034 = vmatprep.subr.mxu0 0.0
    %1035 = vmatpush1.msra.mxu0 0.0
    %1036 = vmatprep.subr.mxu0 0.0
    %1037 = vmatpush1.msra.mxu0 0.0
    %1038 = vmatprep.subr.mxu0 0.0
    %1039 = vmatpush1.msra.mxu0 0.0
    %1040 = vmatprep.subr.mxu0 0.0
    %1041 = vmatpush1.msra.mxu0 0.0
    %1042 = vmatprep.subr.mxu0 0.0
    %1043 = vmatpush1.msra.mxu0 0.0
    %1044 = vmatprep.subr.mxu0 0.0
    %1045 = vmatpush1.msra.mxu0 0.0
    %1046 = vmatprep.subr.mxu0 0.0
    %1047 = vmatpush1.msra.mxu0 0.0
    %1048 = vmatprep.subr.mxu0 0.0
    %1049 = vmatpush1.msra.mxu0 0.0
    %1050 = vmatprep.subr.mxu0 0.0
    %1051 = vmatpush1.msra.mxu0 0.0
    %1052 = vmatprep.subr.mxu0 0.0
    %1053 = vmatpush1.msra.mxu0 0.0
    %1054 = vmatprep.subr.mxu0 0.0
    %1055 = vmatpush1.msra.mxu0 0.0
    %1056 = vmatprep.subr.mxu0 0.0
    %1057 = vmatpush1.msra.mxu0 0.0
    %1058 = vmatprep.subr.mxu0 0.0
    %1059 = vmatpush1.msra.mxu0 0.0
    %1060 = vmatprep.subr.mxu0 0.0
    %1061 = vmatpush1.msra.mxu0 0.0
    %1062 = vmatprep.subr.mxu0 0.0
    %1063 = vmatpush1.msra.mxu0 0.0
    %1064 = vmatprep.subr.mxu0 0.0
    %1065 = vmatpush1.msra.mxu0 0.0
    %1066 = vmatprep.subr.mxu0 0.0
    %1067 = vmatpush1.msra.mxu0 0.0
    %1068 = vmatprep.subr.mxu0 0.0
    %1069 = vmatpush1.msra.mxu0 0.0
    %1070 = vmatprep.subr.mxu0 0.0
    %1071 = vmatpush1.msra.mxu0 0.0
    %1072 = vmatprep.subr.mxu0 0.0
    %1073 = vmatpush1.msra.mxu0 0.0
    %1074 = vmatprep.subr.mxu0 0.0
    %1075 = vmatpush1.msra.mxu0 0.0
    %1076 = vmatprep.subr.mxu0 0.0
    %1077 = vmatpush1.msra.mxu0 0.0
    %1078 = vmatprep.subr.mxu0 0.0
    %1079 = vmatpush1.msra.mxu0 0.0
    %1080 = vmatprep.subr.mxu0 0.0
    %1081 = vmatpush1.msra.mxu0 0.0
    %1082 = vmatprep.subr.mxu0 0.0
    %1083 = vmatpush1.msra.mxu0 0.0
    %1084 = vmatprep.subr.mxu0 0.0
    %1085 = vmatpush1.msra.mxu0 0.0
    %1086 = vmatprep.subr.mxu0 0.0
    %1087 = vmatpush1.msra.mxu0 0.0
    %1088 = vmatprep.mubr.f32.mxu0 0.0
    %1089 = vmatmul.mubr.f32.gmra.mrb[0].mxu0 %v1022
    %v1090 = vpop.f32.mrb[0].mxu0
    %v1091 = vadd.f32 0.0, %v1090
    %v1092 = vpop.f32.mrb[0].mxu0
    %1093 = vdwg.mxu0
    %1094 = vrot.lane.b32.xlu0 %v164, 48
    %v1095 = vpop.permute.xlu0 %1094
    %v1098 = vsel %vm172, %v1017, 0
    %1100 = vmatprep.subr.mxu0 0.0
    %1101 = vmatpush1.msra.mxu0 %v1095
    %1102 = vmatprep.subr.mxu0 0.0
    %1103 = vmatpush1.msra.mxu0 0.0
    %1104 = vmatprep.subr.mxu0 0.0
    %1105 = vmatpush1.msra.mxu0 0.0
    %1106 = vmatprep.subr.mxu0 0.0
    %1107 = vmatpush1.msra.mxu0 0.0
    %1108 = vmatprep.subr.mxu0 0.0
    %1109 = vmatpush1.msra.mxu0 0.0
    %1110 = vmatprep.subr.mxu0 0.0
    %1111 = vmatpush1.msra.mxu0 0.0
    %1112 = vmatprep.subr.mxu0 0.0
    %1113 = vmatpush1.msra.mxu0 0.0
    %1114 = vmatprep.subr.mxu0 0.0
    %1115 = vmatpush1.msra.mxu0 0.0
    %1116 = vmatprep.subr.mxu0 0.0
    %1117 = vmatpush1.msra.mxu0 0.0
    %1118 = vmatprep.subr.mxu0 0.0
    %1119 = vmatpush1.msra.mxu0 0.0
    %1120 = vmatprep.subr.mxu0 0.0
    %1121 = vmatpush1.msra.mxu0 0.0
    %1122 = vmatprep.subr.mxu0 0.0
    %1123 = vmatpush1.msra.mxu0 0.0
    %1124 = vmatprep.subr.mxu0 0.0
    %1125 = vmatpush1.msra.mxu0 0.0
    %1126 = vmatprep.subr.mxu0 0.0
    %1127 = vmatpush1.msra.mxu0 0.0
    %1128 = vmatprep.subr.mxu0 0.0
    %1129 = vmatpush1.msra.mxu0 0.0
    %1130 = vmatprep.subr.mxu0 0.0
    %1131 = vmatpush1.msra.mxu0 0.0
    %1132 = vmatprep.subr.mxu0 0.0
    %1133 = vmatpush1.msra.mxu0 0.0
    %1134 = vmatprep.subr.mxu0 0.0
    %1135 = vmatpush1.msra.mxu0 0.0
    %1136 = vmatprep.subr.mxu0 0.0
    %1137 = vmatpush1.msra.mxu0 0.0
    %1138 = vmatprep.subr.mxu0 0.0
    %1139 = vmatpush1.msra.mxu0 0.0
    %1140 = vmatprep.subr.mxu0 0.0
    %1141 = vmatpush1.msra.mxu0 0.0
    %1142 = vmatprep.subr.mxu0 0.0
    %1143 = vmatpush1.msra.mxu0 0.0
    %1144 = vmatprep.subr.mxu0 0.0
    %1145 = vmatpush1.msra.mxu0 0.0
    %1146 = vmatprep.subr.mxu0 0.0
    %1147 = vmatpush1.msra.mxu0 0.0
    %1148 = vmatprep.subr.mxu0 0.0
    %1149 = vmatpush1.msra.mxu0 0.0
    %1150 = vmatprep.subr.mxu0 0.0
    %1151 = vmatpush1.msra.mxu0 0.0
    %1152 = vmatprep.subr.mxu0 0.0
    %1153 = vmatpush1.msra.mxu0 0.0
    %1154 = vmatprep.subr.mxu0 0.0
    %1155 = vmatpush1.msra.mxu0 0.0
    %1156 = vmatprep.subr.mxu0 0.0
    %1157 = vmatpush1.msra.mxu0 0.0
    %1158 = vmatprep.subr.mxu0 0.0
    %1159 = vmatpush1.msra.mxu0 0.0
    %1160 = vmatprep.subr.mxu0 0.0
    %1161 = vmatpush1.msra.mxu0 0.0
    %1162 = vmatprep.subr.mxu0 0.0
    %1163 = vmatpush1.msra.mxu0 0.0
    %1164 = vmatprep.mubr.f32.mxu0 0.0
    %1165 = vmatmul.mubr.f32.gmra.mrb[0].mxu0 %v1098
    %v1166 = vpop.f32.mrb[0].mxu0
    %v1167 = vadd.f32 0.0, %v1166
    %v1168 = vpop.f32.mrb[0].mxu0
    %1169 = vdwg.mxu0
    %1170 = vrot.lane.b32.xlu0 %v159, 104
    %v1171 = vpop.permute.xlu0 %1170
    %1172 = vrot.lane.b32.xlu0 %v159, 72
    %v1173 = vpop.permute.xlu0 %1172
    %v1174 = vsel %vm172, %v1171, 0
    %v1176 = vsel %vm172, %v1173, 0
    %1178 = vmatprep.subr.mxu0 0.0
    %1179 = vmatpush1.xpose.msra.mxu0 %v1176
    %1180 = vmatprep.subr.mxu0 0.0
    %1181 = vmatpush1.xpose.msra.mxu0 0.0
    %1182 = vmatprep.subr.mxu0 0.0
    %1183 = vmatpush1.xpose.msra.mxu0 0.0
    %1184 = vmatprep.subr.mxu0 0.0
    %1185 = vmatpush1.xpose.msra.mxu0 0.0
    %1186 = vmatprep.subr.mxu0 0.0
    %1187 = vmatpush1.xpose.msra.mxu0 0.0
    %1188 = vmatprep.subr.mxu0 0.0
    %1189 = vmatpush1.xpose.msra.mxu0 0.0
    %1190 = vmatprep.subr.mxu0 0.0
    %1191 = vmatpush1.xpose.msra.mxu0 0.0
    %1192 = vmatprep.subr.mxu0 0.0
    %1193 = vmatpush1.xpose.msra.mxu0 0.0
    %1194 = vmatprep.subr.mxu0 0.0
    %1195 = vmatpush1.xpose.msra.mxu0 0.0
    %1196 = vmatprep.subr.mxu0 0.0
    %1197 = vmatpush1.xpose.msra.mxu0 0.0
    %1198 = vmatprep.subr.mxu0 0.0
    %1199 = vmatpush1.xpose.msra.mxu0 0.0
    %1200 = vmatprep.subr.mxu0 0.0
    %1201 = vmatpush1.xpose.msra.mxu0 0.0
    %1202 = vmatprep.subr.mxu0 0.0
    %1203 = vmatpush1.xpose.msra.mxu0 0.0
    %1204 = vmatprep.subr.mxu0 0.0
    %1205 = vmatpush1.xpose.msra.mxu0 0.0
    %1206 = vmatprep.subr.mxu0 0.0
    %1207 = vmatpush1.xpose.msra.mxu0 0.0
    %1208 = vmatprep.subr.mxu0 0.0
    %1209 = vmatpush1.xpose.msra.mxu0 0.0
    %1210 = vmatprep.subr.mxu0 0.0
    %1211 = vmatpush1.xpose.msra.mxu0 0.0
    %1212 = vmatprep.subr.mxu0 0.0
    %1213 = vmatpush1.xpose.msra.mxu0 0.0
    %1214 = vmatprep.subr.mxu0 0.0
    %1215 = vmatpush1.xpose.msra.mxu0 0.0
    %1216 = vmatprep.subr.mxu0 0.0
    %1217 = vmatpush1.xpose.msra.mxu0 0.0
    %1218 = vmatprep.subr.mxu0 0.0
    %1219 = vmatpush1.xpose.msra.mxu0 0.0
    %1220 = vmatprep.subr.mxu0 0.0
    %1221 = vmatpush1.xpose.msra.mxu0 0.0
    %1222 = vmatprep.subr.mxu0 0.0
    %1223 = vmatpush1.xpose.msra.mxu0 0.0
    %1224 = vmatprep.subr.mxu0 0.0
    %1225 = vmatpush1.xpose.msra.mxu0 0.0
    %1226 = vmatprep.subr.mxu0 0.0
    %1227 = vmatpush1.xpose.msra.mxu0 0.0
    %1228 = vmatprep.subr.mxu0 0.0
    %1229 = vmatpush1.xpose.msra.mxu0 0.0
    %1230 = vmatprep.subr.mxu0 0.0
    %1231 = vmatpush1.xpose.msra.mxu0 0.0
    %1232 = vmatprep.subr.mxu0 0.0
    %1233 = vmatpush1.xpose.msra.mxu0 0.0
    %1234 = vmatprep.subr.mxu0 0.0
    %1235 = vmatpush1.xpose.msra.mxu0 0.0
    %1236 = vmatprep.subr.mxu0 0.0
    %1237 = vmatpush1.xpose.msra.mxu0 0.0
    %1238 = vmatprep.subr.mxu0 0.0
    %1239 = vmatpush1.xpose.msra.mxu0 0.0
    %1240 = vmatprep.subr.mxu0 0.0
    %1241 = vmatpush1.xpose.msra.mxu0 0.0
    %1242 = vmatprep.mubr.f32.mxu0 0.0
    %1243 = vmatmul.mubr.f32.gmra.mrb[0].mxu0 %v1174
    %v1244 = vpop.f32.mrb[0].mxu0
    %v1245 = vadd.f32 0.0, %v1244
    %v1246 = vpop.f32.mrb[0].mxu0
    %1247 = vdwg.mxu0
    %1248 = vrot.lane.b32.xlu0 %v164, 104
    %v1249 = vpop.permute.xlu0 %1248
    %1250 = vrot.lane.b32.xlu0 %v164, 72
    %v1251 = vpop.permute.xlu0 %1250
    %v1252 = vsel %vm172, %v1249, 0
    %v1254 = vsel %vm172, %v1251, 0
    %1256 = vmatprep.subr.mxu0 0.0
    %1257 = vmatpush1.xpose.msra.mxu0 %v1254
    %1258 = vmatprep.subr.mxu0 0.0
    %1259 = vmatpush1.xpose.msra.mxu0 0.0
    %1260 = vmatprep.subr.mxu0 0.0
    %1261 = vmatpush1.xpose.msra.mxu0 0.0
    %1262 = vmatprep.subr.mxu0 0.0
    %1263 = vmatpush1.xpose.msra.mxu0 0.0
    %1264 = vmatprep.subr.mxu0 0.0
    %1265 = vmatpush1.xpose.msra.mxu0 0.0
    %1266 = vmatprep.subr.mxu0 0.0
    %1267 = vmatpush1.xpose.msra.mxu0 0.0
    %1268 = vmatprep.subr.mxu0 0.0
    %1269 = vmatpush1.xpose.msra.mxu0 0.0
    %1270 = vmatprep.subr.mxu0 0.0
    %1271 = vmatpush1.xpose.msra.mxu0 0.0
    %1272 = vmatprep.subr.mxu0 0.0
    %1273 = vmatpush1.xpose.msra.mxu0 0.0
    %1274 = vmatprep.subr.mxu0 0.0
    %1275 = vmatpush1.xpose.msra.mxu0 0.0
    %1276 = vmatprep.subr.mxu0 0.0
    %1277 = vmatpush1.xpose.msra.mxu0 0.0
    %1278 = vmatprep.subr.mxu0 0.0
    %1279 = vmatpush1.xpose.msra.mxu0 0.0
    %1280 = vmatprep.subr.mxu0 0.0
    %1281 = vmatpush1.xpose.msra.mxu0 0.0
    %1282 = vmatprep.subr.mxu0 0.0
    %1283 = vmatpush1.xpose.msra.mxu0 0.0
    %1284 = vmatprep.subr.mxu0 0.0
    %1285 = vmatpush1.xpose.msra.mxu0 0.0
    %1286 = vmatprep.subr.mxu0 0.0
    %1287 = vmatpush1.xpose.msra.mxu0 0.0
    %1288 = vmatprep.subr.mxu0 0.0
    %1289 = vmatpush1.xpose.msra.mxu0 0.0
    %1290 = vmatprep.subr.mxu0 0.0
    %1291 = vmatpush1.xpose.msra.mxu0 0.0
    %1292 = vmatprep.subr.mxu0 0.0
    %1293 = vmatpush1.xpose.msra.mxu0 0.0
    %1294 = vmatprep.subr.mxu0 0.0
    %1295 = vmatpush1.xpose.msra.mxu0 0.0
    %1296 = vmatprep.subr.mxu0 0.0
    %1297 = vmatpush1.xpose.msra.mxu0 0.0
    %1298 = vmatprep.subr.mxu0 0.0
    %1299 = vmatpush1.xpose.msra.mxu0 0.0
    %1300 = vmatprep.subr.mxu0 0.0
    %1301 = vmatpush1.xpose.msra.mxu0 0.0
    %1302 = vmatprep.subr.mxu0 0.0
    %1303 = vmatpush1.xpose.msra.mxu0 0.0
    %1304 = vmatprep.subr.mxu0 0.0
    %1305 = vmatpush1.xpose.msra.mxu0 0.0
    %1306 = vmatprep.subr.mxu0 0.0
    %1307 = vmatpush1.xpose.msra.mxu0 0.0
    %1308 = vmatprep.subr.mxu0 0.0
    %1309 = vmatpush1.xpose.msra.mxu0 0.0
    %1310 = vmatprep.subr.mxu0 0.0
    %1311 = vmatpush1.xpose.msra.mxu0 0.0
    %1312 = vmatprep.subr.mxu0 0.0
    %1313 = vmatpush1.xpose.msra.mxu0 0.0
    %1314 = vmatprep.subr.mxu0 0.0
    %1315 = vmatpush1.xpose.msra.mxu0 0.0
    %1316 = vmatprep.subr.mxu0 0.0
    %1317 = vmatpush1.xpose.msra.mxu0 0.0
    %1318 = vmatprep.subr.mxu0 0.0
    %1319 = vmatpush1.xpose.msra.mxu0 0.0
    %1320 = vmatprep.mubr.f32.mxu0 0.0
    %1321 = vmatmul.mubr.f32.gmra.mrb[0].mxu0 %v1252
    %v1322 = vpop.f32.mrb[0].mxu0
    %v1323 = vadd.f32 0.0, %v1322
    %v1324 = vpop.f32.mrb[0].mxu0
    %1325 = vdwg.mxu0
    %v1326 = vmul.f32 %v1245, 0.35355338
    %v1327 = vmul.f32 %v1323, 0.35355338
    %v1328 = vadd.f32 %v1326, %v167
    %v1329 = vadd.f32 %v1327, %v168
    %v1330 = vsel %vm172, %v1328, -inf
    %1331 = vmax.xlane.f32.xlu0 %v1330
    %v1332 = vpop.xlane.xlu0 %1331
    %v1333 = vsel %vm172, %v1329, -inf
    %1334 = vmax.xlane.f32.xlu0 %v1333
    %v1335 = vpop.xlane.xlu0 %1334
    %v1336 = vsub.f32 %v1328, %v1332
    %v1337 = vsub.f32 %v1329, %v1335
    %v1338 = vmul.f32 %v1336, 1.442695
    %v1339 = vpow.pop %v1338
    %v1340 = vmul.f32 %v1337, 1.442695
    %v1341 = vpow.pop %v1340
    %v1342 = vsel %vm172, %v1339, 0.0
    %1343 = vadd.xlane.f32.xlu0 %v1342
    %v1344 = vpop.xlane.xlu0 %1343
    %v1345 = vsel %vm172, %v1341, 0.0
    %1346 = vadd.xlane.f32.xlu0 %v1345
    %v1347 = vpop.xlane.xlu0 %1346
    %v1348 = vrcp.pop %v1344
    %v1349 = vrcp.pop %v1347
    %v1350 = vmul.f32 %v1339, %v1348
    %v1351 = vmul.f32 %v1341, %v1349
    %1352 = vrot.lane.b32.xlu0 %v159, 40
    %v1353 = vpop.permute.xlu0 %1352
    %v1356 = vsel %vm172, %v1350, 0
    %1358 = vmatprep.subr.mxu0 0.0
    %1359 = vmatpush1.msra.mxu0 %v1353
    %1360 = vmatprep.subr.mxu0 0.0
    %1361 = vmatpush1.msra.mxu0 0.0
    %1362 = vmatprep.subr.mxu0 0.0
    %1363 = vmatpush1.msra.mxu0 0.0
    %1364 = vmatprep.subr.mxu0 0.0
    %1365 = vmatpush1.msra.mxu0 0.0
    %1366 = vmatprep.subr.mxu0 0.0
    %1367 = vmatpush1.msra.mxu0 0.0
    %1368 = vmatprep.subr.mxu0 0.0
    %1369 = vmatpush1.msra.mxu0 0.0
    %1370 = vmatprep.subr.mxu0 0.0
    %1371 = vmatpush1.msra.mxu0 0.0
    %1372 = vmatprep.subr.mxu0 0.0
    %1373 = vmatpush1.msra.mxu0 0.0
    %1374 = vmatprep.subr.mxu0 0.0
    %1375 = vmatpush1.msra.mxu0 0.0
    %1376 = vmatprep.subr.mxu0 0.0
    %1377 = vmatpush1.msra.mxu0 0.0
    %1378 = vmatprep.subr.mxu0 0.0
    %1379 = vmatpush1.msra.mxu0 0.0
    %1380 = vmatprep.subr.mxu0 0.0
    %1381 = vmatpush1.msra.mxu0 0.0
    %1382 = vmatprep.subr.mxu0 0.0
    %1383 = vmatpush1.msra.mxu0 0.0
    %1384 = vmatprep.subr.mxu0 0.0
    %1385 = vmatpush1.msra.mxu0 0.0
    %1386 = vmatprep.subr.mxu0 0.0
    %1387 = vmatpush1.msra.mxu0 0.0
    %1388 = vmatprep.subr.mxu0 0.0
    %1389 = vmatpush1.msra.mxu0 0.0
    %1390 = vmatprep.subr.mxu0 0.0
    %1391 = vmatpush1.msra.mxu0 0.0
    %1392 = vmatprep.subr.mxu0 0.0
    %1393 = vmatpush1.msra.mxu0 0.0
    %1394 = vmatprep.subr.mxu0 0.0
    %1395 = vmatpush1.msra.mxu0 0.0
    %1396 = vmatprep.subr.mxu0 0.0
    %1397 = vmatpush1.msra.mxu0 0.0
    %1398 = vmatprep.subr.mxu0 0.0
    %1399 = vmatpush1.msra.mxu0 0.0
    %1400 = vmatprep.subr.mxu0 0.0
    %1401 = vmatpush1.msra.mxu0 0.0
    %1402 = vmatprep.subr.mxu0 0.0
    %1403 = vmatpush1.msra.mxu0 0.0
    %1404 = vmatprep.subr.mxu0 0.0
    %1405 = vmatpush1.msra.mxu0 0.0
    %1406 = vmatprep.subr.mxu0 0.0
    %1407 = vmatpush1.msra.mxu0 0.0
    %1408 = vmatprep.subr.mxu0 0.0
    %1409 = vmatpush1.msra.mxu0 0.0
    %1410 = vmatprep.subr.mxu0 0.0
    %1411 = vmatpush1.msra.mxu0 0.0
    %1412 = vmatprep.subr.mxu0 0.0
    %1413 = vmatpush1.msra.mxu0 0.0
    %1414 = vmatprep.subr.mxu0 0.0
    %1415 = vmatpush1.msra.mxu0 0.0
    %1416 = vmatprep.subr.mxu0 0.0
    %1417 = vmatpush1.msra.mxu0 0.0
    %1418 = vmatprep.subr.mxu0 0.0
    %1419 = vmatpush1.msra.mxu0 0.0
    %1420 = vmatprep.subr.mxu0 0.0
    %1421 = vmatpush1.msra.mxu0 0.0
    %1422 = vmatprep.mubr.f32.mxu0 0.0
    %1423 = vmatmul.mubr.f32.gmra.mrb[0].mxu0 %v1356
    %v1424 = vpop.f32.mrb[0].mxu0
    %v1425 = vadd.f32 0.0, %v1424
    %v1426 = vpop.f32.mrb[0].mxu0
    %1427 = vdwg.mxu0
    %1428 = vrot.lane.b32.xlu0 %v164, 40
    %v1429 = vpop.permute.xlu0 %1428
    %v1432 = vsel %vm172, %v1351, 0
    %1434 = vmatprep.subr.mxu0 0.0
    %1435 = vmatpush1.msra.mxu0 %v1429
    %1436 = vmatprep.subr.mxu0 0.0
    %1437 = vmatpush1.msra.mxu0 0.0
    %1438 = vmatprep.subr.mxu0 0.0
    %1439 = vmatpush1.msra.mxu0 0.0
    %1440 = vmatprep.subr.mxu0 0.0
    %1441 = vmatpush1.msra.mxu0 0.0
    %1442 = vmatprep.subr.mxu0 0.0
    %1443 = vmatpush1.msra.mxu0 0.0
    %1444 = vmatprep.subr.mxu0 0.0
    %1445 = vmatpush1.msra.mxu0 0.0
    %1446 = vmatprep.subr.mxu0 0.0
    %1447 = vmatpush1.msra.mxu0 0.0
    %1448 = vmatprep.subr.mxu0 0.0
    %1449 = vmatpush1.msra.mxu0 0.0
    %1450 = vmatprep.subr.mxu0 0.0
    %1451 = vmatpush1.msra.mxu0 0.0
    %1452 = vmatprep.subr.mxu0 0.0
    %1453 = vmatpush1.msra.mxu0 0.0
    %1454 = vmatprep.subr.mxu0 0.0
    %1455 = vmatpush1.msra.mxu0 0.0
    %1456 = vmatprep.subr.mxu0 0.0
    %1457 = vmatpush1.msra.mxu0 0.0
    %1458 = vmatprep.subr.mxu0 0.0
    %1459 = vmatpush1.msra.mxu0 0.0
    %1460 = vmatprep.subr.mxu0 0.0
    %1461 = vmatpush1.msra.mxu0 0.0
    %1462 = vmatprep.subr.mxu0 0.0
    %1463 = vmatpush1.msra.mxu0 0.0
    %1464 = vmatprep.subr.mxu0 0.0
    %1465 = vmatpush1.msra.mxu0 0.0
    %1466 = vmatprep.subr.mxu0 0.0
    %1467 = vmatpush1.msra.mxu0 0.0
    %1468 = vmatprep.subr.mxu0 0.0
    %1469 = vmatpush1.msra.mxu0 0.0
    %1470 = vmatprep.subr.mxu0 0.0
    %1471 = vmatpush1.msra.mxu0 0.0
    %1472 = vmatprep.subr.mxu0 0.0
    %1473 = vmatpush1.msra.mxu0 0.0
    %1474 = vmatprep.subr.mxu0 0.0
    %1475 = vmatpush1.msra.mxu0 0.0
    %1476 = vmatprep.subr.mxu0 0.0
    %1477 = vmatpush1.msra.mxu0 0.0
    %1478 = vmatprep.subr.mxu0 0.0
    %1479 = vmatpush1.msra.mxu0 0.0
    %1480 = vmatprep.subr.mxu0 0.0
    %1481 = vmatpush1.msra.mxu0 0.0
    %1482 = vmatprep.subr.mxu0 0.0
    %1483 = vmatpush1.msra.mxu0 0.0
    %1484 = vmatprep.subr.mxu0 0.0
    %1485 = vmatpush1.msra.mxu0 0.0
    %1486 = vmatprep.subr.mxu0 0.0
    %1487 = vmatpush1.msra.mxu0 0.0
    %1488 = vmatprep.subr.mxu0 0.0
    %1489 = vmatpush1.msra.mxu0 0.0
    %1490 = vmatprep.subr.mxu0 0.0
    %1491 = vmatpush1.msra.mxu0 0.0
    %1492 = vmatprep.subr.mxu0 0.0
    %1493 = vmatpush1.msra.mxu0 0.0
    %1494 = vmatprep.subr.mxu0 0.0
    %1495 = vmatpush1.msra.mxu0 0.0
    %1496 = vmatprep.subr.mxu0 0.0
    %1497 = vmatpush1.msra.mxu0 0.0
    %1498 = vmatprep.mubr.f32.mxu0 0.0
    %1499 = vmatmul.mubr.f32.gmra.mrb[0].mxu0 %v1432
    %v1500 = vpop.f32.mrb[0].mxu0
    %v1501 = vadd.f32 0.0, %v1500
    %v1502 = vpop.f32.mrb[0].mxu0
    %1503 = vdwg.mxu0
    %1506 = vrot.lane.b32.xlu0 %v757, 8
    %v1507 = vpop.permute.xlu0 %1506
    %1508 = vrot.lane.b32.xlu0 %v833, 8
    %v1509 = vpop.permute.xlu0 %1508
    %1514 = vrot.lane.b32.xlu0 %v1091, 16
    %v1515 = vpop.permute.xlu0 %1514
    %1516 = vrot.lane.b32.xlu0 %v1167, 16
    %v1517 = vpop.permute.xlu0 %1516
    %1522 = vrot.lane.b32.xlu0 %v1425, 24
    %v1523 = vpop.permute.xlu0 %1522
    %1524 = vrot.lane.b32.xlu0 %v1501, 24
    %v1525 = vpop.permute.xlu0 %1524
    %v1528 = vsel %vm172, %v423, %v1507
    %v1529 = vsel %vm172, %v499, %v1509
    %vm1530 = vcmask 130048
    %v1531 = vsel %vm1530, %v1528, %v1515
    %v1532 = vsel %vm1530, %v1529, %v1517
    %vm1533 = vcmask 195584
    %v1534 = vsel %vm1533, %v1531, %v1523
    %v1535 = vsel %vm1533, %v1532, %v1525
    %v1536 = vld [vmem:[%s4] sm:$0xff]
    %v1537 = vld [vmem:[%s4 + $0x18] sm:$0xff]
    %v1538 = vld [vmem:[%s4 + $0x30] sm:$0xff]
    %v1539 = vld [vmem:[%s4 + $0x48] sm:$0xff]
    %v1540 = vld [vmem:[%s6] sm:$0x1]
    %v1542 = vlaneseq
    %v1543 = vshrl.u32 %v1542, 7
    %v1544 = vsub.s32 0, %v1543
    %v1545 = vrot.slane %v1540, %v1544
    %1550 = vrot.lane.b32.xlu0 %v1536, 32
    %v1551 = vpop.permute.xlu0 %1550
    %1552 = vrot.lane.b32.xlu0 %v1537, 32
    %v1553 = vpop.permute.xlu0 %1552
    %1554 = vrot.lane.b32.xlu0 %v1538, 32
    %v1555 = vpop.permute.xlu0 %1554
    %1556 = vrot.lane.b32.xlu0 %v1539, 32
    %v1557 = vpop.permute.xlu0 %1556
    %1562 = vrot.lane.b32.xlu0 %v1545, 32
    %v1563 = vpop.permute.xlu0 %1562
    %v1566 = vsel %vm85, %v1534, 0
    %v1569 = vsel %vm85, %v1535, 0
    %1571 = vmatprep.subr.mxu0 0.0
    %1572 = vmatpush1.msra.mxu0 %v1551
    %1573 = vmatprep.subr.mxu0 0.0
    %1574 = vmatpush1.msra.mxu0 %v1553
    %1575 = vmatprep.subr.mxu0 0.0
    %1576 = vmatpush1.msra.mxu0 %v1555
    %1577 = vmatprep.subr.mxu0 0.0
    %1578 = vmatpush1.msra.mxu0 %v1557
    %1579 = vmatprep.subr.mxu0 0.0
    %1580 = vmatpush1.msra.mxu0 0.0
    %1581 = vmatprep.subr.mxu0 0.0
    %1582 = vmatpush1.msra.mxu0 0.0
    %1583 = vmatprep.subr.mxu0 0.0
    %1584 = vmatpush1.msra.mxu0 0.0
    %1585 = vmatprep.subr.mxu0 0.0
    %1586 = vmatpush1.msra.mxu0 0.0
    %1587 = vmatprep.subr.mxu0 0.0
    %1588 = vmatpush1.msra.mxu0 0.0
    %1589 = vmatprep.subr.mxu0 0.0
    %1590 = vmatpush1.msra.mxu0 0.0
    %1591 = vmatprep.subr.mxu0 0.0
    %1592 = vmatpush1.msra.mxu0 0.0
    %1593 = vmatprep.subr.mxu0 0.0
    %1594 = vmatpush1.msra.mxu0 0.0
    %1595 = vmatprep.subr.mxu0 0.0
    %1596 = vmatpush1.msra.mxu0 0.0
    %1597 = vmatprep.subr.mxu0 0.0
    %1598 = vmatpush1.msra.mxu0 0.0
    %1599 = vmatprep.subr.mxu0 0.0
    %1600 = vmatpush1.msra.mxu0 0.0
    %1601 = vmatprep.subr.mxu0 0.0
    %1602 = vmatpush1.msra.mxu0 0.0
    %1603 = vmatprep.subr.mxu0 0.0
    %1604 = vmatpush1.msra.mxu0 0.0
    %1605 = vmatprep.subr.mxu0 0.0
    %1606 = vmatpush1.msra.mxu0 0.0
    %1607 = vmatprep.subr.mxu0 0.0
    %1608 = vmatpush1.msra.mxu0 0.0
    %1609 = vmatprep.subr.mxu0 0.0
    %1610 = vmatpush1.msra.mxu0 0.0
    %1611 = vmatprep.subr.mxu0 0.0
    %1612 = vmatpush1.msra.mxu0 0.0
    %1613 = vmatprep.subr.mxu0 0.0
    %1614 = vmatpush1.msra.mxu0 0.0
    %1615 = vmatprep.subr.mxu0 0.0
    %1616 = vmatpush1.msra.mxu0 0.0
    %1617 = vmatprep.subr.mxu0 0.0
    %1618 = vmatpush1.msra.mxu0 0.0
    %1619 = vmatprep.subr.mxu0 0.0
    %1620 = vmatpush1.msra.mxu0 0.0
    %1621 = vmatprep.subr.mxu0 0.0
    %1622 = vmatpush1.msra.mxu0 0.0
    %1623 = vmatprep.subr.mxu0 0.0
    %1624 = vmatpush1.msra.mxu0 0.0
    %1625 = vmatprep.subr.mxu0 0.0
    %1626 = vmatpush1.msra.mxu0 0.0
    %1627 = vmatprep.subr.mxu0 0.0
    %1628 = vmatpush1.msra.mxu0 0.0
    %1629 = vmatprep.subr.mxu0 0.0
    %1630 = vmatpush1.msra.mxu0 0.0
    %1631 = vmatprep.subr.mxu0 0.0
    %1632 = vmatpush1.msra.mxu0 0.0
    %1633 = vmatprep.subr.mxu0 0.0
    %1634 = vmatpush1.msra.mxu0 0.0
    %1635 = vmatprep.mubr.f32.mxu0 0.0
    %1636 = vmatmul.mubr.f32.gmra.mrb[0].mxu0 %v1566
    %v1637 = vpop.f32.mrb[0].mxu0
    %v1638 = vadd.f32 %v1563, %v1637
    %v1639 = vpop.f32.mrb[0].mxu0
    %1640 = vmatprep.mubr.f32.mxu0 0.0
    %1641 = vmatmul.mubr.f32.gmra.mrb[0].mxu0 %v1569
    %v1642 = vpop.f32.mrb[0].mxu0
    %v1643 = vadd.f32 %v1563, %v1642
    %v1644 = vpop.f32.mrb[0].mxu0
    %1645 = vdwg.mxu0
    %v1646 = vadd.f32 %v68, %v1638
    %v1647 = vadd.f32 %v69, %v1643
    %v1648 = vld [vmem:[%s6 + $0x1] sm:$0x1]
    %v1649 = vsel %vm85, %v1646, 0.0
    %1650 = vadd.xlane.f32.xlu0 %v1649
    %v1651 = vpop.xlane.xlu0 %1650
    %v1652 = vsel %vm85, %v1647, 0.0
    %1653 = vadd.xlane.f32.xlu0 %v1652
    %v1654 = vpop.xlane.xlu0 %1653
    %v1655 = vrcp.pop 32.0
    %v1656 = vmul.f32 %v1651, %v1655
    %v1657 = vmul.f32 %v1654, %v1655
    %v1658 = vsub.f32 %v1646, %v1656
    %v1659 = vsub.f32 %v1647, %v1657
    %v1660 = vmul.f32 %v1658, %v1658
    %v1661 = vmul.f32 %v1659, %v1659
    %v1662 = vsel %vm85, %v1660, 0.0
    %1663 = vadd.xlane.f32.xlu0 %v1662
    %v1664 = vpop.xlane.xlu0 %1663
    %v1665 = vsel %vm85, %v1661, 0.0
    %1666 = vadd.xlane.f32.xlu0 %v1665
    %v1667 = vpop.xlane.xlu0 %1666
    %v1668 = vmul.f32 %v1664, %v1655
    %v1669 = vmul.f32 %v1667, %v1655
    %v1670 = vadd.f32 %v1668, 1e-05
    %v1671 = vadd.f32 %v1669, 1e-05
    %v1672 = vrsqrt.pop %v1670
    %v1673 = vrsqrt.pop %v1671
    %v1674 = vmul.f32 %v1658, %v1672
    %v1675 = vmul.f32 %v1659, %v1673
    %v1677 = vlaneseq
    %v1678 = vshrl.u32 %v1677, 7
    %v1679 = vsub.s32 0, %v1678
    %v1680 = vrot.slane %v1648, %v1679
    %v1682 = vmul.f32 %v1674, %v1680
    %v1683 = vmul.f32 %v1675, %v1680
    %1684 = vrot.lane.b32.xlu0 %v1680, 96
    %v1685 = vpop.permute.xlu0 %1684
    %v1687 = vadd.f32 %v1682, %v1685
    %v1688 = vadd.f32 %v1683, %v1685
    %v1689 = vld [vmem:[%s4 + $0x8] sm:$0xff]
    %v1690 = vld [vmem:[%s4 + $0x20] sm:$0xff]
    %v1691 = vld [vmem:[%s4 + $0x38] sm:$0xff]
    %v1692 = vld [vmem:[%s4 + $0x50] sm:$0xff]
    %1693 = vrot.lane.b32.xlu0 %v1680, 64
    %v1694 = vpop.permute.xlu0 %1693
    %v1697 = vsel %vm85, %v1687, 0
    %v1700 = vsel %vm85, %v1688, 0
    %1702 = vmatprep.subr.mxu0 0.0
    %1703 = vmatpush1.msra.mxu0 %v1689
    %1704 = vmatprep.subr.mxu0 0.0
    %1705 = vmatpush1.msra.mxu0 %v1690
    %1706 = vmatprep.subr.mxu0 0.0
    %1707 = vmatpush1.msra.mxu0 %v1691
    %1708 = vmatprep.subr.mxu0 0.0
    %1709 = vmatpush1.msra.mxu0 %v1692
    %1710 = vmatprep.subr.mxu0 0.0
    %1711 = vmatpush1.msra.mxu0 0.0
    %1712 = vmatprep.subr.mxu0 0.0
    %1713 = vmatpush1.msra.mxu0 0.0
    %1714 = vmatprep.subr.mxu0 0.0
    %1715 = vmatpush1.msra.mxu0 0.0
    %1716 = vmatprep.subr.mxu0 0.0
    %1717 = vmatpush1.msra.mxu0 0.0
    %1718 = vmatprep.subr.mxu0 0.0
    %1719 = vmatpush1.msra.mxu0 0.0
    %1720 = vmatprep.subr.mxu0 0.0
    %1721 = vmatpush1.msra.mxu0 0.0
    %1722 = vmatprep.subr.mxu0 0.0
    %1723 = vmatpush1.msra.mxu0 0.0
    %1724 = vmatprep.subr.mxu0 0.0
    %1725 = vmatpush1.msra.mxu0 0.0
    %1726 = vmatprep.subr.mxu0 0.0
    %1727 = vmatpush1.msra.mxu0 0.0
    %1728 = vmatprep.subr.mxu0 0.0
    %1729 = vmatpush1.msra.mxu0 0.0
    %1730 = vmatprep.subr.mxu0 0.0
    %1731 = vmatpush1.msra.mxu0 0.0
    %1732 = vmatprep.subr.mxu0 0.0
    %1733 = vmatpush1.msra.mxu0 0.0
    %1734 = vmatprep.subr.mxu0 0.0
    %1735 = vmatpush1.msra.mxu0 0.0
    %1736 = vmatprep.subr.mxu0 0.0
    %1737 = vmatpush1.msra.mxu0 0.0
    %1738 = vmatprep.subr.mxu0 0.0
    %1739 = vmatpush1.msra.mxu0 0.0
    %1740 = vmatprep.subr.mxu0 0.0
    %1741 = vmatpush1.msra.mxu0 0.0
    %1742 = vmatprep.subr.mxu0 0.0
    %1743 = vmatpush1.msra.mxu0 0.0
    %1744 = vmatprep.subr.mxu0 0.0
    %1745 = vmatpush1.msra.mxu0 0.0
    %1746 = vmatprep.subr.mxu0 0.0
    %1747 = vmatpush1.msra.mxu0 0.0
    %1748 = vmatprep.subr.mxu0 0.0
    %1749 = vmatpush1.msra.mxu0 0.0
    %1750 = vmatprep.subr.mxu0 0.0
    %1751 = vmatpush1.msra.mxu0 0.0
    %1752 = vmatprep.subr.mxu0 0.0
    %1753 = vmatpush1.msra.mxu0 0.0
    %1754 = vmatprep.subr.mxu0 0.0
    %1755 = vmatpush1.msra.mxu0 0.0
    %1756 = vmatprep.subr.mxu0 0.0
    %1757 = vmatpush1.msra.mxu0 0.0
    %1758 = vmatprep.subr.mxu0 0.0
    %1759 = vmatpush1.msra.mxu0 0.0
    %1760 = vmatprep.subr.mxu0 0.0
    %1761 = vmatpush1.msra.mxu0 0.0
    %1762 = vmatprep.subr.mxu0 0.0
    %1763 = vmatpush1.msra.mxu0 0.0
    %1764 = vmatprep.subr.mxu0 0.0
    %1765 = vmatpush1.msra.mxu0 0.0
    %1766 = vmatprep.mubr.f32.mxu0 0.0
    %1767 = vmatmul.mubr.f32.gmra.mrb[0].mxu0 %v1697
    %v1768 = vpop.f32.mrb[0].mxu0
    %v1769 = vadd.f32 %v1694, %v1768
    %v1770 = vpop.f32.mrb[0].mxu0
    %1771 = vmatprep.mubr.f32.mxu0 0.0
    %1772 = vmatmul.mubr.f32.gmra.mrb[0].mxu0 %v1700
    %v1773 = vpop.f32.mrb[0].mxu0
    %v1774 = vadd.f32 %v1694, %v1773
    %v1775 = vpop.f32.mrb[0].mxu0
    %1776 = vdwg.mxu0
    %v1777 = vld [vmem:[%s6 + $0x1] sm:$0x3]
    %v1779 = vlaneseq
    %v1780 = vshrl.u32 %v1779, 7
    %v1781 = vsub.s32 0, %v1780
    %v1782 = vrot.slane %v1777, %v1781
    %v1783 = vlaneseq
    %v1784 = vshrl.u32 %v1783, 7
    %v1785 = vsub.s32 1, %v1784
    %v1786 = vrot.slane %v1777, %v1785
    %1791 = vrot.lane.b32.xlu0 %v1689, 96
    %v1792 = vpop.permute.xlu0 %1791
    %1793 = vrot.lane.b32.xlu0 %v1690, 96
    %v1794 = vpop.permute.xlu0 %1793
    %1795 = vrot.lane.b32.xlu0 %v1691, 96
    %v1796 = vpop.permute.xlu0 %1795
    %1797 = vrot.lane.b32.xlu0 %v1692, 96
    %v1798 = vpop.permute.xlu0 %1797
    %1803 = vrot.lane.b32.xlu0 %v1782, 32
    %v1804 = vpop.permute.xlu0 %1803
    %1805 = vrot.lane.b32.xlu0 %v1786, 32
    %v1806 = vpop.permute.xlu0 %1805
    %v1807 = vsel %vm85, %v1804, %v1806
    %v1810 = vsel %vm85, %v70, 0
    %v1813 = vsel %vm85, %v71, 0
    %v1816 = vsel %vm85, %v72, 0
    %v1819 = vsel %vm85, %v73, 0
    %1821 = vmatprep.subr.mxu0 0.0
    %1822 = vmatpush1.msra.mxu0 %v1792
    %1823 = vmatprep.subr.mxu0 0.0
    %1824 = vmatpush1.msra.mxu0 %v1794
    %1825 = vmatprep.subr.mxu0 0.0
    %1826 = vmatpush1.msra.mxu0 %v1796
    %1827 = vmatprep.subr.mxu0 0.0
    %1828 = vmatpush1.msra.mxu0 %v1798
    %1829 = vmatprep.subr.mxu0 0.0
    %1830 = vmatpush1.msra.mxu0 0.0
    %1831 = vmatprep.subr.mxu0 0.0
    %1832 = vmatpush1.msra.mxu0 0.0
    %1833 = vmatprep.subr.mxu0 0.0
    %1834 = vmatpush1.msra.mxu0 0.0
    %1835 = vmatprep.subr.mxu0 0.0
    %1836 = vmatpush1.msra.mxu0 0.0
    %1837 = vmatprep.subr.mxu0 0.0
    %1838 = vmatpush1.msra.mxu0 0.0
    %1839 = vmatprep.subr.mxu0 0.0
    %1840 = vmatpush1.msra.mxu0 0.0
    %1841 = vmatprep.subr.mxu0 0.0
    %1842 = vmatpush1.msra.mxu0 0.0
    %1843 = vmatprep.subr.mxu0 0.0
    %1844 = vmatpush1.msra.mxu0 0.0
    %1845 = vmatprep.subr.mxu0 0.0
    %1846 = vmatpush1.msra.mxu0 0.0
    %1847 = vmatprep.subr.mxu0 0.0
    %1848 = vmatpush1.msra.mxu0 0.0
    %1849 = vmatprep.subr.mxu0 0.0
    %1850 = vmatpush1.msra.mxu0 0.0
    %1851 = vmatprep.subr.mxu0 0.0
    %1852 = vmatpush1.msra.mxu0 0.0
    %1853 = vmatprep.subr.mxu0 0.0
    %1854 = vmatpush1.msra.mxu0 0.0
    %1855 = vmatprep.subr.mxu0 0.0
    %1856 = vmatpush1.msra.mxu0 0.0
    %1857 = vmatprep.subr.mxu0 0.0
    %1858 = vmatpush1.msra.mxu0 0.0
    %1859 = vmatprep.subr.mxu0 0.0
    %1860 = vmatpush1.msra.mxu0 0.0
    %1861 = vmatprep.subr.mxu0 0.0
    %1862 = vmatpush1.msra.mxu0 0.0
    %1863 = vmatprep.subr.mxu0 0.0
    %1864 = vmatpush1.msra.mxu0 0.0
    %1865 = vmatprep.subr.mxu0 0.0
    %1866 = vmatpush1.msra.mxu0 0.0
    %1867 = vmatprep.subr.mxu0 0.0
    %1868 = vmatpush1.msra.mxu0 0.0
    %1869 = vmatprep.subr.mxu0 0.0
    %1870 = vmatpush1.msra.mxu0 0.0
    %1871 = vmatprep.subr.mxu0 0.0
    %1872 = vmatpush1.msra.mxu0 0.0
    %1873 = vmatprep.subr.mxu0 0.0
    %1874 = vmatpush1.msra.mxu0 0.0
    %1875 = vmatprep.subr.mxu0 0.0
    %1876 = vmatpush1.msra.mxu0 0.0
    %1877 = vmatprep.subr.mxu0 0.0
    %1878 = vmatpush1.msra.mxu0 0.0
    %1879 = vmatprep.subr.mxu0 0.0
    %1880 = vmatpush1.msra.mxu0 0.0
    %1881 = vmatprep.subr.mxu0 0.0
    %1882 = vmatpush1.msra.mxu0 0.0
    %1883 = vmatprep.subr.mxu0 0.0
    %1884 = vmatpush1.msra.mxu0 0.0
    %1885 = vmatprep.mubr.f32.mxu0 0.0
    %1886 = vmatmul.mubr.f32.gmra.mrb[0].mxu0 %v1810
    %v1887 = vpop.f32.mrb[0].mxu0
    %v1888 = vadd.f32 %v1807, %v1887
    %v1889 = vpop.f32.mrb[0].mxu0
    %1890 = vmatprep.mubr.f32.mxu0 0.0
    %1891 = vmatmul.mubr.f32.gmra.mrb[0].mxu0 %v1813
    %v1892 = vpop.f32.mrb[0].mxu0
    %v1893 = vadd.f32 %v1807, %v1892
    %v1894 = vpop.f32.mrb[0].mxu0
    %1895 = vmatprep.mubr.f32.mxu0 0.0
    %1896 = vmatmul.mubr.f32.gmra.mrb[0].mxu0 %v1816
    %v1897 = vpop.f32.mrb[0].mxu0
    %v1898 = vadd.f32 %v1807, %v1897
    %v1899 = vpop.f32.mrb[0].mxu0
    %1900 = vmatprep.mubr.f32.mxu0 0.0
    %1901 = vmatmul.mubr.f32.gmra.mrb[0].mxu0 %v1819
    %v1902 = vpop.f32.mrb[0].mxu0
    %v1903 = vadd.f32 %v1807, %v1902
    %v1904 = vpop.f32.mrb[0].mxu0
    %1905 = vdwg.mxu0
    %v1906 = vld [vmem:[%s3] sm:$0x1]
    %v1907 = vld [vmem:[%s3 + $0x1] sm:$0x1]
    %v1909 = vsel %vm172, %v1769, 0
    %v1912 = vsel %vm172, %v1888, 0
    %v1915 = vsel %vm172, %v1893, 0
    %1917 = vmatprep.subr.mxu0 0.0
    %1918 = vmatpush1.xpose.msra.mxu0 %v1912
    %1919 = vmatprep.subr.mxu0 0.0
    %1920 = vmatpush1.xpose.msra.mxu0 %v1915
    %1921 = vmatprep.subr.mxu0 0.0
    %1922 = vmatpush1.xpose.msra.mxu0 0.0
    %1923 = vmatprep.subr.mxu0 0.0
    %1924 = vmatpush1.xpose.msra.mxu0 0.0
    %1925 = vmatprep.subr.mxu0 0.0
    %1926 = vmatpush1.xpose.msra.mxu0 0.0
    %1927 = vmatprep.subr.mxu0 0.0
    %1928 = vmatpush1.xpose.msra.mxu0 0.0
    %1929 = vmatprep.subr.mxu0 0.0
    %1930 = vmatpush1.xpose.msra.mxu0 0.0
    %1931 = vmatprep.subr.mxu0 0.0
    %1932 = vmatpush1.xpose.msra.mxu0 0.0
    %1933 = vmatprep.subr.mxu0 0.0
    %1934 = vmatpush1.xpose.msra.mxu0 0.0
    %1935 = vmatprep.subr.mxu0 0.0
    %1936 = vmatpush1.xpose.msra.mxu0 0.0
    %1937 = vmatprep.subr.mxu0 0.0
    %1938 = vmatpush1.xpose.msra.mxu0 0.0
    %1939 = vmatprep.subr.mxu0 0.0
    %1940 = vmatpush1.xpose.msra.mxu0 0.0
    %1941 = vmatprep.subr.mxu0 0.0
    %1942 = vmatpush1.xpose.msra.mxu0 0.0
    %1943 = vmatprep.subr.mxu0 0.0
    %1944 = vmatpush1.xpose.msra.mxu0 0.0
    %1945 = vmatprep.subr.mxu0 0.0
    %1946 = vmatpush1.xpose.msra.mxu0 0.0
    %1947 = vmatprep.subr.mxu0 0.0
    %1948 = vmatpush1.xpose.msra.mxu0 0.0
    %1949 = vmatprep.subr.mxu0 0.0
    %1950 = vmatpush1.xpose.msra.mxu0 0.0
    %1951 = vmatprep.subr.mxu0 0.0
    %1952 = vmatpush1.xpose.msra.mxu0 0.0
    %1953 = vmatprep.subr.mxu0 0.0
    %1954 = vmatpush1.xpose.msra.mxu0 0.0
    %1955 = vmatprep.subr.mxu0 0.0
    %1956 = vmatpush1.xpose.msra.mxu0 0.0
    %1957 = vmatprep.subr.mxu0 0.0
    %1958 = vmatpush1.xpose.msra.mxu0 0.0
    %1959 = vmatprep.subr.mxu0 0.0
    %1960 = vmatpush1.xpose.msra.mxu0 0.0
    %1961 = vmatprep.subr.mxu0 0.0
    %1962 = vmatpush1.xpose.msra.mxu0 0.0
    %1963 = vmatprep.subr.mxu0 0.0
    %1964 = vmatpush1.xpose.msra.mxu0 0.0
    %1965 = vmatprep.subr.mxu0 0.0
    %1966 = vmatpush1.xpose.msra.mxu0 0.0
    %1967 = vmatprep.subr.mxu0 0.0
    %1968 = vmatpush1.xpose.msra.mxu0 0.0
    %1969 = vmatprep.subr.mxu0 0.0
    %1970 = vmatpush1.xpose.msra.mxu0 0.0
    %1971 = vmatprep.subr.mxu0 0.0
    %1972 = vmatpush1.xpose.msra.mxu0 0.0
    %1973 = vmatprep.subr.mxu0 0.0
    %1974 = vmatpush1.xpose.msra.mxu0 0.0
    %1975 = vmatprep.subr.mxu0 0.0
    %1976 = vmatpush1.xpose.msra.mxu0 0.0
    %1977 = vmatprep.subr.mxu0 0.0
    %1978 = vmatpush1.xpose.msra.mxu0 0.0
    %1979 = vmatprep.subr.mxu0 0.0
    %1980 = vmatpush1.xpose.msra.mxu0 0.0
    %1981 = vmatprep.mubr.f32.mxu0 0.0
    %1982 = vmatmul.mubr.f32.gmra.mrb[0].mxu0 %v1909
    %v1983 = vpop.f32.mrb[0].mxu0
    %v1984 = vadd.f32 0.0, %v1983
    %v1985 = vpop.f32.mrb[0].mxu0
    %1986 = vdwg.mxu0
    %v1988 = vsel %vm172, %v1774, 0
    %v1991 = vsel %vm172, %v1898, 0
    %v1994 = vsel %vm172, %v1903, 0
    %1996 = vmatprep.subr.mxu0 0.0
    %1997 = vmatpush1.xpose.msra.mxu0 %v1991
    %1998 = vmatprep.subr.mxu0 0.0
    %1999 = vmatpush1.xpose.msra.mxu0 %v1994
    %2000 = vmatprep.subr.mxu0 0.0
    %2001 = vmatpush1.xpose.msra.mxu0 0.0
    %2002 = vmatprep.subr.mxu0 0.0
    %2003 = vmatpush1.xpose.msra.mxu0 0.0
    %2004 = vmatprep.subr.mxu0 0.0
    %2005 = vmatpush1.xpose.msra.mxu0 0.0
    %2006 = vmatprep.subr.mxu0 0.0
    %2007 = vmatpush1.xpose.msra.mxu0 0.0
    %2008 = vmatprep.subr.mxu0 0.0
    %2009 = vmatpush1.xpose.msra.mxu0 0.0
    %2010 = vmatprep.subr.mxu0 0.0
    %2011 = vmatpush1.xpose.msra.mxu0 0.0
    %2012 = vmatprep.subr.mxu0 0.0
    %2013 = vmatpush1.xpose.msra.mxu0 0.0
    %2014 = vmatprep.subr.mxu0 0.0
    %2015 = vmatpush1.xpose.msra.mxu0 0.0
    %2016 = vmatprep.subr.mxu0 0.0
    %2017 = vmatpush1.xpose.msra.mxu0 0.0
    %2018 = vmatprep.subr.mxu0 0.0
    %2019 = vmatpush1.xpose.msra.mxu0 0.0
    %2020 = vmatprep.subr.mxu0 0.0
    %2021 = vmatpush1.xpose.msra.mxu0 0.0
    %2022 = vmatprep.subr.mxu0 0.0
    %2023 = vmatpush1.xpose.msra.mxu0 0.0
    %2024 = vmatprep.subr.mxu0 0.0
    %2025 = vmatpush1.xpose.msra.mxu0 0.0
    %2026 = vmatprep.subr.mxu0 0.0
    %2027 = vmatpush1.xpose.msra.mxu0 0.0
    %2028 = vmatprep.subr.mxu0 0.0
    %2029 = vmatpush1.xpose.msra.mxu0 0.0
    %2030 = vmatprep.subr.mxu0 0.0
    %2031 = vmatpush1.xpose.msra.mxu0 0.0
    %2032 = vmatprep.subr.mxu0 0.0
    %2033 = vmatpush1.xpose.msra.mxu0 0.0
    %2034 = vmatprep.subr.mxu0 0.0
    %2035 = vmatpush1.xpose.msra.mxu0 0.0
    %2036 = vmatprep.subr.mxu0 0.0
    %2037 = vmatpush1.xpose.msra.mxu0 0.0
    %2038 = vmatprep.subr.mxu0 0.0
    %2039 = vmatpush1.xpose.msra.mxu0 0.0
    %2040 = vmatprep.subr.mxu0 0.0
    %2041 = vmatpush1.xpose.msra.mxu0 0.0
    %2042 = vmatprep.subr.mxu0 0.0
    %2043 = vmatpush1.xpose.msra.mxu0 0.0
    %2044 = vmatprep.subr.mxu0 0.0
    %2045 = vmatpush1.xpose.msra.mxu0 0.0
    %2046 = vmatprep.subr.mxu0 0.0
    %2047 = vmatpush1.xpose.msra.mxu0 0.0
    %2048 = vmatprep.subr.mxu0 0.0
    %2049 = vmatpush1.xpose.msra.mxu0 0.0
    %2050 = vmatprep.subr.mxu0 0.0
    %2051 = vmatpush1.xpose.msra.mxu0 0.0
    %2052 = vmatprep.subr.mxu0 0.0
    %2053 = vmatpush1.xpose.msra.mxu0 0.0
    %2054 = vmatprep.subr.mxu0 0.0
    %2055 = vmatpush1.xpose.msra.mxu0 0.0
    %2056 = vmatprep.subr.mxu0 0.0
    %2057 = vmatpush1.xpose.msra.mxu0 0.0
    %2058 = vmatprep.subr.mxu0 0.0
    %2059 = vmatpush1.xpose.msra.mxu0 0.0
    %2060 = vmatprep.mubr.f32.mxu0 0.0
    %2061 = vmatmul.mubr.f32.gmra.mrb[0].mxu0 %v1988
    %v2062 = vpop.f32.mrb[0].mxu0
    %v2063 = vadd.f32 0.0, %v2062
    %v2064 = vpop.f32.mrb[0].mxu0
    %2065 = vdwg.mxu0
    %v2066 = vmul.f32 %v1984, 0.35355338
    %v2067 = vmul.f32 %v2063, 0.35355338
    %v2070 = vlaneseq
    %v2071 = vshrl.u32 %v2070, 7
    %v2072 = vsub.s32 0, %v2071
    %v2073 = vrot.slane %v1906, %v2072
    %v2074 = vlaneseq
    %v2075 = vshrl.u32 %v2074, 7
    %v2076 = vsub.s32 0, %v2075
    %v2077 = vrot.slane %v1907, %v2076
    %v2080 = vadd.f32 %v2066, %v2073
    %v2081 = vadd.f32 %v2067, %v2077
    %v2082 = vsel %vm1530, %v2080, -inf
    %2083 = vmax.xlane.f32.xlu0 %v2082
    %v2084 = vpop.xlane.xlu0 %2083
    %v2085 = vsel %vm1530, %v2081, -inf
    %2086 = vmax.xlane.f32.xlu0 %v2085
    %v2087 = vpop.xlane.xlu0 %2086
    %v2088 = vsub.f32 %v2080, %v2084
    %v2089 = vsub.f32 %v2081, %v2087
    %v2090 = vmul.f32 %v2088, 1.442695
    %v2091 = vpow.pop %v2090
    %v2092 = vmul.f32 %v2089, 1.442695
    %v2093 = vpow.pop %v2092
    %v2094 = vsel %vm1530, %v2091, 0.0
    %2095 = vadd.xlane.f32.xlu0 %v2094
    %v2096 = vpop.xlane.xlu0 %2095
    %v2097 = vsel %vm1530, %v2093, 0.0
    %2098 = vadd.xlane.f32.xlu0 %v2097
    %v2099 = vpop.xlane.xlu0 %2098
    %v2100 = vrcp.pop %v2096
    %v2101 = vrcp.pop %v2099
    %v2102 = vmul.f32 %v2091, %v2100
    %v2103 = vmul.f32 %v2093, %v2101
    %2104 = vrot.lane.b32.xlu0 %v1888, 96
    %v2105 = vpop.permute.xlu0 %2104
    %2106 = vrot.lane.b32.xlu0 %v1893, 96
    %v2107 = vpop.permute.xlu0 %2106
    %v2111 = vsel %vm1530, %v2102, 0
    %2113 = vmatprep.subr.mxu0 0.0
    %2114 = vmatpush1.msra.mxu0 %v2105
    %2115 = vmatprep.subr.mxu0 0.0
    %2116 = vmatpush1.msra.mxu0 %v2107
    %2117 = vmatprep.subr.mxu0 0.0
    %2118 = vmatpush1.msra.mxu0 0.0
    %2119 = vmatprep.subr.mxu0 0.0
    %2120 = vmatpush1.msra.mxu0 0.0
    %2121 = vmatprep.subr.mxu0 0.0
    %2122 = vmatpush1.msra.mxu0 0.0
    %2123 = vmatprep.subr.mxu0 0.0
    %2124 = vmatpush1.msra.mxu0 0.0
    %2125 = vmatprep.subr.mxu0 0.0
    %2126 = vmatpush1.msra.mxu0 0.0
    %2127 = vmatprep.subr.mxu0 0.0
    %2128 = vmatpush1.msra.mxu0 0.0
    %2129 = vmatprep.subr.mxu0 0.0
    %2130 = vmatpush1.msra.mxu0 0.0
    %2131 = vmatprep.subr.mxu0 0.0
    %2132 = vmatpush1.msra.mxu0 0.0
    %2133 = vmatprep.subr.mxu0 0.0
    %2134 = vmatpush1.msra.mxu0 0.0
    %2135 = vmatprep.subr.mxu0 0.0
    %2136 = vmatpush1.msra.mxu0 0.0
    %2137 = vmatprep.subr.mxu0 0.0
    %2138 = vmatpush1.msra.mxu0 0.0
    %2139 = vmatprep.subr.mxu0 0.0
    %2140 = vmatpush1.msra.mxu0 0.0
    %2141 = vmatprep.subr.mxu0 0.0
    %2142 = vmatpush1.msra.mxu0 0.0
    %2143 = vmatprep.subr.mxu0 0.0
    %2144 = vmatpush1.msra.mxu0 0.0
    %2145 = vmatprep.subr.mxu0 0.0
    %2146 = vmatpush1.msra.mxu0 0.0
    %2147 = vmatprep.subr.mxu0 0.0
    %2148 = vmatpush1.msra.mxu0 0.0
    %2149 = vmatprep.subr.mxu0 0.0
    %2150 = vmatpush1.msra.mxu0 0.0
    %2151 = vmatprep.subr.mxu0 0.0
    %2152 = vmatpush1.msra.mxu0 0.0
    %2153 = vmatprep.subr.mxu0 0.0
    %2154 = vmatpush1.msra.mxu0 0.0
    %2155 = vmatprep.subr.mxu0 0.0
    %2156 = vmatpush1.msra.mxu0 0.0
    %2157 = vmatprep.subr.mxu0 0.0
    %2158 = vmatpush1.msra.mxu0 0.0
    %2159 = vmatprep.subr.mxu0 0.0
    %2160 = vmatpush1.msra.mxu0 0.0
    %2161 = vmatprep.subr.mxu0 0.0
    %2162 = vmatpush1.msra.mxu0 0.0
    %2163 = vmatprep.subr.mxu0 0.0
    %2164 = vmatpush1.msra.mxu0 0.0
    %2165 = vmatprep.subr.mxu0 0.0
    %2166 = vmatpush1.msra.mxu0 0.0
    %2167 = vmatprep.subr.mxu0 0.0
    %2168 = vmatpush1.msra.mxu0 0.0
    %2169 = vmatprep.subr.mxu0 0.0
    %2170 = vmatpush1.msra.mxu0 0.0
    %2171 = vmatprep.subr.mxu0 0.0
    %2172 = vmatpush1.msra.mxu0 0.0
    %2173 = vmatprep.subr.mxu0 0.0
    %2174 = vmatpush1.msra.mxu0 0.0
    %2175 = vmatprep.subr.mxu0 0.0
    %2176 = vmatpush1.msra.mxu0 0.0
    %2177 = vmatprep.mubr.f32.mxu0 0.0
    %2178 = vmatmul.mubr.f32.gmra.mrb[0].mxu0 %v2111
    %v2179 = vpop.f32.mrb[0].mxu0
    %v2180 = vadd.f32 0.0, %v2179
    %v2181 = vpop.f32.mrb[0].mxu0
    %2182 = vdwg.mxu0
    %2183 = vrot.lane.b32.xlu0 %v1898, 96
    %v2184 = vpop.permute.xlu0 %2183
    %2185 = vrot.lane.b32.xlu0 %v1903, 96
    %v2186 = vpop.permute.xlu0 %2185
    %v2190 = vsel %vm1530, %v2103, 0
    %2192 = vmatprep.subr.mxu0 0.0
    %2193 = vmatpush1.msra.mxu0 %v2184
    %2194 = vmatprep.subr.mxu0 0.0
    %2195 = vmatpush1.msra.mxu0 %v2186
    %2196 = vmatprep.subr.mxu0 0.0
    %2197 = vmatpush1.msra.mxu0 0.0
    %2198 = vmatprep.subr.mxu0 0.0
    %2199 = vmatpush1.msra.mxu0 0.0
    %2200 = vmatprep.subr.mxu0 0.0
    %2201 = vmatpush1.msra.mxu0 0.0
    %2202 = vmatprep.subr.mxu0 0.0
    %2203 = vmatpush1.msra.mxu0 0.0
    %2204 = vmatprep.subr.mxu0 0.0
    %2205 = vmatpush1.msra.mxu0 0.0
    %2206 = vmatprep.subr.mxu0 0.0
    %2207 = vmatpush1.msra.mxu0 0.0
    %2208 = vmatprep.subr.mxu0 0.0
    %2209 = vmatpush1.msra.mxu0 0.0
    %2210 = vmatprep.subr.mxu0 0.0
    %2211 = vmatpush1.msra.mxu0 0.0
    %2212 = vmatprep.subr.mxu0 0.0
    %2213 = vmatpush1.msra.mxu0 0.0
    %2214 = vmatprep.subr.mxu0 0.0
    %2215 = vmatpush1.msra.mxu0 0.0
    %2216 = vmatprep.subr.mxu0 0.0
    %2217 = vmatpush1.msra.mxu0 0.0
    %2218 = vmatprep.subr.mxu0 0.0
    %2219 = vmatpush1.msra.mxu0 0.0
    %2220 = vmatprep.subr.mxu0 0.0
    %2221 = vmatpush1.msra.mxu0 0.0
    %2222 = vmatprep.subr.mxu0 0.0
    %2223 = vmatpush1.msra.mxu0 0.0
    %2224 = vmatprep.subr.mxu0 0.0
    %2225 = vmatpush1.msra.mxu0 0.0
    %2226 = vmatprep.subr.mxu0 0.0
    %2227 = vmatpush1.msra.mxu0 0.0
    %2228 = vmatprep.subr.mxu0 0.0
    %2229 = vmatpush1.msra.mxu0 0.0
    %2230 = vmatprep.subr.mxu0 0.0
    %2231 = vmatpush1.msra.mxu0 0.0
    %2232 = vmatprep.subr.mxu0 0.0
    %2233 = vmatpush1.msra.mxu0 0.0
    %2234 = vmatprep.subr.mxu0 0.0
    %2235 = vmatpush1.msra.mxu0 0.0
    %2236 = vmatprep.subr.mxu0 0.0
    %2237 = vmatpush1.msra.mxu0 0.0
    %2238 = vmatprep.subr.mxu0 0.0
    %2239 = vmatpush1.msra.mxu0 0.0
    %2240 = vmatprep.subr.mxu0 0.0
    %2241 = vmatpush1.msra.mxu0 0.0
    %2242 = vmatprep.subr.mxu0 0.0
    %2243 = vmatpush1.msra.mxu0 0.0
    %2244 = vmatprep.subr.mxu0 0.0
    %2245 = vmatpush1.msra.mxu0 0.0
    %2246 = vmatprep.subr.mxu0 0.0
    %2247 = vmatpush1.msra.mxu0 0.0
    %2248 = vmatprep.subr.mxu0 0.0
    %2249 = vmatpush1.msra.mxu0 0.0
    %2250 = vmatprep.subr.mxu0 0.0
    %2251 = vmatpush1.msra.mxu0 0.0
    %2252 = vmatprep.subr.mxu0 0.0
    %2253 = vmatpush1.msra.mxu0 0.0
    %2254 = vmatprep.subr.mxu0 0.0
    %2255 = vmatpush1.msra.mxu0 0.0
    %2256 = vmatprep.mubr.f32.mxu0 0.0
    %2257 = vmatmul.mubr.f32.gmra.mrb[0].mxu0 %v2190
    %v2258 = vpop.f32.mrb[0].mxu0
    %v2259 = vadd.f32 0.0, %v2258
    %v2260 = vpop.f32.mrb[0].mxu0
    %2261 = vdwg.mxu0
    %2262 = vrot.lane.b32.xlu0 %v1769, 120
    %v2263 = vpop.permute.xlu0 %2262
    %2264 = vrot.lane.b32.xlu0 %v1888, 120
    %v2265 = vpop.permute.xlu0 %2264
    %2266 = vrot.lane.b32.xlu0 %v1893, 120
    %v2267 = vpop.permute.xlu0 %2266
    %v2268 = vsel %vm172, %v2263, 0
    %v2270 = vsel %vm172, %v2265, 0
    %v2272 = vsel %vm172, %v2267, 0
    %2274 = vmatprep.subr.mxu0 0.0
    %2275 = vmatpush1.xpose.msra.mxu0 %v2270
    %2276 = vmatprep.subr.mxu0 0.0
    %2277 = vmatpush1.xpose.msra.mxu0 %v2272
    %2278 = vmatprep.subr.mxu0 0.0
    %2279 = vmatpush1.xpose.msra.mxu0 0.0
    %2280 = vmatprep.subr.mxu0 0.0
    %2281 = vmatpush1.xpose.msra.mxu0 0.0
    %2282 = vmatprep.subr.mxu0 0.0
    %2283 = vmatpush1.xpose.msra.mxu0 0.0
    %2284 = vmatprep.subr.mxu0 0.0
    %2285 = vmatpush1.xpose.msra.mxu0 0.0
    %2286 = vmatprep.subr.mxu0 0.0
    %2287 = vmatpush1.xpose.msra.mxu0 0.0
    %2288 = vmatprep.subr.mxu0 0.0
    %2289 = vmatpush1.xpose.msra.mxu0 0.0
    %2290 = vmatprep.subr.mxu0 0.0
    %2291 = vmatpush1.xpose.msra.mxu0 0.0
    %2292 = vmatprep.subr.mxu0 0.0
    %2293 = vmatpush1.xpose.msra.mxu0 0.0
    %2294 = vmatprep.subr.mxu0 0.0
    %2295 = vmatpush1.xpose.msra.mxu0 0.0
    %2296 = vmatprep.subr.mxu0 0.0
    %2297 = vmatpush1.xpose.msra.mxu0 0.0
    %2298 = vmatprep.subr.mxu0 0.0
    %2299 = vmatpush1.xpose.msra.mxu0 0.0
    %2300 = vmatprep.subr.mxu0 0.0
    %2301 = vmatpush1.xpose.msra.mxu0 0.0
    %2302 = vmatprep.subr.mxu0 0.0
    %2303 = vmatpush1.xpose.msra.mxu0 0.0
    %2304 = vmatprep.subr.mxu0 0.0
    %2305 = vmatpush1.xpose.msra.mxu0 0.0
    %2306 = vmatprep.subr.mxu0 0.0
    %2307 = vmatpush1.xpose.msra.mxu0 0.0
    %2308 = vmatprep.subr.mxu0 0.0
    %2309 = vmatpush1.xpose.msra.mxu0 0.0
    %2310 = vmatprep.subr.mxu0 0.0
    %2311 = vmatpush1.xpose.msra.mxu0 0.0
    %2312 = vmatprep.subr.mxu0 0.0
    %2313 = vmatpush1.xpose.msra.mxu0 0.0
    %2314 = vmatprep.subr.mxu0 0.0
    %2315 = vmatpush1.xpose.msra.mxu0 0.0
    %2316 = vmatprep.subr.mxu0 0.0
    %2317 = vmatpush1.xpose.msra.mxu0 0.0
    %2318 = vmatprep.subr.mxu0 0.0
    %2319 = vmatpush1.xpose.msra.mxu0 0.0
    %2320 = vmatprep.subr.mxu0 0.0
    %2321 = vmatpush1.xpose.msra.mxu0 0.0
    %2322 = vmatprep.subr.mxu0 0.0
    %2323 = vmatpush1.xpose.msra.mxu0 0.0
    %2324 = vmatprep.subr.mxu0 0.0
    %2325 = vmatpush1.xpose.msra.mxu0 0.0
    %2326 = vmatprep.subr.mxu0 0.0
    %2327 = vmatpush1.xpose.msra.mxu0 0.0
    %2328 = vmatprep.subr.mxu0 0.0
    %2329 = vmatpush1.xpose.msra.mxu0 0.0
    %2330 = vmatprep.subr.mxu0 0.0
    %2331 = vmatpush1.xpose.msra.mxu0 0.0
    %2332 = vmatprep.subr.mxu0 0.0
    %2333 = vmatpush1.xpose.msra.mxu0 0.0
    %2334 = vmatprep.subr.mxu0 0.0
    %2335 = vmatpush1.xpose.msra.mxu0 0.0
    %2336 = vmatprep.subr.mxu0 0.0
    %2337 = vmatpush1.xpose.msra.mxu0 0.0
    %2338 = vmatprep.mubr.f32.mxu0 0.0
    %2339 = vmatmul.mubr.f32.gmra.mrb[0].mxu0 %v2268
    %v2340 = vpop.f32.mrb[0].mxu0
    %v2341 = vadd.f32 0.0, %v2340
    %v2342 = vpop.f32.mrb[0].mxu0
    %2343 = vdwg.mxu0
    %2344 = vrot.lane.b32.xlu0 %v1774, 120
    %v2345 = vpop.permute.xlu0 %2344
    %2346 = vrot.lane.b32.xlu0 %v1898, 120
    %v2347 = vpop.permute.xlu0 %2346
    %2348 = vrot.lane.b32.xlu0 %v1903, 120
    %v2349 = vpop.permute.xlu0 %2348
    %v2350 = vsel %vm172, %v2345, 0
    %v2352 = vsel %vm172, %v2347, 0
    %v2354 = vsel %vm172, %v2349, 0
    %2356 = vmatprep.subr.mxu0 0.0
    %2357 = vmatpush1.xpose.msra.mxu0 %v2352
    %2358 = vmatprep.subr.mxu0 0.0
    %2359 = vmatpush1.xpose.msra.mxu0 %v2354
    %2360 = vmatprep.subr.mxu0 0.0
    %2361 = vmatpush1.xpose.msra.mxu0 0.0
    %2362 = vmatprep.subr.mxu0 0.0
    %2363 = vmatpush1.xpose.msra.mxu0 0.0
    %2364 = vmatprep.subr.mxu0 0.0
    %2365 = vmatpush1.xpose.msra.mxu0 0.0
    %2366 = vmatprep.subr.mxu0 0.0
    %2367 = vmatpush1.xpose.msra.mxu0 0.0
    %2368 = vmatprep.subr.mxu0 0.0
    %2369 = vmatpush1.xpose.msra.mxu0 0.0
    %2370 = vmatprep.subr.mxu0 0.0
    %2371 = vmatpush1.xpose.msra.mxu0 0.0
    %2372 = vmatprep.subr.mxu0 0.0
    %2373 = vmatpush1.xpose.msra.mxu0 0.0
    %2374 = vmatprep.subr.mxu0 0.0
    %2375 = vmatpush1.xpose.msra.mxu0 0.0
    %2376 = vmatprep.subr.mxu0 0.0
    %2377 = vmatpush1.xpose.msra.mxu0 0.0
    %2378 = vmatprep.subr.mxu0 0.0
    %2379 = vmatpush1.xpose.msra.mxu0 0.0
    %2380 = vmatprep.subr.mxu0 0.0
    %2381 = vmatpush1.xpose.msra.mxu0 0.0
    %2382 = vmatprep.subr.mxu0 0.0
    %2383 = vmatpush1.xpose.msra.mxu0 0.0
    %2384 = vmatprep.subr.mxu0 0.0
    %2385 = vmatpush1.xpose.msra.mxu0 0.0
    %2386 = vmatprep.subr.mxu0 0.0
    %2387 = vmatpush1.xpose.msra.mxu0 0.0
    %2388 = vmatprep.subr.mxu0 0.0
    %2389 = vmatpush1.xpose.msra.mxu0 0.0
    %2390 = vmatprep.subr.mxu0 0.0
    %2391 = vmatpush1.xpose.msra.mxu0 0.0
    %2392 = vmatprep.subr.mxu0 0.0
    %2393 = vmatpush1.xpose.msra.mxu0 0.0
    %2394 = vmatprep.subr.mxu0 0.0
    %2395 = vmatpush1.xpose.msra.mxu0 0.0
    %2396 = vmatprep.subr.mxu0 0.0
    %2397 = vmatpush1.xpose.msra.mxu0 0.0
    %2398 = vmatprep.subr.mxu0 0.0
    %2399 = vmatpush1.xpose.msra.mxu0 0.0
    %2400 = vmatprep.subr.mxu0 0.0
    %2401 = vmatpush1.xpose.msra.mxu0 0.0
    %2402 = vmatprep.subr.mxu0 0.0
    %2403 = vmatpush1.xpose.msra.mxu0 0.0
    %2404 = vmatprep.subr.mxu0 0.0
    %2405 = vmatpush1.xpose.msra.mxu0 0.0
    %2406 = vmatprep.subr.mxu0 0.0
    %2407 = vmatpush1.xpose.msra.mxu0 0.0
    %2408 = vmatprep.subr.mxu0 0.0
    %2409 = vmatpush1.xpose.msra.mxu0 0.0
    %2410 = vmatprep.subr.mxu0 0.0
    %2411 = vmatpush1.xpose.msra.mxu0 0.0
    %2412 = vmatprep.subr.mxu0 0.0
    %2413 = vmatpush1.xpose.msra.mxu0 0.0
    %2414 = vmatprep.subr.mxu0 0.0
    %2415 = vmatpush1.xpose.msra.mxu0 0.0
    %2416 = vmatprep.subr.mxu0 0.0
    %2417 = vmatpush1.xpose.msra.mxu0 0.0
    %2418 = vmatprep.subr.mxu0 0.0
    %2419 = vmatpush1.xpose.msra.mxu0 0.0
    %2420 = vmatprep.mubr.f32.mxu0 0.0
    %2421 = vmatmul.mubr.f32.gmra.mrb[0].mxu0 %v2350
    %v2422 = vpop.f32.mrb[0].mxu0
    %v2423 = vadd.f32 0.0, %v2422
    %v2424 = vpop.f32.mrb[0].mxu0
    %2425 = vdwg.mxu0
    %v2426 = vmul.f32 %v2341, 0.35355338
    %v2427 = vmul.f32 %v2423, 0.35355338
    %v2428 = vadd.f32 %v2426, %v2073
    %v2429 = vadd.f32 %v2427, %v2077
    %v2430 = vsel %vm1530, %v2428, -inf
    %2431 = vmax.xlane.f32.xlu0 %v2430
    %v2432 = vpop.xlane.xlu0 %2431
    %v2433 = vsel %vm1530, %v2429, -inf
    %2434 = vmax.xlane.f32.xlu0 %v2433
    %v2435 = vpop.xlane.xlu0 %2434
    %v2436 = vsub.f32 %v2428, %v2432
    %v2437 = vsub.f32 %v2429, %v2435
    %v2438 = vmul.f32 %v2436, 1.442695
    %v2439 = vpow.pop %v2438
    %v2440 = vmul.f32 %v2437, 1.442695
    %v2441 = vpow.pop %v2440
    %v2442 = vsel %vm1530, %v2439, 0.0
    %2443 = vadd.xlane.f32.xlu0 %v2442
    %v2444 = vpop.xlane.xlu0 %2443
    %v2445 = vsel %vm1530, %v2441, 0.0
    %2446 = vadd.xlane.f32.xlu0 %v2445
    %v2447 = vpop.xlane.xlu0 %2446
    %v2448 = vrcp.pop %v2444
    %v2449 = vrcp.pop %v2447
    %v2450 = vmul.f32 %v2439, %v2448
    %v2451 = vmul.f32 %v2441, %v2449
    %2452 = vrot.lane.b32.xlu0 %v1888, 88
    %v2453 = vpop.permute.xlu0 %2452
    %2454 = vrot.lane.b32.xlu0 %v1893, 88
    %v2455 = vpop.permute.xlu0 %2454
    %v2459 = vsel %vm1530, %v2450, 0
    %2461 = vmatprep.subr.mxu0 0.0
    %2462 = vmatpush1.msra.mxu0 %v2453
    %2463 = vmatprep.subr.mxu0 0.0
    %2464 = vmatpush1.msra.mxu0 %v2455
    %2465 = vmatprep.subr.mxu0 0.0
    %2466 = vmatpush1.msra.mxu0 0.0
    %2467 = vmatprep.subr.mxu0 0.0
    %2468 = vmatpush1.msra.mxu0 0.0
    %2469 = vmatprep.subr.mxu0 0.0
    %2470 = vmatpush1.msra.mxu0 0.0
    %2471 = vmatprep.subr.mxu0 0.0
    %2472 = vmatpush1.msra.mxu0 0.0
    %2473 = vmatprep.subr.mxu0 0.0
    %2474 = vmatpush1.msra.mxu0 0.0
    %2475 = vmatprep.subr.mxu0 0.0
    %2476 = vmatpush1.msra.mxu0 0.0
    %2477 = vmatprep.subr.mxu0 0.0
    %2478 = vmatpush1.msra.mxu0 0.0
    %2479 = vmatprep.subr.mxu0 0.0
    %2480 = vmatpush1.msra.mxu0 0.0
    %2481 = vmatprep.subr.mxu0 0.0
    %2482 = vmatpush1.msra.mxu0 0.0
    %2483 = vmatprep.subr.mxu0 0.0
    %2484 = vmatpush1.msra.mxu0 0.0
    %2485 = vmatprep.subr.mxu0 0.0
    %2486 = vmatpush1.msra.mxu0 0.0
    %2487 = vmatprep.subr.mxu0 0.0
    %2488 = vmatpush1.msra.mxu0 0.0
    %2489 = vmatprep.subr.mxu0 0.0
    %2490 = vmatpush1.msra.mxu0 0.0
    %2491 = vmatprep.subr.mxu0 0.0
    %2492 = vmatpush1.msra.mxu0 0.0
    %2493 = vmatprep.subr.mxu0 0.0
    %2494 = vmatpush1.msra.mxu0 0.0
    %2495 = vmatprep.subr.mxu0 0.0
    %2496 = vmatpush1.msra.mxu0 0.0
    %2497 = vmatprep.subr.mxu0 0.0
    %2498 = vmatpush1.msra.mxu0 0.0
    %2499 = vmatprep.subr.mxu0 0.0
    %2500 = vmatpush1.msra.mxu0 0.0
    %2501 = vmatprep.subr.mxu0 0.0
    %2502 = vmatpush1.msra.mxu0 0.0
    %2503 = vmatprep.subr.mxu0 0.0
    %2504 = vmatpush1.msra.mxu0 0.0
    %2505 = vmatprep.subr.mxu0 0.0
    %2506 = vmatpush1.msra.mxu0 0.0
    %2507 = vmatprep.subr.mxu0 0.0
    %2508 = vmatpush1.msra.mxu0 0.0
    %2509 = vmatprep.subr.mxu0 0.0
    %2510 = vmatpush1.msra.mxu0 0.0
    %2511 = vmatprep.subr.mxu0 0.0
    %2512 = vmatpush1.msra.mxu0 0.0
    %2513 = vmatprep.subr.mxu0 0.0
    %2514 = vmatpush1.msra.mxu0 0.0
    %2515 = vmatprep.subr.mxu0 0.0
    %2516 = vmatpush1.msra.mxu0 0.0
    %2517 = vmatprep.subr.mxu0 0.0
    %2518 = vmatpush1.msra.mxu0 0.0
    %2519 = vmatprep.subr.mxu0 0.0
    %2520 = vmatpush1.msra.mxu0 0.0
    %2521 = vmatprep.subr.mxu0 0.0
    %2522 = vmatpush1.msra.mxu0 0.0
    %2523 = vmatprep.subr.mxu0 0.0
    %2524 = vmatpush1.msra.mxu0 0.0
    %2525 = vmatprep.mubr.f32.mxu0 0.0
    %2526 = vmatmul.mubr.f32.gmra.mrb[0].mxu0 %v2459
    %v2527 = vpop.f32.mrb[0].mxu0
    %v2528 = vadd.f32 0.0, %v2527
    %v2529 = vpop.f32.mrb[0].mxu0
    %2530 = vdwg.mxu0
    %2531 = vrot.lane.b32.xlu0 %v1898, 88
    %v2532 = vpop.permute.xlu0 %2531
    %2533 = vrot.lane.b32.xlu0 %v1903, 88
    %v2534 = vpop.permute.xlu0 %2533
    %v2538 = vsel %vm1530, %v2451, 0
    %2540 = vmatprep.subr.mxu0 0.0
    %2541 = vmatpush1.msra.mxu0 %v2532
    %2542 = vmatprep.subr.mxu0 0.0
    %2543 = vmatpush1.msra.mxu0 %v2534
    %2544 = vmatprep.subr.mxu0 0.0
    %2545 = vmatpush1.msra.mxu0 0.0
    %2546 = vmatprep.subr.mxu0 0.0
    %2547 = vmatpush1.msra.mxu0 0.0
    %2548 = vmatprep.subr.mxu0 0.0
    %2549 = vmatpush1.msra.mxu0 0.0
    %2550 = vmatprep.subr.mxu0 0.0
    %2551 = vmatpush1.msra.mxu0 0.0
    %2552 = vmatprep.subr.mxu0 0.0
    %2553 = vmatpush1.msra.mxu0 0.0
    %2554 = vmatprep.subr.mxu0 0.0
    %2555 = vmatpush1.msra.mxu0 0.0
    %2556 = vmatprep.subr.mxu0 0.0
    %2557 = vmatpush1.msra.mxu0 0.0
    %2558 = vmatprep.subr.mxu0 0.0
    %2559 = vmatpush1.msra.mxu0 0.0
    %2560 = vmatprep.subr.mxu0 0.0
    %2561 = vmatpush1.msra.mxu0 0.0
    %2562 = vmatprep.subr.mxu0 0.0
    %2563 = vmatpush1.msra.mxu0 0.0
    %2564 = vmatprep.subr.mxu0 0.0
    %2565 = vmatpush1.msra.mxu0 0.0
    %2566 = vmatprep.subr.mxu0 0.0
    %2567 = vmatpush1.msra.mxu0 0.0
    %2568 = vmatprep.subr.mxu0 0.0
    %2569 = vmatpush1.msra.mxu0 0.0
    %2570 = vmatprep.subr.mxu0 0.0
    %2571 = vmatpush1.msra.mxu0 0.0
    %2572 = vmatprep.subr.mxu0 0.0
    %2573 = vmatpush1.msra.mxu0 0.0
    %2574 = vmatprep.subr.mxu0 0.0
    %2575 = vmatpush1.msra.mxu0 0.0
    %2576 = vmatprep.subr.mxu0 0.0
    %2577 = vmatpush1.msra.mxu0 0.0
    %2578 = vmatprep.subr.mxu0 0.0
    %2579 = vmatpush1.msra.mxu0 0.0
    %2580 = vmatprep.subr.mxu0 0.0
    %2581 = vmatpush1.msra.mxu0 0.0
    %2582 = vmatprep.subr.mxu0 0.0
    %2583 = vmatpush1.msra.mxu0 0.0
    %2584 = vmatprep.subr.mxu0 0.0
    %2585 = vmatpush1.msra.mxu0 0.0
    %2586 = vmatprep.subr.mxu0 0.0
    %2587 = vmatpush1.msra.mxu0 0.0
    %2588 = vmatprep.subr.mxu0 0.0
    %2589 = vmatpush1.msra.mxu0 0.0
    %2590 = vmatprep.subr.mxu0 0.0
    %2591 = vmatpush1.msra.mxu0 0.0
    %2592 = vmatprep.subr.mxu0 0.0
    %2593 = vmatpush1.msra.mxu0 0.0
    %2594 = vmatprep.subr.mxu0 0.0
    %2595 = vmatpush1.msra.mxu0 0.0
    %2596 = vmatprep.subr.mxu0 0.0
    %2597 = vmatpush1.msra.mxu0 0.0
    %2598 = vmatprep.subr.mxu0 0.0
    %2599 = vmatpush1.msra.mxu0 0.0
    %2600 = vmatprep.subr.mxu0 0.0
    %2601 = vmatpush1.msra.mxu0 0.0
    %2602 = vmatprep.subr.mxu0 0.0
    %2603 = vmatpush1.msra.mxu0 0.0
    %2604 = vmatprep.mubr.f32.mxu0 0.0
    %2605 = vmatmul.mubr.f32.gmra.mrb[0].mxu0 %v2538
    %v2606 = vpop.f32.mrb[0].mxu0
    %v2607 = vadd.f32 0.0, %v2606
    %v2608 = vpop.f32.mrb[0].mxu0
    %2609 = vdwg.mxu0
    %2610 = vrot.lane.b32.xlu0 %v1769, 112
    %v2611 = vpop.permute.xlu0 %2610
    %2612 = vrot.lane.b32.xlu0 %v1888, 112
    %v2613 = vpop.permute.xlu0 %2612
    %2614 = vrot.lane.b32.xlu0 %v1893, 112
    %v2615 = vpop.permute.xlu0 %2614
    %v2616 = vsel %vm172, %v2611, 0
    %v2618 = vsel %vm172, %v2613, 0
    %v2620 = vsel %vm172, %v2615, 0
    %2622 = vmatprep.subr.mxu0 0.0
    %2623 = vmatpush1.xpose.msra.mxu0 %v2618
    %2624 = vmatprep.subr.mxu0 0.0
    %2625 = vmatpush1.xpose.msra.mxu0 %v2620
    %2626 = vmatprep.subr.mxu0 0.0
    %2627 = vmatpush1.xpose.msra.mxu0 0.0
    %2628 = vmatprep.subr.mxu0 0.0
    %2629 = vmatpush1.xpose.msra.mxu0 0.0
    %2630 = vmatprep.subr.mxu0 0.0
    %2631 = vmatpush1.xpose.msra.mxu0 0.0
    %2632 = vmatprep.subr.mxu0 0.0
    %2633 = vmatpush1.xpose.msra.mxu0 0.0
    %2634 = vmatprep.subr.mxu0 0.0
    %2635 = vmatpush1.xpose.msra.mxu0 0.0
    %2636 = vmatprep.subr.mxu0 0.0
    %2637 = vmatpush1.xpose.msra.mxu0 0.0
    %2638 = vmatprep.subr.mxu0 0.0
    %2639 = vmatpush1.xpose.msra.mxu0 0.0
    %2640 = vmatprep.subr.mxu0 0.0
    %2641 = vmatpush1.xpose.msra.mxu0 0.0
    %2642 = vmatprep.subr.mxu0 0.0
    %2643 = vmatpush1.xpose.msra.mxu0 0.0
    %2644 = vmatprep.subr.mxu0 0.0
    %2645 = vmatpush1.xpose.msra.mxu0 0.0
    %2646 = vmatprep.subr.mxu0 0.0
    %2647 = vmatpush1.xpose.msra.mxu0 0.0
    %2648 = vmatprep.subr.mxu0 0.0
    %2649 = vmatpush1.xpose.msra.mxu0 0.0
    %2650 = vmatprep.subr.mxu0 0.0
    %2651 = vmatpush1.xpose.msra.mxu0 0.0
    %2652 = vmatprep.subr.mxu0 0.0
    %2653 = vmatpush1.xpose.msra.mxu0 0.0
    %2654 = vmatprep.subr.mxu0 0.0
    %2655 = vmatpush1.xpose.msra.mxu0 0.0
    %2656 = vmatprep.subr.mxu0 0.0
    %2657 = vmatpush1.xpose.msra.mxu0 0.0
    %2658 = vmatprep.subr.mxu0 0.0
    %2659 = vmatpush1.xpose.msra.mxu0 0.0
    %2660 = vmatprep.subr.mxu0 0.0
    %2661 = vmatpush1.xpose.msra.mxu0 0.0
    %2662 = vmatprep.subr.mxu0 0.0
    %2663 = vmatpush1.xpose.msra.mxu0 0.0
    %2664 = vmatprep.subr.mxu0 0.0
    %2665 = vmatpush1.xpose.msra.mxu0 0.0
    %2666 = vmatprep.subr.mxu0 0.0
    %2667 = vmatpush1.xpose.msra.mxu0 0.0
    %2668 = vmatprep.subr.mxu0 0.0
    %2669 = vmatpush1.xpose.msra.mxu0 0.0
    %2670 = vmatprep.subr.mxu0 0.0
    %2671 = vmatpush1.xpose.msra.mxu0 0.0
    %2672 = vmatprep.subr.mxu0 0.0
    %2673 = vmatpush1.xpose.msra.mxu0 0.0
    %2674 = vmatprep.subr.mxu0 0.0
    %2675 = vmatpush1.xpose.msra.mxu0 0.0
    %2676 = vmatprep.subr.mxu0 0.0
    %2677 = vmatpush1.xpose.msra.mxu0 0.0
    %2678 = vmatprep.subr.mxu0 0.0
    %2679 = vmatpush1.xpose.msra.mxu0 0.0
    %2680 = vmatprep.subr.mxu0 0.0
    %2681 = vmatpush1.xpose.msra.mxu0 0.0
    %2682 = vmatprep.subr.mxu0 0.0
    %2683 = vmatpush1.xpose.msra.mxu0 0.0
    %2684 = vmatprep.subr.mxu0 0.0
    %2685 = vmatpush1.xpose.msra.mxu0 0.0
    %2686 = vmatprep.mubr.f32.mxu0 0.0
    %2687 = vmatmul.mubr.f32.gmra.mrb[0].mxu0 %v2616
    %v2688 = vpop.f32.mrb[0].mxu0
    %v2689 = vadd.f32 0.0, %v2688
    %v2690 = vpop.f32.mrb[0].mxu0
    %2691 = vdwg.mxu0
    %2692 = vrot.lane.b32.xlu0 %v1774, 112
    %v2693 = vpop.permute.xlu0 %2692
    %2694 = vrot.lane.b32.xlu0 %v1898, 112
    %v2695 = vpop.permute.xlu0 %2694
    %2696 = vrot.lane.b32.xlu0 %v1903, 112
    %v2697 = vpop.permute.xlu0 %2696
    %v2698 = vsel %vm172, %v2693, 0
    %v2700 = vsel %vm172, %v2695, 0
    %v2702 = vsel %vm172, %v2697, 0
    %2704 = vmatprep.subr.mxu0 0.0
    %2705 = vmatpush1.xpose.msra.mxu0 %v2700
    %2706 = vmatprep.subr.mxu0 0.0
    %2707 = vmatpush1.xpose.msra.mxu0 %v2702
    %2708 = vmatprep.subr.mxu0 0.0
    %2709 = vmatpush1.xpose.msra.mxu0 0.0
    %2710 = vmatprep.subr.mxu0 0.0
    %2711 = vmatpush1.xpose.msra.mxu0 0.0
    %2712 = vmatprep.subr.mxu0 0.0
    %2713 = vmatpush1.xpose.msra.mxu0 0.0
    %2714 = vmatprep.subr.mxu0 0.0
    %2715 = vmatpush1.xpose.msra.mxu0 0.0
    %2716 = vmatprep.subr.mxu0 0.0
    %2717 = vmatpush1.xpose.msra.mxu0 0.0
    %2718 = vmatprep.subr.mxu0 0.0
    %2719 = vmatpush1.xpose.msra.mxu0 0.0
    %2720 = vmatprep.subr.mxu0 0.0
    %2721 = vmatpush1.xpose.msra.mxu0 0.0
    %2722 = vmatprep.subr.mxu0 0.0
    %2723 = vmatpush1.xpose.msra.mxu0 0.0
    %2724 = vmatprep.subr.mxu0 0.0
    %2725 = vmatpush1.xpose.msra.mxu0 0.0
    %2726 = vmatprep.subr.mxu0 0.0
    %2727 = vmatpush1.xpose.msra.mxu0 0.0
    %2728 = vmatprep.subr.mxu0 0.0
    %2729 = vmatpush1.xpose.msra.mxu0 0.0
    %2730 = vmatprep.subr.mxu0 0.0
    %2731 = vmatpush1.xpose.msra.mxu0 0.0
    %2732 = vmatprep.subr.mxu0 0.0
    %2733 = vmatpush1.xpose.msra.mxu0 0.0
    %2734 = vmatprep.subr.mxu0 0.0
    %2735 = vmatpush1.xpose.msra.mxu0 0.0
    %2736 = vmatprep.subr.mxu0 0.0
    %2737 = vmatpush1.xpose.msra.mxu0 0.0
    %2738 = vmatprep.subr.mxu0 0.0
    %2739 = vmatpush1.xpose.msra.mxu0 0.0
    %2740 = vmatprep.subr.mxu0 0.0
    %2741 = vmatpush1.xpose.msra.mxu0 0.0
    %2742 = vmatprep.subr.mxu0 0.0
    %2743 = vmatpush1.xpose.msra.mxu0 0.0
    %2744 = vmatprep.subr.mxu0 0.0
    %2745 = vmatpush1.xpose.msra.mxu0 0.0
    %2746 = vmatprep.subr.mxu0 0.0
    %2747 = vmatpush1.xpose.msra.mxu0 0.0
    %2748 = vmatprep.subr.mxu0 0.0
    %2749 = vmatpush1.xpose.msra.mxu0 0.0
    %2750 = vmatprep.subr.mxu0 0.0
    %2751 = vmatpush1.xpose.msra.mxu0 0.0
    %2752 = vmatprep.subr.mxu0 0.0
    %2753 = vmatpush1.xpose.msra.mxu0 0.0
    %2754 = vmatprep.subr.mxu0 0.0
    %2755 = vmatpush1.xpose.msra.mxu0 0.0
    %2756 = vmatprep.subr.mxu0 0.0
    %2757 = vmatpush1.xpose.msra.mxu0 0.0
    %2758 = vmatprep.subr.mxu0 0.0
    %2759 = vmatpush1.xpose.msra.mxu0 0.0
    %2760 = vmatprep.subr.mxu0 0.0
    %2761 = vmatpush1.xpose.msra.mxu0 0.0
    %2762 = vmatprep.subr.mxu0 0.0
    %2763 = vmatpush1.xpose.msra.mxu0 0.0
    %2764 = vmatprep.subr.mxu0 0.0
    %2765 = vmatpush1.xpose.msra.mxu0 0.0
    %2766 = vmatprep.subr.mxu0 0.0
    %2767 = vmatpush1.xpose.msra.mxu0 0.0
    %2768 = vmatprep.mubr.f32.mxu0 0.0
    %2769 = vmatmul.mubr.f32.gmra.mrb[0].mxu0 %v2698
    %v2770 = vpop.f32.mrb[0].mxu0
    %v2771 = vadd.f32 0.0, %v2770
    %v2772 = vpop.f32.mrb[0].mxu0
    %2773 = vdwg.mxu0
    %v2774 = vmul.f32 %v2689, 0.35355338
    %v2775 = vmul.f32 %v2771, 0.35355338
    %v2776 = vadd.f32 %v2774, %v2073
    %v2777 = vadd.f32 %v2775, %v2077
    %v2778 = vsel %vm1530, %v2776, -inf
    %2779 = vmax.xlane.f32.xlu0 %v2778
    %v2780 = vpop.xlane.xlu0 %2779
    %v2781 = vsel %vm1530, %v2777, -inf
    %2782 = vmax.xlane.f32.xlu0 %v2781
    %v2783 = vpop.xlane.xlu0 %2782
    %v2784 = vsub.f32 %v2776, %v2780
    %v2785 = vsub.f32 %v2777, %v2783
    %v2786 = vmul.f32 %v2784, 1.442695
    %v2787 = vpow.pop %v2786
    %v2788 = vmul.f32 %v2785, 1.442695
    %v2789 = vpow.pop %v2788
    %v2790 = vsel %vm1530, %v2787, 0.0
    %2791 = vadd.xlane.f32.xlu0 %v2790
    %v2792 = vpop.xlane.xlu0 %2791
    %v2793 = vsel %vm1530, %v2789, 0.0
    %2794 = vadd.xlane.f32.xlu0 %v2793
    %v2795 = vpop.xlane.xlu0 %2794
    %v2796 = vrcp.pop %v2792
    %v2797 = vrcp.pop %v2795
    %v2798 = vmul.f32 %v2787, %v2796
    %v2799 = vmul.f32 %v2789, %v2797
    %2800 = vrot.lane.b32.xlu0 %v1888, 80
    %v2801 = vpop.permute.xlu0 %2800
    %2802 = vrot.lane.b32.xlu0 %v1893, 80
    %v2803 = vpop.permute.xlu0 %2802
    %v2807 = vsel %vm1530, %v2798, 0
    %2809 = vmatprep.subr.mxu0 0.0
    %2810 = vmatpush1.msra.mxu0 %v2801
    %2811 = vmatprep.subr.mxu0 0.0
    %2812 = vmatpush1.msra.mxu0 %v2803
    %2813 = vmatprep.subr.mxu0 0.0
    %2814 = vmatpush1.msra.mxu0 0.0
    %2815 = vmatprep.subr.mxu0 0.0
    %2816 = vmatpush1.msra.mxu0 0.0
    %2817 = vmatprep.subr.mxu0 0.0
    %2818 = vmatpush1.msra.mxu0 0.0
    %2819 = vmatprep.subr.mxu0 0.0
    %2820 = vmatpush1.msra.mxu0 0.0
    %2821 = vmatprep.subr.mxu0 0.0
    %2822 = vmatpush1.msra.mxu0 0.0
    %2823 = vmatprep.subr.mxu0 0.0
    %2824 = vmatpush1.msra.mxu0 0.0
    %2825 = vmatprep.subr.mxu0 0.0
    %2826 = vmatpush1.msra.mxu0 0.0
    %2827 = vmatprep.subr.mxu0 0.0
    %2828 = vmatpush1.msra.mxu0 0.0
    %2829 = vmatprep.subr.mxu0 0.0
    %2830 = vmatpush1.msra.mxu0 0.0
    %2831 = vmatprep.subr.mxu0 0.0
    %2832 = vmatpush1.msra.mxu0 0.0
    %2833 = vmatprep.subr.mxu0 0.0
    %2834 = vmatpush1.msra.mxu0 0.0
    %2835 = vmatprep.subr.mxu0 0.0
    %2836 = vmatpush1.msra.mxu0 0.0
    %2837 = vmatprep.subr.mxu0 0.0
    %2838 = vmatpush1.msra.mxu0 0.0
    %2839 = vmatprep.subr.mxu0 0.0
    %2840 = vmatpush1.msra.mxu0 0.0
    %2841 = vmatprep.subr.mxu0 0.0
    %2842 = vmatpush1.msra.mxu0 0.0
    %2843 = vmatprep.subr.mxu0 0.0
    %2844 = vmatpush1.msra.mxu0 0.0
    %2845 = vmatprep.subr.mxu0 0.0
    %2846 = vmatpush1.msra.mxu0 0.0
    %2847 = vmatprep.subr.mxu0 0.0
    %2848 = vmatpush1.msra.mxu0 0.0
    %2849 = vmatprep.subr.mxu0 0.0
    %2850 = vmatpush1.msra.mxu0 0.0
    %2851 = vmatprep.subr.mxu0 0.0
    %2852 = vmatpush1.msra.mxu0 0.0
    %2853 = vmatprep.subr.mxu0 0.0
    %2854 = vmatpush1.msra.mxu0 0.0
    %2855 = vmatprep.subr.mxu0 0.0
    %2856 = vmatpush1.msra.mxu0 0.0
    %2857 = vmatprep.subr.mxu0 0.0
    %2858 = vmatpush1.msra.mxu0 0.0
    %2859 = vmatprep.subr.mxu0 0.0
    %2860 = vmatpush1.msra.mxu0 0.0
    %2861 = vmatprep.subr.mxu0 0.0
    %2862 = vmatpush1.msra.mxu0 0.0
    %2863 = vmatprep.subr.mxu0 0.0
    %2864 = vmatpush1.msra.mxu0 0.0
    %2865 = vmatprep.subr.mxu0 0.0
    %2866 = vmatpush1.msra.mxu0 0.0
    %2867 = vmatprep.subr.mxu0 0.0
    %2868 = vmatpush1.msra.mxu0 0.0
    %2869 = vmatprep.subr.mxu0 0.0
    %2870 = vmatpush1.msra.mxu0 0.0
    %2871 = vmatprep.subr.mxu0 0.0
    %2872 = vmatpush1.msra.mxu0 0.0
    %2873 = vmatprep.mubr.f32.mxu0 0.0
    %2874 = vmatmul.mubr.f32.gmra.mrb[0].mxu0 %v2807
    %v2875 = vpop.f32.mrb[0].mxu0
    %v2876 = vadd.f32 0.0, %v2875
    %v2877 = vpop.f32.mrb[0].mxu0
    %2878 = vdwg.mxu0
    %2879 = vrot.lane.b32.xlu0 %v1898, 80
    %v2880 = vpop.permute.xlu0 %2879
    %2881 = vrot.lane.b32.xlu0 %v1903, 80
    %v2882 = vpop.permute.xlu0 %2881
    %v2886 = vsel %vm1530, %v2799, 0
    %2888 = vmatprep.subr.mxu0 0.0
    %2889 = vmatpush1.msra.mxu0 %v2880
    %2890 = vmatprep.subr.mxu0 0.0
    %2891 = vmatpush1.msra.mxu0 %v2882
    %2892 = vmatprep.subr.mxu0 0.0
    %2893 = vmatpush1.msra.mxu0 0.0
    %2894 = vmatprep.subr.mxu0 0.0
    %2895 = vmatpush1.msra.mxu0 0.0
    %2896 = vmatprep.subr.mxu0 0.0
    %2897 = vmatpush1.msra.mxu0 0.0
    %2898 = vmatprep.subr.mxu0 0.0
    %2899 = vmatpush1.msra.mxu0 0.0
    %2900 = vmatprep.subr.mxu0 0.0
    %2901 = vmatpush1.msra.mxu0 0.0
    %2902 = vmatprep.subr.mxu0 0.0
    %2903 = vmatpush1.msra.mxu0 0.0
    %2904 = vmatprep.subr.mxu0 0.0
    %2905 = vmatpush1.msra.mxu0 0.0
    %2906 = vmatprep.subr.mxu0 0.0
    %2907 = vmatpush1.msra.mxu0 0.0
    %2908 = vmatprep.subr.mxu0 0.0
    %2909 = vmatpush1.msra.mxu0 0.0
    %2910 = vmatprep.subr.mxu0 0.0
    %2911 = vmatpush1.msra.mxu0 0.0
    %2912 = vmatprep.subr.mxu0 0.0
    %2913 = vmatpush1.msra.mxu0 0.0
    %2914 = vmatprep.subr.mxu0 0.0
    %2915 = vmatpush1.msra.mxu0 0.0
    %2916 = vmatprep.subr.mxu0 0.0
    %2917 = vmatpush1.msra.mxu0 0.0
    %2918 = vmatprep.subr.mxu0 0.0
    %2919 = vmatpush1.msra.mxu0 0.0
    %2920 = vmatprep.subr.mxu0 0.0
    %2921 = vmatpush1.msra.mxu0 0.0
    %2922 = vmatprep.subr.mxu0 0.0
    %2923 = vmatpush1.msra.mxu0 0.0
    %2924 = vmatprep.subr.mxu0 0.0
    %2925 = vmatpush1.msra.mxu0 0.0
    %2926 = vmatprep.subr.mxu0 0.0
    %2927 = vmatpush1.msra.mxu0 0.0
    %2928 = vmatprep.subr.mxu0 0.0
    %2929 = vmatpush1.msra.mxu0 0.0
    %2930 = vmatprep.subr.mxu0 0.0
    %2931 = vmatpush1.msra.mxu0 0.0
    %2932 = vmatprep.subr.mxu0 0.0
    %2933 = vmatpush1.msra.mxu0 0.0
    %2934 = vmatprep.subr.mxu0 0.0
    %2935 = vmatpush1.msra.mxu0 0.0
    %2936 = vmatprep.subr.mxu0 0.0
    %2937 = vmatpush1.msra.mxu0 0.0
    %2938 = vmatprep.subr.mxu0 0.0
    %2939 = vmatpush1.msra.mxu0 0.0
    %2940 = vmatprep.subr.mxu0 0.0
    %2941 = vmatpush1.msra.mxu0 0.0
    %2942 = vmatprep.subr.mxu0 0.0
    %2943 = vmatpush1.msra.mxu0 0.0
    %2944 = vmatprep.subr.mxu0 0.0
    %2945 = vmatpush1.msra.mxu0 0.0
    %2946 = vmatprep.subr.mxu0 0.0
    %2947 = vmatpush1.msra.mxu0 0.0
    %2948 = vmatprep.subr.mxu0 0.0
    %2949 = vmatpush1.msra.mxu0 0.0
    %2950 = vmatprep.subr.mxu0 0.0
    %2951 = vmatpush1.msra.mxu0 0.0
    %2952 = vmatprep.mubr.f32.mxu0 0.0
    %2953 = vmatmul.mubr.f32.gmra.mrb[0].mxu0 %v2886
    %v2954 = vpop.f32.mrb[0].mxu0
    %v2955 = vadd.f32 0.0, %v2954
    %v2956 = vpop.f32.mrb[0].mxu0
    %2957 = vdwg.mxu0
    %2958 = vrot.lane.b32.xlu0 %v1769, 104
    %v2959 = vpop.permute.xlu0 %2958
    %2960 = vrot.lane.b32.xlu0 %v1888, 104
    %v2961 = vpop.permute.xlu0 %2960
    %2962 = vrot.lane.b32.xlu0 %v1893, 104
    %v2963 = vpop.permute.xlu0 %2962
    %v2964 = vsel %vm172, %v2959, 0
    %v2966 = vsel %vm172, %v2961, 0
    %v2968 = vsel %vm172, %v2963, 0
    %2970 = vmatprep.subr.mxu0 0.0
    %2971 = vmatpush1.xpose.msra.mxu0 %v2966
    %2972 = vmatprep.subr.mxu0 0.0
    %2973 = vmatpush1.xpose.msra.mxu0 %v2968
    %2974 = vmatprep.subr.mxu0 0.0
    %2975 = vmatpush1.xpose.msra.mxu0 0.0
    %2976 = vmatprep.subr.mxu0 0.0
    %2977 = vmatpush1.xpose.msra.mxu0 0.0
    %2978 = vmatprep.subr.mxu0 0.0
    %2979 = vmatpush1.xpose.msra.mxu0 0.0
    %2980 = vmatprep.subr.mxu0 0.0
    %2981 = vmatpush1.xpose.msra.mxu0 0.0
    %2982 = vmatprep.subr.mxu0 0.0
    %2983 = vmatpush1.xpose.msra.mxu0 0.0
    %2984 = vmatprep.subr.mxu0 0.0
    %2985 = vmatpush1.xpose.msra.mxu0 0.0
    %2986 = vmatprep.subr.mxu0 0.0
    %2987 = vmatpush1.xpose.msra.mxu0 0.0
    %2988 = vmatprep.subr.mxu0 0.0
    %2989 = vmatpush1.xpose.msra.mxu0 0.0
    %2990 = vmatprep.subr.mxu0 0.0
    %2991 = vmatpush1.xpose.msra.mxu0 0.0
    %2992 = vmatprep.subr.mxu0 0.0
    %2993 = vmatpush1.xpose.msra.mxu0 0.0
    %2994 = vmatprep.subr.mxu0 0.0
    %2995 = vmatpush1.xpose.msra.mxu0 0.0
    %2996 = vmatprep.subr.mxu0 0.0
    %2997 = vmatpush1.xpose.msra.mxu0 0.0
    %2998 = vmatprep.subr.mxu0 0.0
    %2999 = vmatpush1.xpose.msra.mxu0 0.0
    %3000 = vmatprep.subr.mxu0 0.0
    %3001 = vmatpush1.xpose.msra.mxu0 0.0
    %3002 = vmatprep.subr.mxu0 0.0
    %3003 = vmatpush1.xpose.msra.mxu0 0.0
    %3004 = vmatprep.subr.mxu0 0.0
    %3005 = vmatpush1.xpose.msra.mxu0 0.0
    %3006 = vmatprep.subr.mxu0 0.0
    %3007 = vmatpush1.xpose.msra.mxu0 0.0
    %3008 = vmatprep.subr.mxu0 0.0
    %3009 = vmatpush1.xpose.msra.mxu0 0.0
    %3010 = vmatprep.subr.mxu0 0.0
    %3011 = vmatpush1.xpose.msra.mxu0 0.0
    %3012 = vmatprep.subr.mxu0 0.0
    %3013 = vmatpush1.xpose.msra.mxu0 0.0
    %3014 = vmatprep.subr.mxu0 0.0
    %3015 = vmatpush1.xpose.msra.mxu0 0.0
    %3016 = vmatprep.subr.mxu0 0.0
    %3017 = vmatpush1.xpose.msra.mxu0 0.0
    %3018 = vmatprep.subr.mxu0 0.0
    %3019 = vmatpush1.xpose.msra.mxu0 0.0
    %3020 = vmatprep.subr.mxu0 0.0
    %3021 = vmatpush1.xpose.msra.mxu0 0.0
    %3022 = vmatprep.subr.mxu0 0.0
    %3023 = vmatpush1.xpose.msra.mxu0 0.0
    %3024 = vmatprep.subr.mxu0 0.0
    %3025 = vmatpush1.xpose.msra.mxu0 0.0
    %3026 = vmatprep.subr.mxu0 0.0
    %3027 = vmatpush1.xpose.msra.mxu0 0.0
    %3028 = vmatprep.subr.mxu0 0.0
    %3029 = vmatpush1.xpose.msra.mxu0 0.0
    %3030 = vmatprep.subr.mxu0 0.0
    %3031 = vmatpush1.xpose.msra.mxu0 0.0
    %3032 = vmatprep.subr.mxu0 0.0
    %3033 = vmatpush1.xpose.msra.mxu0 0.0
    %3034 = vmatprep.mubr.f32.mxu0 0.0
    %3035 = vmatmul.mubr.f32.gmra.mrb[0].mxu0 %v2964
    %v3036 = vpop.f32.mrb[0].mxu0
    %v3037 = vadd.f32 0.0, %v3036
    %v3038 = vpop.f32.mrb[0].mxu0
    %3039 = vdwg.mxu0
    %3040 = vrot.lane.b32.xlu0 %v1774, 104
    %v3041 = vpop.permute.xlu0 %3040
    %3042 = vrot.lane.b32.xlu0 %v1898, 104
    %v3043 = vpop.permute.xlu0 %3042
    %3044 = vrot.lane.b32.xlu0 %v1903, 104
    %v3045 = vpop.permute.xlu0 %3044
    %v3046 = vsel %vm172, %v3041, 0
    %v3048 = vsel %vm172, %v3043, 0
    %v3050 = vsel %vm172, %v3045, 0
    %3052 = vmatprep.subr.mxu0 0.0
    %3053 = vmatpush1.xpose.msra.mxu0 %v3048
    %3054 = vmatprep.subr.mxu0 0.0
    %3055 = vmatpush1.xpose.msra.mxu0 %v3050
    %3056 = vmatprep.subr.mxu0 0.0
    %3057 = vmatpush1.xpose.msra.mxu0 0.0
    %3058 = vmatprep.subr.mxu0 0.0
    %3059 = vmatpush1.xpose.msra.mxu0 0.0
    %3060 = vmatprep.subr.mxu0 0.0
    %3061 = vmatpush1.xpose.msra.mxu0 0.0
    %3062 = vmatprep.subr.mxu0 0.0
    %3063 = vmatpush1.xpose.msra.mxu0 0.0
    %3064 = vmatprep.subr.mxu0 0.0
    %3065 = vmatpush1.xpose.msra.mxu0 0.0
    %3066 = vmatprep.subr.mxu0 0.0
    %3067 = vmatpush1.xpose.msra.mxu0 0.0
    %3068 = vmatprep.subr.mxu0 0.0
    %3069 = vmatpush1.xpose.msra.mxu0 0.0
    %3070 = vmatprep.subr.mxu0 0.0
    %3071 = vmatpush1.xpose.msra.mxu0 0.0
    %3072 = vmatprep.subr.mxu0 0.0
    %3073 = vmatpush1.xpose.msra.mxu0 0.0
    %3074 = vmatprep.subr.mxu0 0.0
    %3075 = vmatpush1.xpose.msra.mxu0 0.0
    %3076 = vmatprep.subr.mxu0 0.0
    %3077 = vmatpush1.xpose.msra.mxu0 0.0
    %3078 = vmatprep.subr.mxu0 0.0
    %3079 = vmatpush1.xpose.msra.mxu0 0.0
    %3080 = vmatprep.subr.mxu0 0.0
    %3081 = vmatpush1.xpose.msra.mxu0 0.0
    %3082 = vmatprep.subr.mxu0 0.0
    %3083 = vmatpush1.xpose.msra.mxu0 0.0
    %3084 = vmatprep.subr.mxu0 0.0
    %3085 = vmatpush1.xpose.msra.mxu0 0.0
    %3086 = vmatprep.subr.mxu0 0.0
    %3087 = vmatpush1.xpose.msra.mxu0 0.0
    %3088 = vmatprep.subr.mxu0 0.0
    %3089 = vmatpush1.xpose.msra.mxu0 0.0
    %3090 = vmatprep.subr.mxu0 0.0
    %3091 = vmatpush1.xpose.msra.mxu0 0.0
    %3092 = vmatprep.subr.mxu0 0.0
    %3093 = vmatpush1.xpose.msra.mxu0 0.0
    %3094 = vmatprep.subr.mxu0 0.0
    %3095 = vmatpush1.xpose.msra.mxu0 0.0
    %3096 = vmatprep.subr.mxu0 0.0
    %3097 = vmatpush1.xpose.msra.mxu0 0.0
    %3098 = vmatprep.subr.mxu0 0.0
    %3099 = vmatpush1.xpose.msra.mxu0 0.0
    %3100 = vmatprep.subr.mxu0 0.0
    %3101 = vmatpush1.xpose.msra.mxu0 0.0
    %3102 = vmatprep.subr.mxu0 0.0
    %3103 = vmatpush1.xpose.msra.mxu0 0.0
    %3104 = vmatprep.subr.mxu0 0.0
    %3105 = vmatpush1.xpose.msra.mxu0 0.0
    %3106 = vmatprep.subr.mxu0 0.0
    %3107 = vmatpush1.xpose.msra.mxu0 0.0
    %3108 = vmatprep.subr.mxu0 0.0
    %3109 = vmatpush1.xpose.msra.mxu0 0.0
    %3110 = vmatprep.subr.mxu0 0.0
    %3111 = vmatpush1.xpose.msra.mxu0 0.0
    %3112 = vmatprep.subr.mxu0 0.0
    %3113 = vmatpush1.xpose.msra.mxu0 0.0
    %3114 = vmatprep.subr.mxu0 0.0
    %3115 = vmatpush1.xpose.msra.mxu0 0.0
    %3116 = vmatprep.mubr.f32.mxu0 0.0
    %3117 = vmatmul.mubr.f32.gmra.mrb[0].mxu0 %v3046
    %v3118 = vpop.f32.mrb[0].mxu0
    %v3119 = vadd.f32 0.0, %v3118
    %v3120 = vpop.f32.mrb[0].mxu0
    %3121 = vdwg.mxu0
    %v3122 = vmul.f32 %v3037, 0.35355338
    %v3123 = vmul.f32 %v3119, 0.35355338
    %v3124 = vadd.f32 %v3122, %v2073
    %v3125 = vadd.f32 %v3123, %v2077
    %v3126 = vsel %vm1530, %v3124, -inf
    %3127 = vmax.xlane.f32.xlu0 %v3126
    %v3128 = vpop.xlane.xlu0 %3127
    %v3129 = vsel %vm1530, %v3125, -inf
    %3130 = vmax.xlane.f32.xlu0 %v3129
    %v3131 = vpop.xlane.xlu0 %3130
    %v3132 = vsub.f32 %v3124, %v3128
    %v3133 = vsub.f32 %v3125, %v3131
    %v3134 = vmul.f32 %v3132, 1.442695
    %v3135 = vpow.pop %v3134
    %v3136 = vmul.f32 %v3133, 1.442695
    %v3137 = vpow.pop %v3136
    %v3138 = vsel %vm1530, %v3135, 0.0
    %3139 = vadd.xlane.f32.xlu0 %v3138
    %v3140 = vpop.xlane.xlu0 %3139
    %v3141 = vsel %vm1530, %v3137, 0.0
    %3142 = vadd.xlane.f32.xlu0 %v3141
    %v3143 = vpop.xlane.xlu0 %3142
    %v3144 = vrcp.pop %v3140
    %v3145 = vrcp.pop %v3143
    %v3146 = vmul.f32 %v3135, %v3144
    %v3147 = vmul.f32 %v3137, %v3145
    %3148 = vrot.lane.b32.xlu0 %v1888, 72
    %v3149 = vpop.permute.xlu0 %3148
    %3150 = vrot.lane.b32.xlu0 %v1893, 72
    %v3151 = vpop.permute.xlu0 %3150
    %v3155 = vsel %vm1530, %v3146, 0
    %3157 = vmatprep.subr.mxu0 0.0
    %3158 = vmatpush1.msra.mxu0 %v3149
    %3159 = vmatprep.subr.mxu0 0.0
    %3160 = vmatpush1.msra.mxu0 %v3151
    %3161 = vmatprep.subr.mxu0 0.0
    %3162 = vmatpush1.msra.mxu0 0.0
    %3163 = vmatprep.subr.mxu0 0.0
    %3164 = vmatpush1.msra.mxu0 0.0
    %3165 = vmatprep.subr.mxu0 0.0
    %3166 = vmatpush1.msra.mxu0 0.0
    %3167 = vmatprep.subr.mxu0 0.0
    %3168 = vmatpush1.msra.mxu0 0.0
    %3169 = vmatprep.subr.mxu0 0.0
    %3170 = vmatpush1.msra.mxu0 0.0
    %3171 = vmatprep.subr.mxu0 0.0
    %3172 = vmatpush1.msra.mxu0 0.0
    %3173 = vmatprep.subr.mxu0 0.0
    %3174 = vmatpush1.msra.mxu0 0.0
    %3175 = vmatprep.subr.mxu0 0.0
    %3176 = vmatpush1.msra.mxu0 0.0
    %3177 = vmatprep.subr.mxu0 0.0
    %3178 = vmatpush1.msra.mxu0 0.0
    %3179 = vmatprep.subr.mxu0 0.0
    %3180 = vmatpush1.msra.mxu0 0.0
    %3181 = vmatprep.subr.mxu0 0.0
    %3182 = vmatpush1.msra.mxu0 0.0
    %3183 = vmatprep.subr.mxu0 0.0
    %3184 = vmatpush1.msra.mxu0 0.0
    %3185 = vmatprep.subr.mxu0 0.0
    %3186 = vmatpush1.msra.mxu0 0.0
    %3187 = vmatprep.subr.mxu0 0.0
    %3188 = vmatpush1.msra.mxu0 0.0
    %3189 = vmatprep.subr.mxu0 0.0
    %3190 = vmatpush1.msra.mxu0 0.0
    %3191 = vmatprep.subr.mxu0 0.0
    %3192 = vmatpush1.msra.mxu0 0.0
    %3193 = vmatprep.subr.mxu0 0.0
    %3194 = vmatpush1.msra.mxu0 0.0
    %3195 = vmatprep.subr.mxu0 0.0
    %3196 = vmatpush1.msra.mxu0 0.0
    %3197 = vmatprep.subr.mxu0 0.0
    %3198 = vmatpush1.msra.mxu0 0.0
    %3199 = vmatprep.subr.mxu0 0.0
    %3200 = vmatpush1.msra.mxu0 0.0
    %3201 = vmatprep.subr.mxu0 0.0
    %3202 = vmatpush1.msra.mxu0 0.0
    %3203 = vmatprep.subr.mxu0 0.0
    %3204 = vmatpush1.msra.mxu0 0.0
    %3205 = vmatprep.subr.mxu0 0.0
    %3206 = vmatpush1.msra.mxu0 0.0
    %3207 = vmatprep.subr.mxu0 0.0
    %3208 = vmatpush1.msra.mxu0 0.0
    %3209 = vmatprep.subr.mxu0 0.0
    %3210 = vmatpush1.msra.mxu0 0.0
    %3211 = vmatprep.subr.mxu0 0.0
    %3212 = vmatpush1.msra.mxu0 0.0
    %3213 = vmatprep.subr.mxu0 0.0
    %3214 = vmatpush1.msra.mxu0 0.0
    %3215 = vmatprep.subr.mxu0 0.0
    %3216 = vmatpush1.msra.mxu0 0.0
    %3217 = vmatprep.subr.mxu0 0.0
    %3218 = vmatpush1.msra.mxu0 0.0
    %3219 = vmatprep.subr.mxu0 0.0
    %3220 = vmatpush1.msra.mxu0 0.0
    %3221 = vmatprep.mubr.f32.mxu0 0.0
    %3222 = vmatmul.mubr.f32.gmra.mrb[0].mxu0 %v3155
    %v3223 = vpop.f32.mrb[0].mxu0
    %v3224 = vadd.f32 0.0, %v3223
    %v3225 = vpop.f32.mrb[0].mxu0
    %3226 = vdwg.mxu0
    %3227 = vrot.lane.b32.xlu0 %v1898, 72
    %v3228 = vpop.permute.xlu0 %3227
    %3229 = vrot.lane.b32.xlu0 %v1903, 72
    %v3230 = vpop.permute.xlu0 %3229
    %v3234 = vsel %vm1530, %v3147, 0
    %3236 = vmatprep.subr.mxu0 0.0
    %3237 = vmatpush1.msra.mxu0 %v3228
    %3238 = vmatprep.subr.mxu0 0.0
    %3239 = vmatpush1.msra.mxu0 %v3230
    %3240 = vmatprep.subr.mxu0 0.0
    %3241 = vmatpush1.msra.mxu0 0.0
    %3242 = vmatprep.subr.mxu0 0.0
    %3243 = vmatpush1.msra.mxu0 0.0
    %3244 = vmatprep.subr.mxu0 0.0
    %3245 = vmatpush1.msra.mxu0 0.0
    %3246 = vmatprep.subr.mxu0 0.0
    %3247 = vmatpush1.msra.mxu0 0.0
    %3248 = vmatprep.subr.mxu0 0.0
    %3249 = vmatpush1.msra.mxu0 0.0
    %3250 = vmatprep.subr.mxu0 0.0
    %3251 = vmatpush1.msra.mxu0 0.0
    %3252 = vmatprep.subr.mxu0 0.0
    %3253 = vmatpush1.msra.mxu0 0.0
    %3254 = vmatprep.subr.mxu0 0.0
    %3255 = vmatpush1.msra.mxu0 0.0
    %3256 = vmatprep.subr.mxu0 0.0
    %3257 = vmatpush1.msra.mxu0 0.0
    %3258 = vmatprep.subr.mxu0 0.0
    %3259 = vmatpush1.msra.mxu0 0.0
    %3260 = vmatprep.subr.mxu0 0.0
    %3261 = vmatpush1.msra.mxu0 0.0
    %3262 = vmatprep.subr.mxu0 0.0
    %3263 = vmatpush1.msra.mxu0 0.0
    %3264 = vmatprep.subr.mxu0 0.0
    %3265 = vmatpush1.msra.mxu0 0.0
    %3266 = vmatprep.subr.mxu0 0.0
    %3267 = vmatpush1.msra.mxu0 0.0
    %3268 = vmatprep.subr.mxu0 0.0
    %3269 = vmatpush1.msra.mxu0 0.0
    %3270 = vmatprep.subr.mxu0 0.0
    %3271 = vmatpush1.msra.mxu0 0.0
    %3272 = vmatprep.subr.mxu0 0.0
    %3273 = vmatpush1.msra.mxu0 0.0
    %3274 = vmatprep.subr.mxu0 0.0
    %3275 = vmatpush1.msra.mxu0 0.0
    %3276 = vmatprep.subr.mxu0 0.0
    %3277 = vmatpush1.msra.mxu0 0.0
    %3278 = vmatprep.subr.mxu0 0.0
    %3279 = vmatpush1.msra.mxu0 0.0
    %3280 = vmatprep.subr.mxu0 0.0
    %3281 = vmatpush1.msra.mxu0 0.0
    %3282 = vmatprep.subr.mxu0 0.0
    %3283 = vmatpush1.msra.mxu0 0.0
    %3284 = vmatprep.subr.mxu0 0.0
    %3285 = vmatpush1.msra.mxu0 0.0
    %3286 = vmatprep.subr.mxu0 0.0
    %3287 = vmatpush1.msra.mxu0 0.0
    %3288 = vmatprep.subr.mxu0 0.0
    %3289 = vmatpush1.msra.mxu0 0.0
    %3290 = vmatprep.subr.mxu0 0.0
    %3291 = vmatpush1.msra.mxu0 0.0
    %3292 = vmatprep.subr.mxu0 0.0
    %3293 = vmatpush1.msra.mxu0 0.0
    %3294 = vmatprep.subr.mxu0 0.0
    %3295 = vmatpush1.msra.mxu0 0.0
    %3296 = vmatprep.subr.mxu0 0.0
    %3297 = vmatpush1.msra.mxu0 0.0
    %3298 = vmatprep.subr.mxu0 0.0
    %3299 = vmatpush1.msra.mxu0 0.0
    %3300 = vmatprep.mubr.f32.mxu0 0.0
    %3301 = vmatmul.mubr.f32.gmra.mrb[0].mxu0 %v3234
    %v3302 = vpop.f32.mrb[0].mxu0
    %v3303 = vadd.f32 0.0, %v3302
    %v3304 = vpop.f32.mrb[0].mxu0
    %3305 = vdwg.mxu0
    %3308 = vrot.lane.b32.xlu0 %v2528, 8
    %v3309 = vpop.permute.xlu0 %3308
    %3310 = vrot.lane.b32.xlu0 %v2607, 8
    %v3311 = vpop.permute.xlu0 %3310
    %3316 = vrot.lane.b32.xlu0 %v2876, 16
    %v3317 = vpop.permute.xlu0 %3316
    %3318 = vrot.lane.b32.xlu0 %v2955, 16
    %v3319 = vpop.permute.xlu0 %3318
    %3324 = vrot.lane.b32.xlu0 %v3224, 24
    %v3325 = vpop.permute.xlu0 %3324
    %3326 = vrot.lane.b32.xlu0 %v3303, 24
    %v3327 = vpop.permute.xlu0 %3326
    %v3330 = vsel %vm172, %v2180, %v3309
    %v3331 = vsel %vm172, %v2259, %v3311
    %v3332 = vsel %vm1530, %v3330, %v3317
    %v3333 = vsel %vm1530, %v3331, %v3319
    %v3334 = vsel %vm1533, %v3332, %v3325
    %v3335 = vsel %vm1533, %v3333, %v3327
    %v3336 = vld [vmem:[%s4 + $0x8] sm:$0xff]
    %v3337 = vld [vmem:[%s4 + $0x20] sm:$0xff]
    %v3338 = vld [vmem:[%s4 + $0x38] sm:$0xff]
    %v3339 = vld [vmem:[%s4 + $0x50] sm:$0xff]
    %v3340 = vld [vmem:[%s6 + $0x2] sm:$0x1]
    %v3342 = vlaneseq
    %v3343 = vshrl.u32 %v3342, 7
    %v3344 = vsub.s32 0, %v3343
    %v3345 = vrot.slane %v3340, %v3344
    %3350 = vrot.lane.b32.xlu0 %v3336, 32
    %v3351 = vpop.permute.xlu0 %3350
    %3352 = vrot.lane.b32.xlu0 %v3337, 32
    %v3353 = vpop.permute.xlu0 %3352
    %3354 = vrot.lane.b32.xlu0 %v3338, 32
    %v3355 = vpop.permute.xlu0 %3354
    %3356 = vrot.lane.b32.xlu0 %v3339, 32
    %v3357 = vpop.permute.xlu0 %3356
    %3362 = vrot.lane.b32.xlu0 %v3345, 96
    %v3363 = vpop.permute.xlu0 %3362
    %v3366 = vsel %vm85, %v3334, 0
    %v3369 = vsel %vm85, %v3335, 0
    %3371 = vmatprep.subr.mxu0 0.0
    %3372 = vmatpush1.msra.mxu0 %v3351
    %3373 = vmatprep.subr.mxu0 0.0
    %3374 = vmatpush1.msra.mxu0 %v3353
    %3375 = vmatprep.subr.mxu0 0.0
    %3376 = vmatpush1.msra.mxu0 %v3355
    %3377 = vmatprep.subr.mxu0 0.0
    %3378 = vmatpush1.msra.mxu0 %v3357
    %3379 = vmatprep.subr.mxu0 0.0
    %3380 = vmatpush1.msra.mxu0 0.0
    %3381 = vmatprep.subr.mxu0 0.0
    %3382 = vmatpush1.msra.mxu0 0.0
    %3383 = vmatprep.subr.mxu0 0.0
    %3384 = vmatpush1.msra.mxu0 0.0
    %3385 = vmatprep.subr.mxu0 0.0
    %3386 = vmatpush1.msra.mxu0 0.0
    %3387 = vmatprep.subr.mxu0 0.0
    %3388 = vmatpush1.msra.mxu0 0.0
    %3389 = vmatprep.subr.mxu0 0.0
    %3390 = vmatpush1.msra.mxu0 0.0
    %3391 = vmatprep.subr.mxu0 0.0
    %3392 = vmatpush1.msra.mxu0 0.0
    %3393 = vmatprep.subr.mxu0 0.0
    %3394 = vmatpush1.msra.mxu0 0.0
    %3395 = vmatprep.subr.mxu0 0.0
    %3396 = vmatpush1.msra.mxu0 0.0
    %3397 = vmatprep.subr.mxu0 0.0
    %3398 = vmatpush1.msra.mxu0 0.0
    %3399 = vmatprep.subr.mxu0 0.0
    %3400 = vmatpush1.msra.mxu0 0.0
    %3401 = vmatprep.subr.mxu0 0.0
    %3402 = vmatpush1.msra.mxu0 0.0
    %3403 = vmatprep.subr.mxu0 0.0
    %3404 = vmatpush1.msra.mxu0 0.0
    %3405 = vmatprep.subr.mxu0 0.0
    %3406 = vmatpush1.msra.mxu0 0.0
    %3407 = vmatprep.subr.mxu0 0.0
    %3408 = vmatpush1.msra.mxu0 0.0
    %3409 = vmatprep.subr.mxu0 0.0
    %3410 = vmatpush1.msra.mxu0 0.0
    %3411 = vmatprep.subr.mxu0 0.0
    %3412 = vmatpush1.msra.mxu0 0.0
    %3413 = vmatprep.subr.mxu0 0.0
    %3414 = vmatpush1.msra.mxu0 0.0
    %3415 = vmatprep.subr.mxu0 0.0
    %3416 = vmatpush1.msra.mxu0 0.0
    %3417 = vmatprep.subr.mxu0 0.0
    %3418 = vmatpush1.msra.mxu0 0.0
    %3419 = vmatprep.subr.mxu0 0.0
    %3420 = vmatpush1.msra.mxu0 0.0
    %3421 = vmatprep.subr.mxu0 0.0
    %3422 = vmatpush1.msra.mxu0 0.0
    %3423 = vmatprep.subr.mxu0 0.0
    %3424 = vmatpush1.msra.mxu0 0.0
    %3425 = vmatprep.subr.mxu0 0.0
    %3426 = vmatpush1.msra.mxu0 0.0
    %3427 = vmatprep.subr.mxu0 0.0
    %3428 = vmatpush1.msra.mxu0 0.0
    %3429 = vmatprep.subr.mxu0 0.0
    %3430 = vmatpush1.msra.mxu0 0.0
    %3431 = vmatprep.subr.mxu0 0.0
    %3432 = vmatpush1.msra.mxu0 0.0
    %3433 = vmatprep.subr.mxu0 0.0
    %3434 = vmatpush1.msra.mxu0 0.0
    %3435 = vmatprep.mubr.f32.mxu0 0.0
    %3436 = vmatmul.mubr.f32.gmra.mrb[0].mxu0 %v3366
    %v3437 = vpop.f32.mrb[0].mxu0
    %v3438 = vadd.f32 %v3363, %v3437
    %v3439 = vpop.f32.mrb[0].mxu0
    %3440 = vmatprep.mubr.f32.mxu0 0.0
    %3441 = vmatmul.mubr.f32.gmra.mrb[0].mxu0 %v3369
    %v3442 = vpop.f32.mrb[0].mxu0
    %v3443 = vadd.f32 %v3363, %v3442
    %v3444 = vpop.f32.mrb[0].mxu0
    %3445 = vdwg.mxu0
    %v3446 = vadd.f32 %v1687, %v3438
    %v3447 = vadd.f32 %v1688, %v3443
    %v3448 = vsel %vm85, %v3446, 0.0
    %3449 = vadd.xlane.f32.xlu0 %v3448
    %v3450 = vpop.xlane.xlu0 %3449
    %v3451 = vsel %vm85, %v3447, 0.0
    %3452 = vadd.xlane.f32.xlu0 %v3451
    %v3453 = vpop.xlane.xlu0 %3452
    %v3454 = vmul.f32 %v3450, %v1655
    %v3455 = vmul.f32 %v3453, %v1655
    %v3456 = vsub.f32 %v3446, %v3454
    %v3457 = vsub.f32 %v3447, %v3455
    %v3458 = vmul.f32 %v3456, %v3456
    %v3459 = vmul.f32 %v3457, %v3457
    %v3460 = vsel %vm85, %v3458, 0.0
    %3461 = vadd.xlane.f32.xlu0 %v3460
    %v3462 = vpop.xlane.xlu0 %3461
    %v3463 = vsel %vm85, %v3459, 0.0
    %3464 = vadd.xlane.f32.xlu0 %v3463
    %v3465 = vpop.xlane.xlu0 %3464
    %v3466 = vmul.f32 %v3462, %v1655
    %v3467 = vmul.f32 %v3465, %v1655
    %v3468 = vadd.f32 %v3466, 1e-05
    %v3469 = vadd.f32 %v3467, 1e-05
    %v3470 = vrsqrt.pop %v3468
    %v3471 = vrsqrt.pop %v3469
    %v3472 = vmul.f32 %v3456, %v3470
    %v3473 = vmul.f32 %v3457, %v3471
    %3474 = vrot.lane.b32.xlu0 %v3345, 64
    %v3475 = vpop.permute.xlu0 %3474
    %v3477 = vmul.f32 %v3472, %v3475
    %v3478 = vmul.f32 %v3473, %v3475
    %3479 = vrot.lane.b32.xlu0 %v3345, 32
    %v3480 = vpop.permute.xlu0 %3479
    %v3482 = vadd.f32 %v3477, %v3480
    %v3483 = vadd.f32 %v3478, %v3480
    %v3484 = vld [vmem:[%s4 + $0x10] sm:$0xff]
    %v3485 = vld [vmem:[%s4 + $0x28] sm:$0xff]
    %v3486 = vld [vmem:[%s4 + $0x40] sm:$0xff]
    %v3487 = vld [vmem:[%s4 + $0x58] sm:$0xff]
    %v3488 = vld [vmem:[%s6 + $0x3] sm:$0x1]
    %v3490 = vlaneseq
    %v3491 = vshrl.u32 %v3490, 7
    %v3492 = vsub.s32 0, %v3491
    %v3493 = vrot.slane %v3488, %v3492
    %v3496 = vsel %vm85, %v3482, 0
    %v3499 = vsel %vm85, %v3483, 0
    %3501 = vmatprep.subr.mxu0 0.0
    %3502 = vmatpush1.msra.mxu0 %v3484
    %3503 = vmatprep.subr.mxu0 0.0
    %3504 = vmatpush1.msra.mxu0 %v3485
    %3505 = vmatprep.subr.mxu0 0.0
    %3506 = vmatpush1.msra.mxu0 %v3486
    %3507 = vmatprep.subr.mxu0 0.0
    %3508 = vmatpush1.msra.mxu0 %v3487
    %3509 = vmatprep.subr.mxu0 0.0
    %3510 = vmatpush1.msra.mxu0 0.0
    %3511 = vmatprep.subr.mxu0 0.0
    %3512 = vmatpush1.msra.mxu0 0.0
    %3513 = vmatprep.subr.mxu0 0.0
    %3514 = vmatpush1.msra.mxu0 0.0
    %3515 = vmatprep.subr.mxu0 0.0
    %3516 = vmatpush1.msra.mxu0 0.0
    %3517 = vmatprep.subr.mxu0 0.0
    %3518 = vmatpush1.msra.mxu0 0.0
    %3519 = vmatprep.subr.mxu0 0.0
    %3520 = vmatpush1.msra.mxu0 0.0
    %3521 = vmatprep.subr.mxu0 0.0
    %3522 = vmatpush1.msra.mxu0 0.0
    %3523 = vmatprep.subr.mxu0 0.0
    %3524 = vmatpush1.msra.mxu0 0.0
    %3525 = vmatprep.subr.mxu0 0.0
    %3526 = vmatpush1.msra.mxu0 0.0
    %3527 = vmatprep.subr.mxu0 0.0
    %3528 = vmatpush1.msra.mxu0 0.0
    %3529 = vmatprep.subr.mxu0 0.0
    %3530 = vmatpush1.msra.mxu0 0.0
    %3531 = vmatprep.subr.mxu0 0.0
    %3532 = vmatpush1.msra.mxu0 0.0
    %3533 = vmatprep.subr.mxu0 0.0
    %3534 = vmatpush1.msra.mxu0 0.0
    %3535 = vmatprep.subr.mxu0 0.0
    %3536 = vmatpush1.msra.mxu0 0.0
    %3537 = vmatprep.subr.mxu0 0.0
    %3538 = vmatpush1.msra.mxu0 0.0
    %3539 = vmatprep.subr.mxu0 0.0
    %3540 = vmatpush1.msra.mxu0 0.0
    %3541 = vmatprep.subr.mxu0 0.0
    %3542 = vmatpush1.msra.mxu0 0.0
    %3543 = vmatprep.subr.mxu0 0.0
    %3544 = vmatpush1.msra.mxu0 0.0
    %3545 = vmatprep.subr.mxu0 0.0
    %3546 = vmatpush1.msra.mxu0 0.0
    %3547 = vmatprep.subr.mxu0 0.0
    %3548 = vmatpush1.msra.mxu0 0.0
    %3549 = vmatprep.subr.mxu0 0.0
    %3550 = vmatpush1.msra.mxu0 0.0
    %3551 = vmatprep.subr.mxu0 0.0
    %3552 = vmatpush1.msra.mxu0 0.0
    %3553 = vmatprep.subr.mxu0 0.0
    %3554 = vmatpush1.msra.mxu0 0.0
    %3555 = vmatprep.subr.mxu0 0.0
    %3556 = vmatpush1.msra.mxu0 0.0
    %3557 = vmatprep.subr.mxu0 0.0
    %3558 = vmatpush1.msra.mxu0 0.0
    %3559 = vmatprep.subr.mxu0 0.0
    %3560 = vmatpush1.msra.mxu0 0.0
    %3561 = vmatprep.subr.mxu0 0.0
    %3562 = vmatpush1.msra.mxu0 0.0
    %3563 = vmatprep.subr.mxu0 0.0
    %3564 = vmatpush1.msra.mxu0 0.0
    %3565 = vmatprep.mubr.f32.mxu0 0.0
    %3566 = vmatmul.mubr.f32.gmra.mrb[0].mxu0 %v3496
    %v3567 = vpop.f32.mrb[0].mxu0
    %v3568 = vadd.f32 %v3493, %v3567
    %v3569 = vpop.f32.mrb[0].mxu0
    %3570 = vmatprep.mubr.f32.mxu0 0.0
    %3571 = vmatmul.mubr.f32.gmra.mrb[0].mxu0 %v3499
    %v3572 = vpop.f32.mrb[0].mxu0
    %v3573 = vadd.f32 %v3493, %v3572
    %v3574 = vpop.f32.mrb[0].mxu0
    %3575 = vdwg.mxu0
    %v3576 = vmax.f32 %v3568, 0.0
    %v3577 = vmax.f32 %v3573, 0.0
    %v3578 = vld [vmem:[%s5] sm:$0xff]
    %v3579 = vld [vmem:[%s5 + $0x8] sm:$0xff]
    %v3580 = vld [vmem:[%s5 + $0x10] sm:$0xff]
    %v3581 = vld [vmem:[%s5 + $0x18] sm:$0xff]
    %v3582 = vld [vmem:[%s5 + $0x20] sm:$0xff]
    %v3583 = vld [vmem:[%s5 + $0x28] sm:$0xff]
    %v3584 = vld [vmem:[%s5 + $0x30] sm:$0xff]
    %v3585 = vld [vmem:[%s5 + $0x38] sm:$0xff]
    %3586 = vrot.lane.b32.xlu0 %v3493, 64
    %v3587 = vpop.permute.xlu0 %3586
    %vm3589 = vcmask 523264
    %v3591 = vsel %vm3589, %v3576, 0
    %v3594 = vsel %vm3589, %v3577, 0
    %3596 = vmatprep.subr.mxu0 0.0
    %3597 = vmatpush1.msra.mxu0 %v3578
    %3598 = vmatprep.subr.mxu0 0.0
    %3599 = vmatpush1.msra.mxu0 %v3579
    %3600 = vmatprep.subr.mxu0 0.0
    %3601 = vmatpush1.msra.mxu0 %v3580
    %3602 = vmatprep.subr.mxu0 0.0
    %3603 = vmatpush1.msra.mxu0 %v3581
    %3604 = vmatprep.subr.mxu0 0.0
    %3605 = vmatpush1.msra.mxu0 %v3582
    %3606 = vmatprep.subr.mxu0 0.0
    %3607 = vmatpush1.msra.mxu0 %v3583
    %3608 = vmatprep.subr.mxu0 0.0
    %3609 = vmatpush1.msra.mxu0 %v3584
    %3610 = vmatprep.subr.mxu0 0.0
    %3611 = vmatpush1.msra.mxu0 %v3585
    %3612 = vmatprep.subr.mxu0 0.0
    %3613 = vmatpush1.msra.mxu0 0.0
    %3614 = vmatprep.subr.mxu0 0.0
    %3615 = vmatpush1.msra.mxu0 0.0
    %3616 = vmatprep.subr.mxu0 0.0
    %3617 = vmatpush1.msra.mxu0 0.0
    %3618 = vmatprep.subr.mxu0 0.0
    %3619 = vmatpush1.msra.mxu0 0.0
    %3620 = vmatprep.subr.mxu0 0.0
    %3621 = vmatpush1.msra.mxu0 0.0
    %3622 = vmatprep.subr.mxu0 0.0
    %3623 = vmatpush1.msra.mxu0 0.0
    %3624 = vmatprep.subr.mxu0 0.0
    %3625 = vmatpush1.msra.mxu0 0.0
    %3626 = vmatprep.subr.mxu0 0.0
    %3627 = vmatpush1.msra.mxu0 0.0
    %3628 = vmatprep.subr.mxu0 0.0
    %3629 = vmatpush1.msra.mxu0 0.0
    %3630 = vmatprep.subr.mxu0 0.0
    %3631 = vmatpush1.msra.mxu0 0.0
    %3632 = vmatprep.subr.mxu0 0.0
    %3633 = vmatpush1.msra.mxu0 0.0
    %3634 = vmatprep.subr.mxu0 0.0
    %3635 = vmatpush1.msra.mxu0 0.0
    %3636 = vmatprep.subr.mxu0 0.0
    %3637 = vmatpush1.msra.mxu0 0.0
    %3638 = vmatprep.subr.mxu0 0.0
    %3639 = vmatpush1.msra.mxu0 0.0
    %3640 = vmatprep.subr.mxu0 0.0
    %3641 = vmatpush1.msra.mxu0 0.0
    %3642 = vmatprep.subr.mxu0 0.0
    %3643 = vmatpush1.msra.mxu0 0.0
    %3644 = vmatprep.subr.mxu0 0.0
    %3645 = vmatpush1.msra.mxu0 0.0
    %3646 = vmatprep.subr.mxu0 0.0
    %3647 = vmatpush1.msra.mxu0 0.0
    %3648 = vmatprep.subr.mxu0 0.0
    %3649 = vmatpush1.msra.mxu0 0.0
    %3650 = vmatprep.subr.mxu0 0.0
    %3651 = vmatpush1.msra.mxu0 0.0
    %3652 = vmatprep.subr.mxu0 0.0
    %3653 = vmatpush1.msra.mxu0 0.0
    %3654 = vmatprep.subr.mxu0 0.0
    %3655 = vmatpush1.msra.mxu0 0.0
    %3656 = vmatprep.subr.mxu0 0.0
    %3657 = vmatpush1.msra.mxu0 0.0
    %3658 = vmatprep.subr.mxu0 0.0
    %3659 = vmatpush1.msra.mxu0 0.0
    %3660 = vmatprep.mubr.f32.mxu0 0.0
    %3661 = vmatmul.mubr.f32.gmra.mrb[0].mxu0 %v3591
    %v3662 = vpop.f32.mrb[0].mxu0
    %v3663 = vadd.f32 %v3587, %v3662
    %v3664 = vpop.f32.mrb[0].mxu0
    %3665 = vmatprep.mubr.f32.mxu0 0.0
    %3666 = vmatmul.mubr.f32.gmra.mrb[0].mxu0 %v3594
    %v3667 = vpop.f32.mrb[0].mxu0
    %v3668 = vadd.f32 %v3587, %v3667
    %v3669 = vpop.f32.mrb[0].mxu0
    %3670 = vdwg.mxu0
    %v3671 = vadd.f32 %v3482, %v3663
    %v3672 = vadd.f32 %v3483, %v3668
    %v3673 = vld [vmem:[%s6 + $0x4] sm:$0x1]
    %v3674 = vsel %vm85, %v3671, 0.0
    %3675 = vadd.xlane.f32.xlu0 %v3674
    %v3676 = vpop.xlane.xlu0 %3675
    %v3677 = vsel %vm85, %v3672, 0.0
    %3678 = vadd.xlane.f32.xlu0 %v3677
    %v3679 = vpop.xlane.xlu0 %3678
    %v3680 = vmul.f32 %v3676, %v1655
    %v3681 = vmul.f32 %v3679, %v1655
    %v3682 = vsub.f32 %v3671, %v3680
    %v3683 = vsub.f32 %v3672, %v3681
    %v3684 = vmul.f32 %v3682, %v3682
    %v3685 = vmul.f32 %v3683, %v3683
    %v3686 = vsel %vm85, %v3684, 0.0
    %3687 = vadd.xlane.f32.xlu0 %v3686
    %v3688 = vpop.xlane.xlu0 %3687
    %v3689 = vsel %vm85, %v3685, 0.0
    %3690 = vadd.xlane.f32.xlu0 %v3689
    %v3691 = vpop.xlane.xlu0 %3690
    %v3692 = vmul.f32 %v3688, %v1655
    %v3693 = vmul.f32 %v3691, %v1655
    %v3694 = vadd.f32 %v3692, 1e-05
    %v3695 = vadd.f32 %v3693, 1e-05
    %v3696 = vrsqrt.pop %v3694
    %v3697 = vrsqrt.pop %v3695
    %v3698 = vmul.f32 %v3682, %v3696
    %v3699 = vmul.f32 %v3683, %v3697
    %3700 = vrot.lane.b32.xlu0 %v3493, 32
    %v3701 = vpop.permute.xlu0 %3700
    %v3703 = vmul.f32 %v3698, %v3701
    %v3704 = vmul.f32 %v3699, %v3701
    %v3706 = vlaneseq
    %v3707 = vshrl.u32 %v3706, 7
    %v3708 = vsub.s32 0, %v3707
    %v3709 = vrot.slane %v3673, %v3708
    %v3711 = vadd.f32 %v3703, %v3709
    %v3712 = vadd.f32 %v3704, %v3709
    %3713 = vst.msk [vmem:[#allocation8] sm:$0xff] %vm85, %v3711
    %3714 = vst.msk [vmem:[#allocation8 + $0x8] sm:$0xff] %vm85, %v3712
    // Predicated region
    $region42: #{tpu_custom_call.1} parent=1 // pred_check
      _
    $region43: #{tpu_custom_call.1} parent=1 // pred_check_branch
      %3716 = sbr.rel (0) target = $region45
    $region44: #{tpu_custom_call.1} parent=1 // pred_region
      %s3718 = ssub.s32 256, 256
      %3719 = vsyncadd [#allocation4], %s3718
      %s3720 = sshll.u32 [#allocation8], 4
      %s3721 = int_to_ptr.vmem [resolvable:$true] %s3720
      %3726 = dma.vmem_to_hbm [thread:$0]  %s3721, 256, %s7, [#allocation4], 128, 128, 8
    $region45: #{tpu_custom_call.1} parent=1 // pred_fallthru
      _
    // Predicated region
    $region46: #{tpu_custom_call.1} parent=1 // pred_check
      _
    $region47: #{tpu_custom_call.1} parent=1 // pred_check_branch
      %3728 = sbr.rel (0) target = $region49
    $region48: #{tpu_custom_call.1} parent=1 // pred_region
      %3729 = dma.done [#allocation4], 256
    $region49: #{tpu_custom_call.1} parent=1 // pred_fallthru
      _
    %3730 = vsyncpa [#allocation3], 1
    %3731 = vsyncpa [#allocation6], 1
    %3732 = vsyncpa [#allocation4], 1

</llo_original>
